<compile_context>
chip_gen: v7x
topology: tpu7x:2x2x1
jax: 0.10.0
libtpu: 0.0.40
codegen_flags: <defaults>
</compile_context>

<pallas_src>
import jax
import jax.numpy as jnp
from jax.experimental import pallas as pl
from jax.experimental.pallas import tpu as pltpu


OUT_PAD = 128  # lane-dense padded width of the final (2-wide) layer
N_OUT = 2      # true output width of the final layer


def _round_up(x, m):
    return ((x + m - 1) // m) * m


def _choose_tb(B):
    """Batch-tile size: >=2 grid steps when possible (v7x megacore), <=512
    rows (amortizes per-step overhead, v5e), minimal batch-padding waste."""
    b8 = max(8, _round_up(B, 8))
    half = _round_up(pl.cdiv(b8, 2), 8)
    cands = {min(c, half) for c in (512, 256, 128)}
    # least padded rows first, then prefer the largest tile (fewest steps)
    return min(cands, key=lambda tb: (_round_up(b8, tb) - b8, -tb))


def _mlp_kernel(x_ref,
                w0_ref, b0_ref,
                w1_ref, b1_ref,
                w2_ref, b2_ref,
                w3_ref, b3_ref,
                w4_ref, b4_ref,
                out_ref):
    # Whole forward pass fused: 5 MXU matmuls (bf16 operands, f32
    # accumulation).  Hidden-layer bias-add + ReLU run in bf16 on the VPU
    # (2 elems / 32-bit lane word -> half the VALU work on v6e/v7x; Mosaic
    # widens on v5e).  Final layer keeps an f32 bias add and f32 output.
    h = x_ref[...].astype(jnp.bfloat16)
    for w_ref, b_ref in ((w0_ref, b0_ref), (w1_ref, b1_ref),
                         (w2_ref, b2_ref), (w3_ref, b3_ref)):
        acc = jnp.dot(h, w_ref[...], preferred_element_type=jnp.float32)
        h = jnp.maximum(acc.astype(jnp.bfloat16) + b_ref[...], 0.0)
    acc = jnp.dot(h, w4_ref[...], preferred_element_type=jnp.float32) + b4_ref[...]
    out_ref[...] = acc.astype(out_ref.dtype)


def pack_params(params):
    """One-time parameter prep (call once, reuse across forward calls).

    params: list of (W, b) with W as (in, out) float32 (transposed vs PyTorch).
    Returns list of (W_bf16, b_row) with the final layer padded to OUT_PAD
    lanes; hidden biases bf16, final bias f32.
    """
    packed = []
    n = len(params)
    for idx, (w, b) in enumerate(params):
        wb = jnp.asarray(w, jnp.bfloat16)
        if idx == n - 1:
            wb = jnp.pad(wb, ((0, 0), (0, OUT_PAD - wb.shape[1])))
            bb = jnp.pad(jnp.asarray(b, jnp.float32).reshape(1, -1),
                         ((0, 0), (0, OUT_PAD - b.shape[0])))
        else:
            bb = jnp.asarray(b, jnp.bfloat16).reshape(1, -1)
        packed.append((wb, bb))
    return packed


def _launch(x_pad, flat_args, *, tb, grid, single_buffer_weights):
    b_pad, f_in = x_pad.shape

    in_specs = [pl.BlockSpec((tb, f_in), lambda i: (i, 0))]
    for arr in flat_args:
        if single_buffer_weights:
            # Constant block index => the tile never changes; one VMEM buffer
            # is enough (saves ~1 MiB vs the default double buffer).
            spec = pl.BlockSpec(arr.shape, lambda i: (0, 0),
                                pipeline_mode=pl.Buffered(1))
        else:
            spec = pl.BlockSpec(arr.shape, lambda i: (0, 0))
        in_specs.append(spec)
    out_spec = pl.BlockSpec((tb, OUT_PAD), lambda i: (i, 0))

    flops = 2 * b_pad * sum(int(w.shape[0]) * int(w.shape[1])
                            for w in flat_args[0::2])
    bytes_accessed = (int(x_pad.size) * x_pad.dtype.itemsize
                      + sum(int(a.size) * a.dtype.itemsize for a in flat_args)
                      + b_pad * OUT_PAD * 4)

    return pl.pallas_call(
        _mlp_kernel,
        out_shape=jax.ShapeDtypeStruct((b_pad, OUT_PAD), jnp.float32),
        grid=grid,
        in_specs=in_specs,
        out_specs=out_spec,
        compiler_params=pltpu.CompilerParams(
            dimension_semantics=("parallel",)),
        cost_estimate=pl.CostEstimate(
            flops=flops, transcendentals=0, bytes_accessed=bytes_accessed),
    )(x_pad, *flat_args)


def mnist_net_forward(x, packed_params):
    """x: (B, 512), float32 or bfloat16. packed_params: output of pack_params."""
    B, f_in = x.shape
    assert f_in == packed_params[0][0].shape[0]
    flat_args = [a for wb in packed_params for a in wb]

    tb = _choose_tb(B)
    b_pad = _round_up(B, tb)
    x_pad = jnp.pad(x, ((0, b_pad - B), (0, 0))) if b_pad != B else x
    grid = (b_pad // tb,)

    try:
        out = _launch(x_pad, flat_args, tb=tb, grid=grid,
                      single_buffer_weights=True)
    except Exception:
        # Fallback if this JAX version rejects pl.Buffered(1) on pallas_call specs.
        out = _launch(x_pad, flat_args, tb=tb, grid=grid,
                      single_buffer_weights=False)

    return out[:B, :N_OUT]


def init_params(key):
    """Deterministic init matching nn.Linear default (U(-1/sqrt(in), 1/sqrt(in)))."""
    dims = [(512, 512), (512, 256), (256, 256), (256, 128), (128, 2)]
    params = []
    for (fan_in, fan_out) in dims:
        key, kw, kb = jax.random.split(key, 3)
        bound = 1.0 / jnp.sqrt(fan_in)
        # Stored as (in, out) == transpose of PyTorch's (out, in) layout.
        w = jax.random.uniform(kw, (fan_in, fan_out), jnp.float32, -bound, bound)
        b = jax.random.uniform(kb, (fan_out,), jnp.float32, -bound, bound)
        params.append((w, b))
    return params


def reference_forward(x, packed_params):
    """Pure-JAX reference with the same bf16-operand / f32-accumulate recipe."""
    h = x.astype(jnp.bfloat16)
    for w, b in packed_params[:-1]:
        acc = jnp.dot(h, w, preferred_element_type=jnp.float32)
        h = jnp.maximum(acc.astype(jnp.bfloat16) + b, 0.0)
    w, b = packed_params[-1]
    out = jnp.dot(h, w, preferred_element_type=jnp.float32) + b
    return out[:, :N_OUT]


if __name__ == "__main__":
    key = jax.random.PRNGKey(0)
    key, kx = jax.random.split(key)

    B = 8
    x = jax.random.normal(kx, (B, 512), jnp.float32)
    params = init_params(key)
    packed = pack_params(params)            # one-time prep, hoisted out of forward

    out = mnist_net_forward(x, packed)
    out = jax.block_until_ready(out)

    ref = reference_forward(x, packed)
    assert out.shape == (B, N_OUT)
    assert jnp.allclose(out, ref, atol=2e-2, rtol=2e-2), "mismatch vs reference"

    print("KERNEL_OK")
</pallas_src>

<mosaic_0001>
module attributes {stable_mosaic.version = 11 : i64} {
  func.func @_mlp_kernel(%arg0: i32, %arg1: memref<8x512xf32, #tpu.memory_space<vmem>>, %arg2: memref<512x512xbf16, #tpu.memory_space<vmem>>, %arg3: memref<1x512xbf16, #tpu.memory_space<vmem>>, %arg4: memref<512x256xbf16, #tpu.memory_space<vmem>>, %arg5: memref<1x256xbf16, #tpu.memory_space<vmem>>, %arg6: memref<256x256xbf16, #tpu.memory_space<vmem>>, %arg7: memref<1x256xbf16, #tpu.memory_space<vmem>>, %arg8: memref<256x128xbf16, #tpu.memory_space<vmem>>, %arg9: memref<1x128xbf16, #tpu.memory_space<vmem>>, %arg10: memref<128x128xbf16, #tpu.memory_space<vmem>>, %arg11: memref<1x128xf32, #tpu.memory_space<vmem>>, %arg12: memref<8x128xf32, #tpu.memory_space<vmem>>) attributes {dimension_semantics = [#tpu.dimension_semantics<parallel>], iteration_bounds = array<i64: 1>, scalar_prefetch = 0 : i64, scratch_operands = 0 : i64, tpu.core_type = #tpu.core_type<tc>, window_params = [{transform_indices = @transform_0, window_bounds = array<i64: 8, 512>}, {pipeline_mode = #tpu.pipeline_mode<synchronous>, transform_indices = @transform_1, window_bounds = array<i64: 512, 512>}, {pipeline_mode = #tpu.pipeline_mode<synchronous>, transform_indices = @transform_2, window_bounds = array<i64: 1, 512>}, {pipeline_mode = #tpu.pipeline_mode<synchronous>, transform_indices = @transform_3, window_bounds = array<i64: 512, 256>}, {pipeline_mode = #tpu.pipeline_mode<synchronous>, transform_indices = @transform_4, window_bounds = array<i64: 1, 256>}, {pipeline_mode = #tpu.pipeline_mode<synchronous>, transform_indices = @transform_5, window_bounds = array<i64: 256, 256>}, {pipeline_mode = #tpu.pipeline_mode<synchronous>, transform_indices = @transform_6, window_bounds = array<i64: 1, 256>}, {pipeline_mode = #tpu.pipeline_mode<synchronous>, transform_indices = @transform_7, window_bounds = array<i64: 256, 128>}, {pipeline_mode = #tpu.pipeline_mode<synchronous>, transform_indices = @transform_8, window_bounds = array<i64: 1, 128>}, {pipeline_mode = #tpu.pipeline_mode<synchronous>, transform_indices = @transform_9, window_bounds = array<i64: 128, 128>}, {pipeline_mode = #tpu.pipeline_mode<synchronous>, transform_indices = @transform_10, window_bounds = array<i64: 1, 128>}, {transform_indices = @transform_11, window_bounds = array<i64: 8, 128>}]} {
    %c0 = arith.constant 0 : index
    %c0_0 = arith.constant 0 : index
    %0 = vector.load %arg1[%c0, %c0_0] : memref<8x512xf32, #tpu.memory_space<vmem>>, vector<8x512xf32>
    %1 = arith.truncf %0 : vector<8x512xf32> to vector<8x512xbf16>
    %c0_1 = arith.constant 0 : index
    %c0_2 = arith.constant 0 : index
    %2 = vector.load %arg2[%c0_1, %c0_2] : memref<512x512xbf16, #tpu.memory_space<vmem>>, vector<512x512xbf16>
    %cst = arith.constant dense<0.000000e+00> : vector<8x512xf32>
    %3 = tpu.matmul %1, %2, %cst {dimension_numbers = #tpu.dot_dimension_numbers<[1], [0], [0], [1], [0, 0, 1, 1], [], []>} : vector<8x512xbf16>, vector<512x512xbf16>, vector<8x512xf32> -> vector<8x512xf32>
    %4 = arith.truncf %3 : vector<8x512xf32> to vector<8x512xbf16>
    %c0_3 = arith.constant 0 : index
    %c0_4 = arith.constant 0 : index
    %5 = vector.load %arg3[%c0_3, %c0_4] : memref<1x512xbf16, #tpu.memory_space<vmem>>, vector<1x512xbf16>
    %6 = vector.broadcast %5 : vector<1x512xbf16> to vector<8x512xbf16>
    %7 = arith.addf %4, %6 : vector<8x512xbf16>
    %cst_5 = arith.constant 0.000000e+00 : bf16
    %8 = vector.broadcast %cst_5 : bf16 to vector<8x512xbf16>
    %9 = arith.maximumf %7, %8 : vector<8x512xbf16>
    %c0_6 = arith.constant 0 : index
    %c0_7 = arith.constant 0 : index
    %10 = vector.load %arg4[%c0_6, %c0_7] : memref<512x256xbf16, #tpu.memory_space<vmem>>, vector<512x256xbf16>
    %cst_8 = arith.constant dense<0.000000e+00> : vector<8x256xf32>
    %11 = tpu.matmul %9, %10, %cst_8 {dimension_numbers = #tpu.dot_dimension_numbers<[1], [0], [0], [1], [0, 0, 1, 1], [], []>} : vector<8x512xbf16>, vector<512x256xbf16>, vector<8x256xf32> -> vector<8x256xf32>
    %12 = arith.truncf %11 : vector<8x256xf32> to vector<8x256xbf16>
    %c0_9 = arith.constant 0 : index
    %c0_10 = arith.constant 0 : index
    %13 = vector.load %arg5[%c0_9, %c0_10] : memref<1x256xbf16, #tpu.memory_space<vmem>>, vector<1x256xbf16>
    %14 = vector.broadcast %13 : vector<1x256xbf16> to vector<8x256xbf16>
    %15 = arith.addf %12, %14 : vector<8x256xbf16>
    %cst_11 = arith.constant 0.000000e+00 : bf16
    %16 = vector.broadcast %cst_11 : bf16 to vector<8x256xbf16>
    %17 = arith.maximumf %15, %16 : vector<8x256xbf16>
    %c0_12 = arith.constant 0 : index
    %c0_13 = arith.constant 0 : index
    %18 = vector.load %arg6[%c0_12, %c0_13] : memref<256x256xbf16, #tpu.memory_space<vmem>>, vector<256x256xbf16>
    %cst_14 = arith.constant dense<0.000000e+00> : vector<8x256xf32>
    %19 = tpu.matmul %17, %18, %cst_14 {dimension_numbers = #tpu.dot_dimension_numbers<[1], [0], [0], [1], [0, 0, 1, 1], [], []>} : vector<8x256xbf16>, vector<256x256xbf16>, vector<8x256xf32> -> vector<8x256xf32>
    %20 = arith.truncf %19 : vector<8x256xf32> to vector<8x256xbf16>
    %c0_15 = arith.constant 0 : index
    %c0_16 = arith.constant 0 : index
    %21 = vector.load %arg7[%c0_15, %c0_16] : memref<1x256xbf16, #tpu.memory_space<vmem>>, vector<1x256xbf16>
    %22 = vector.broadcast %21 : vector<1x256xbf16> to vector<8x256xbf16>
    %23 = arith.addf %20, %22 : vector<8x256xbf16>
    %cst_17 = arith.constant 0.000000e+00 : bf16
    %24 = vector.broadcast %cst_17 : bf16 to vector<8x256xbf16>
    %25 = arith.maximumf %23, %24 : vector<8x256xbf16>
    %c0_18 = arith.constant 0 : index
    %c0_19 = arith.constant 0 : index
    %26 = vector.load %arg8[%c0_18, %c0_19] : memref<256x128xbf16, #tpu.memory_space<vmem>>, vector<256x128xbf16>
    %cst_20 = arith.constant dense<0.000000e+00> : vector<8x128xf32>
    %27 = tpu.matmul %25, %26, %cst_20 {dimension_numbers = #tpu.dot_dimension_numbers<[1], [0], [0], [1], [0, 0, 1, 1], [], []>} : vector<8x256xbf16>, vector<256x128xbf16>, vector<8x128xf32> -> vector<8x128xf32>
    %28 = arith.truncf %27 : vector<8x128xf32> to vector<8x128xbf16>
    %c0_21 = arith.constant 0 : index
    %c0_22 = arith.constant 0 : index
    %29 = vector.load %arg9[%c0_21, %c0_22] : memref<1x128xbf16, #tpu.memory_space<vmem>>, vector<1x128xbf16>
    %30 = vector.broadcast %29 : vector<1x128xbf16> to vector<8x128xbf16>
    %31 = arith.addf %28, %30 : vector<8x128xbf16>
    %cst_23 = arith.constant 0.000000e+00 : bf16
    %32 = vector.broadcast %cst_23 : bf16 to vector<8x128xbf16>
    %33 = arith.maximumf %31, %32 : vector<8x128xbf16>
    %c0_24 = arith.constant 0 : index
    %c0_25 = arith.constant 0 : index
    %34 = vector.load %arg10[%c0_24, %c0_25] : memref<128x128xbf16, #tpu.memory_space<vmem>>, vector<128x128xbf16>
    %cst_26 = arith.constant dense<0.000000e+00> : vector<8x128xf32>
    %35 = tpu.matmul %33, %34, %cst_26 {dimension_numbers = #tpu.dot_dimension_numbers<[1], [0], [0], [1], [0, 0, 1, 1], [], []>} : vector<8x128xbf16>, vector<128x128xbf16>, vector<8x128xf32> -> vector<8x128xf32>
    %c0_27 = arith.constant 0 : index
    %c0_28 = arith.constant 0 : index
    %36 = vector.load %arg11[%c0_27, %c0_28] : memref<1x128xf32, #tpu.memory_space<vmem>>, vector<1x128xf32>
    %37 = vector.broadcast %36 : vector<1x128xf32> to vector<8x128xf32>
    %38 = arith.addf %35, %37 : vector<8x128xf32>
    %c0_29 = arith.constant 0 : index
    %c0_30 = arith.constant 0 : index
    %39 = vector.load %arg12[%c0_29, %c0_30] : memref<8x128xf32, #tpu.memory_space<vmem>>, vector<8x128xf32>
    tpu.vector_store %arg12[%c0_29, %c0_30], %38 {strides = array<i32>} : memref<8x128xf32, #tpu.memory_space<vmem>>, vector<8x128xf32>,
    return
  }
  func.func @transform_0(%arg0: i32) -> (i32, i32) {
    %c0_i32 = arith.constant 0 : i32
    %c0_i32_0 = arith.constant 0 : i32
    return %arg0, %c0_i32 : i32, i32
  }
  func.func @transform_1(%arg0: i32) -> (i32, i32) {
    %c0_i32 = arith.constant 0 : i32
    %c0_i32_0 = arith.constant 0 : i32
    %c0_i32_1 = arith.constant 0 : i32
    return %c0_i32, %c0_i32_0 : i32, i32
  }
  func.func @transform_2(%arg0: i32) -> (i32, i32) {
    %c0_i32 = arith.constant 0 : i32
    %c0_i32_0 = arith.constant 0 : i32
    %c0_i32_1 = arith.constant 0 : i32
    return %c0_i32, %c0_i32_0 : i32, i32
  }
  func.func @transform_3(%arg0: i32) -> (i32, i32) {
    %c0_i32 = arith.constant 0 : i32
    %c0_i32_0 = arith.constant 0 : i32
    %c0_i32_1 = arith.constant 0 : i32
    return %c0_i32, %c0_i32_0 : i32, i32
  }
  func.func @transform_4(%arg0: i32) -> (i32, i32) {
    %c0_i32 = arith.constant 0 : i32
    %c0_i32_0 = arith.constant 0 : i32
    %c0_i32_1 = arith.constant 0 : i32
    return %c0_i32, %c0_i32_0 : i32, i32
  }
  func.func @transform_5(%arg0: i32) -> (i32, i32) {
    %c0_i32 = arith.constant 0 : i32
    %c0_i32_0 = arith.constant 0 : i32
    %c0_i32_1 = arith.constant 0 : i32
    return %c0_i32, %c0_i32_0 : i32, i32
  }
  func.func @transform_6(%arg0: i32) -> (i32, i32) {
    %c0_i32 = arith.constant 0 : i32
    %c0_i32_0 = arith.constant 0 : i32
    %c0_i32_1 = arith.constant 0 : i32
    return %c0_i32, %c0_i32_0 : i32, i32
  }
  func.func @transform_7(%arg0: i32) -> (i32, i32) {
    %c0_i32 = arith.constant 0 : i32
    %c0_i32_0 = arith.constant 0 : i32
    %c0_i32_1 = arith.constant 0 : i32
    return %c0_i32, %c0_i32_0 : i32, i32
  }
  func.func @transform_8(%arg0: i32) -> (i32, i32) {
    %c0_i32 = arith.constant 0 : i32
    %c0_i32_0 = arith.constant 0 : i32
    %c0_i32_1 = arith.constant 0 : i32
    return %c0_i32, %c0_i32_0 : i32, i32
  }
  func.func @transform_9(%arg0: i32) -> (i32, i32) {
    %c0_i32 = arith.constant 0 : i32
    %c0_i32_0 = arith.constant 0 : i32
    %c0_i32_1 = arith.constant 0 : i32
    return %c0_i32, %c0_i32_0 : i32, i32
  }
  func.func @transform_10(%arg0: i32) -> (i32, i32) {
    %c0_i32 = arith.constant 0 : i32
    %c0_i32_0 = arith.constant 0 : i32
    %c0_i32_1 = arith.constant 0 : i32
    return %c0_i32, %c0_i32_0 : i32, i32
  }
  func.func @transform_11(%arg0: i32) -> (i32, i32) {
    %c0_i32 = arith.constant 0 : i32
    %c0_i32_0 = arith.constant 0 : i32
    return %arg0, %c0_i32 : i32, i32
  }
}

module attributes {stable_mosaic.version = 11 : i64} {
  func.func @_mlp_kernel(%arg0: i32, %arg1: memref<8x512xf32, #tpu.memory_space<vmem>>, %arg2: memref<512x512xbf16, #tpu.memory_space<vmem>>, %arg3: memref<1x512xbf16, #tpu.memory_space<vmem>>, %arg4: memref<512x256xbf16, #tpu.memory_space<vmem>>, %arg5: memref<1x256xbf16, #tpu.memory_space<vmem>>, %arg6: memref<256x256xbf16, #tpu.memory_space<vmem>>, %arg7: memref<1x256xbf16, #tpu.memory_space<vmem>>, %arg8: memref<256x128xbf16, #tpu.memory_space<vmem>>, %arg9: memref<1x128xbf16, #tpu.memory_space<vmem>>, %arg10: memref<128x128xbf16, #tpu.memory_space<vmem>>, %arg11: memref<1x128xf32, #tpu.memory_space<vmem>>, %arg12: memref<8x128xf32, #tpu.memory_space<vmem>>) attributes {dimension_semantics = [#tpu.dimension_semantics<parallel>], iteration_bounds = array<i64: 1>, scalar_prefetch = 0 : i64, scratch_operands = 0 : i64, tpu.core_type = #tpu.core_type<tc>, window_params = [{transform_indices = @transform_0, window_bounds = array<i64: 8, 512>}, {pipeline_mode = #tpu.pipeline_mode<synchronous>, transform_indices = @transform_1, window_bounds = array<i64: 512, 512>}, {pipeline_mode = #tpu.pipeline_mode<synchronous>, transform_indices = @transform_2, window_bounds = array<i64: 1, 512>}, {pipeline_mode = #tpu.pipeline_mode<synchronous>, transform_indices = @transform_3, window_bounds = array<i64: 512, 256>}, {pipeline_mode = #tpu.pipeline_mode<synchronous>, transform_indices = @transform_4, window_bounds = array<i64: 1, 256>}, {pipeline_mode = #tpu.pipeline_mode<synchronous>, transform_indices = @transform_5, window_bounds = array<i64: 256, 256>}, {pipeline_mode = #tpu.pipeline_mode<synchronous>, transform_indices = @transform_6, window_bounds = array<i64: 1, 256>}, {pipeline_mode = #tpu.pipeline_mode<synchronous>, transform_indices = @transform_7, window_bounds = array<i64: 256, 128>}, {pipeline_mode = #tpu.pipeline_mode<synchronous>, transform_indices = @transform_8, window_bounds = array<i64: 1, 128>}, {pipeline_mode = #tpu.pipeline_mode<synchronous>, transform_indices = @transform_9, window_bounds = array<i64: 128, 128>}, {pipeline_mode = #tpu.pipeline_mode<synchronous>, transform_indices = @transform_10, window_bounds = array<i64: 1, 128>}, {transform_indices = @transform_11, window_bounds = array<i64: 8, 128>}]} {
    %c0 = arith.constant 0 : index
    %c0_0 = arith.constant 0 : index
    %0 = vector.load %arg1[%c0, %c0_0] : memref<8x512xf32, #tpu.memory_space<vmem>>, vector<8x512xf32>
    %1 = arith.truncf %0 : vector<8x512xf32> to vector<8x512xbf16>
    %c0_1 = arith.constant 0 : index
    %c0_2 = arith.constant 0 : index
    %2 = vector.load %arg2[%c0_1, %c0_2] : memref<512x512xbf16, #tpu.memory_space<vmem>>, vector<512x512xbf16>
    %cst = arith.constant dense<0.000000e+00> : vector<8x512xf32>
    %3 = tpu.matmul %1, %2, %cst {dimension_numbers = #tpu.dot_dimension_numbers<[1], [0], [0], [1], [0, 0, 1, 1], [], []>} : vector<8x512xbf16>, vector<512x512xbf16>, vector<8x512xf32> -> vector<8x512xf32>
    %4 = arith.truncf %3 : vector<8x512xf32> to vector<8x512xbf16>
    %c0_3 = arith.constant 0 : index
    %c0_4 = arith.constant 0 : index
    %5 = vector.load %arg3[%c0_3, %c0_4] : memref<1x512xbf16, #tpu.memory_space<vmem>>, vector<1x512xbf16>
    %6 = vector.broadcast %5 : vector<1x512xbf16> to vector<8x512xbf16>
    %7 = arith.addf %4, %6 : vector<8x512xbf16>
    %cst_5 = arith.constant 0.000000e+00 : bf16
    %8 = vector.broadcast %cst_5 : bf16 to vector<8x512xbf16>
    %9 = arith.maximumf %7, %8 : vector<8x512xbf16>
    %c0_6 = arith.constant 0 : index
    %c0_7 = arith.constant 0 : index
    %10 = vector.load %arg4[%c0_6, %c0_7] : memref<512x256xbf16, #tpu.memory_space<vmem>>, vector<512x256xbf16>
    %cst_8 = arith.constant dense<0.000000e+00> : vector<8x256xf32>
    %11 = tpu.matmul %9, %10, %cst_8 {dimension_numbers = #tpu.dot_dimension_numbers<[1], [0], [0], [1], [0, 0, 1, 1], [], []>} : vector<8x512xbf16>, vector<512x256xbf16>, vector<8x256xf32> -> vector<8x256xf32>
    %12 = arith.truncf %11 : vector<8x256xf32> to vector<8x256xbf16>
    %c0_9 = arith.constant 0 : index
    %c0_10 = arith.constant 0 : index
    %13 = vector.load %arg5[%c0_9, %c0_10] : memref<1x256xbf16, #tpu.memory_space<vmem>>, vector<1x256xbf16>
    %14 = vector.broadcast %13 : vector<1x256xbf16> to vector<8x256xbf16>
    %15 = arith.addf %12, %14 : vector<8x256xbf16>
    %cst_11 = arith.constant 0.000000e+00 : bf16
    %16 = vector.broadcast %cst_11 : bf16 to vector<8x256xbf16>
    %17 = arith.maximumf %15, %16 : vector<8x256xbf16>
    %c0_12 = arith.constant 0 : index
    %c0_13 = arith.constant 0 : index
    %18 = vector.load %arg6[%c0_12, %c0_13] : memref<256x256xbf16, #tpu.memory_space<vmem>>, vector<256x256xbf16>
    %cst_14 = arith.constant dense<0.000000e+00> : vector<8x256xf32>
    %19 = tpu.matmul %17, %18, %cst_14 {dimension_numbers = #tpu.dot_dimension_numbers<[1], [0], [0], [1], [0, 0, 1, 1], [], []>} : vector<8x256xbf16>, vector<256x256xbf16>, vector<8x256xf32> -> vector<8x256xf32>
    %20 = arith.truncf %19 : vector<8x256xf32> to vector<8x256xbf16>
    %c0_15 = arith.constant 0 : index
    %c0_16 = arith.constant 0 : index
    %21 = vector.load %arg7[%c0_15, %c0_16] : memref<1x256xbf16, #tpu.memory_space<vmem>>, vector<1x256xbf16>
    %22 = vector.broadcast %21 : vector<1x256xbf16> to vector<8x256xbf16>
    %23 = arith.addf %20, %22 : vector<8x256xbf16>
    %cst_17 = arith.constant 0.000000e+00 : bf16
    %24 = vector.broadcast %cst_17 : bf16 to vector<8x256xbf16>
    %25 = arith.maximumf %23, %24 : vector<8x256xbf16>
    %c0_18 = arith.constant 0 : index
    %c0_19 = arith.constant 0 : index
    %26 = vector.load %arg8[%c0_18, %c0_19] : memref<256x128xbf16, #tpu.memory_space<vmem>>, vector<256x128xbf16>
    %cst_20 = arith.constant dense<0.000000e+00> : vector<8x128xf32>
    %27 = tpu.matmul %25, %26, %cst_20 {dimension_numbers = #tpu.dot_dimension_numbers<[1], [0], [0], [1], [0, 0, 1, 1], [], []>} : vector<8x256xbf16>, vector<256x128xbf16>, vector<8x128xf32> -> vector<8x128xf32>
    %28 = arith.truncf %27 : vector<8x128xf32> to vector<8x128xbf16>
    %c0_21 = arith.constant 0 : index
    %c0_22 = arith.constant 0 : index
    %29 = vector.load %arg9[%c0_21, %c0_22] : memref<1x128xbf16, #tpu.memory_space<vmem>>, vector<1x128xbf16>
    %30 = vector.broadcast %29 : vector<1x128xbf16> to vector<8x128xbf16>
    %31 = arith.addf %28, %30 : vector<8x128xbf16>
    %cst_23 = arith.constant 0.000000e+00 : bf16
    %32 = vector.broadcast %cst_23 : bf16 to vector<8x128xbf16>
    %33 = arith.maximumf %31, %32 : vector<8x128xbf16>
    %c0_24 = arith.constant 0 : index
    %c0_25 = arith.constant 0 : index
    %34 = vector.load %arg10[%c0_24, %c0_25] : memref<128x128xbf16, #tpu.memory_space<vmem>>, vector<128x128xbf16>
    %cst_26 = arith.constant dense<0.000000e+00> : vector<8x128xf32>
    %35 = tpu.matmul %33, %34, %cst_26 {dimension_numbers = #tpu.dot_dimension_numbers<[1], [0], [0], [1], [0, 0, 1, 1], [], []>} : vector<8x128xbf16>, vector<128x128xbf16>, vector<8x128xf32> -> vector<8x128xf32>
    %c0_27 = arith.constant 0 : index
    %c0_28 = arith.constant 0 : index
    %36 = vector.load %arg11[%c0_27, %c0_28] : memref<1x128xf32, #tpu.memory_space<vmem>>, vector<1x128xf32>
    %37 = vector.broadcast %36 : vector<1x128xf32> to vector<8x128xf32>
    %38 = arith.addf %35, %37 : vector<8x128xf32>
    %c0_29 = arith.constant 0 : index
    %c0_30 = arith.constant 0 : index
    %39 = vector.load %arg12[%c0_29, %c0_30] : memref<8x128xf32, #tpu.memory_space<vmem>>, vector<8x128xf32>
    tpu.vector_store %arg12[%c0_29, %c0_30], %38 {strides = array<i32>} : memref<8x128xf32, #tpu.memory_space<vmem>>, vector<8x128xf32>,
    return
  }
  func.func @transform_0(%arg0: i32) -> (i32, i32) {
    %c0_i32 = arith.constant 0 : i32
    %c0_i32_0 = arith.constant 0 : i32
    return %arg0, %c0_i32 : i32, i32
  }
  func.func @transform_1(%arg0: i32) -> (i32, i32) {
    %c0_i32 = arith.constant 0 : i32
    %c0_i32_0 = arith.constant 0 : i32
    %c0_i32_1 = arith.constant 0 : i32
    return %c0_i32, %c0_i32_0 : i32, i32
  }
  func.func @transform_2(%arg0: i32) -> (i32, i32) {
    %c0_i32 = arith.constant 0 : i32
    %c0_i32_0 = arith.constant 0 : i32
    %c0_i32_1 = arith.constant 0 : i32
    return %c0_i32, %c0_i32_0 : i32, i32
  }
  func.func @transform_3(%arg0: i32) -> (i32, i32) {
    %c0_i32 = arith.constant 0 : i32
    %c0_i32_0 = arith.constant 0 : i32
    %c0_i32_1 = arith.constant 0 : i32
    return %c0_i32, %c0_i32_0 : i32, i32
  }
  func.func @transform_4(%arg0: i32) -> (i32, i32) {
    %c0_i32 = arith.constant 0 : i32
    %c0_i32_0 = arith.constant 0 : i32
    %c0_i32_1 = arith.constant 0 : i32
    return %c0_i32, %c0_i32_0 : i32, i32
  }
  func.func @transform_5(%arg0: i32) -> (i32, i32) {
    %c0_i32 = arith.constant 0 : i32
    %c0_i32_0 = arith.constant 0 : i32
    %c0_i32_1 = arith.constant 0 : i32
    return %c0_i32, %c0_i32_0 : i32, i32
  }
  func.func @transform_6(%arg0: i32) -> (i32, i32) {
    %c0_i32 = arith.constant 0 : i32
    %c0_i32_0 = arith.constant 0 : i32
    %c0_i32_1 = arith.constant 0 : i32
    return %c0_i32, %c0_i32_0 : i32, i32
  }
  func.func @transform_7(%arg0: i32) -> (i32, i32) {
    %c0_i32 = arith.constant 0 : i32
    %c0_i32_0 = arith.constant 0 : i32
    %c0_i32_1 = arith.constant 0 : i32
    return %c0_i32, %c0_i32_0 : i32, i32
  }
  func.func @transform_8(%arg0: i32) -> (i32, i32) {
    %c0_i32 = arith.constant 0 : i32
    %c0_i32_0 = arith.constant 0 : i32
    %c0_i32_1 = arith.constant 0 : i32
    return %c0_i32, %c0_i32_0 : i32, i32
  }
  func.func @transform_9(%arg0: i32) -> (i32, i32) {
    %c0_i32 = arith.constant 0 : i32
    %c0_i32_0 = arith.constant 0 : i32
    %c0_i32_1 = arith.constant 0 : i32
    return %c0_i32, %c0_i32_0 : i32, i32
  }
  func.func @transform_10(%arg0: i32) -> (i32, i32) {
    %c0_i32 = arith.constant 0 : i32
    %c0_i32_0 = arith.constant 0 : i32
    %c0_i32_1 = arith.constant 0 : i32
    return %c0_i32, %c0_i32_0 : i32, i32
  }
  func.func @transform_11(%arg0: i32) -> (i32, i32) {
    %c0_i32 = arith.constant 0 : i32
    %c0_i32_0 = arith.constant 0 : i32
    return %arg0, %c0_i32 : i32, i32
  }
}

</mosaic_0001>

<llo_original>
// kernel: tpu_custom_call.1
$region0: #{tpu_custom_call.1}
  #allocation0 [shape = 'u32[]', space=smem, size = 0x4, offset = 0x4, fixed_abs, tag = 'smem constant byte address 0x4 - core index']
  #allocation1 [shape = 'u32[144,128]{1,0:T(1,128)}', space=vmem, size = 0x12000, scoped, tag = 'internal scratch']
  %s0 = inlined_call_operand.hbm [shape: f32[8,512], index: 0, kind: input, shape index: {}]
  %s1 = inlined_call_operand.hbm [shape: bf16[512,512], index: 1, kind: input, shape index: {}]
  %s2 = inlined_call_operand.vmem [shape: bf16[1,512], index: 2, kind: input, shape index: {}]
  %s3 = inlined_call_operand.hbm [shape: bf16[512,256], index: 3, kind: input, shape index: {}]
  %s4 = inlined_call_operand.vmem [shape: bf16[1,256], index: 4, kind: input, shape index: {}]
  %s5 = inlined_call_operand.hbm [shape: bf16[256,256], index: 5, kind: input, shape index: {}]
  %s6 = inlined_call_operand.vmem [shape: bf16[1,256], index: 6, kind: input, shape index: {}]
  %s7 = inlined_call_operand.hbm [shape: bf16[256,128], index: 7, kind: input, shape index: {}]
  %s8 = inlined_call_operand.vmem [shape: bf16[1,128], index: 8, kind: input, shape index: {}]
  %s9 = inlined_call_operand.hbm [shape: bf16[128,128], index: 9, kind: input, shape index: {}]
  %s10 = inlined_call_operand.vmem [shape: f32[1,128], index: 10, kind: input, shape index: {}]
  %s11 = inlined_call_operand.hbm [shape: f32[8,128], index: 11, kind: output, shape index: {}]
  %s12 = sld [smem:[#allocation0]]
  $region78: #{tpu_custom_call.1} parent=0
    _
  %s14 = ssub.s32 1, %s12
  %s15 = scalar_select 0, %s14, %s12
  $region1: #{tpu_custom_call.1} parent=0
    #allocation2 [shape = 'u8[16384]{0}', space=vmem, size = 0x4000, scoped, tag = 'input window, operand 0, single buffered']
    #allocation3 [shape = 's32[1]{0}', space=sflag, size = 0x4, scoped, tag = 'scoped memory for tpu_custom_call.1']
    #allocation4 [shape = 's32[1]{0}', space=sflag, size = 0x4, scoped, tag = 'scoped memory for tpu_custom_call.1']
    #allocation5 [shape = 'u8[524288]{0}', space=vmem, size = 0x80000, scoped, tag = 'input window, operand 1, single buffered']
    #allocation6 [shape = 's32[1]{0}', space=sflag, size = 0x4, scoped, tag = 'scoped memory for tpu_custom_call.1']
    #allocation7 [shape = 'u8[262144]{0}', space=vmem, size = 0x40000, scoped, tag = 'input window, operand 3, single buffered']
    #allocation8 [shape = 'u8[131072]{0}', space=vmem, size = 0x20000, scoped, tag = 'input window, operand 5, single buffered']
    #allocation9 [shape = 's32[1]{0}', space=sflag, size = 0x4, scoped, tag = 'scoped memory for tpu_custom_call.1']
    #allocation10 [shape = 'u8[65536]{0}', space=vmem, size = 0x10000, scoped, tag = 'input window, operand 7, single buffered']
    #allocation11 [shape = 'u8[32768]{0}', space=vmem, size = 0x8000, scoped, tag = 'input window, operand 9, single buffered']
    #allocation12 [shape = 's32[1]{0}', space=sflag, size = 0x4, scoped, tag = 'scoped memory for tpu_custom_call.1']
    #allocation13 [shape = 'u8[4096]{0}', space=vmem, size = 0x1000, scoped, tag = 'output window, operand 0, single buffered']
    %16 = vsyncpa [#allocation3], 0
    %17 = vsyncpa [#allocation6], 0
    %18 = vsyncpa [#allocation9], 0
    %19 = vsyncpa [#allocation12], 0
    %20 = vsyncpa [#allocation4], 0
    // Predicated region
    $region2: #{tpu_custom_call.1} parent=1 // pred_check
      _
    $region3: #{tpu_custom_call.1} parent=1 // pred_check_branch
      %22 = sbr.rel (0) target = $region5
    $region4: #{tpu_custom_call.1} parent=1 // pred_region
      %s24 = ssub.s32 512, 512
      %25 = vsyncadd [#allocation3], %s24
      %s27 = sshll.u32 [#allocation2], 4
      %s28 = int_to_ptr.vmem [resolvable:$true] %s27
      %30 = dma.hbm_to_vmem [thread:$0]  %s0, 512, %s28, [#allocation3]
    $region5: #{tpu_custom_call.1} parent=1 // pred_fallthru
      _
    // Predicated region
    $region6: #{tpu_custom_call.1} parent=1 // pred_check
      _
    $region7: #{tpu_custom_call.1} parent=1 // pred_check_branch
      %32 = sbr.rel (0) target = $region9
    $region8: #{tpu_custom_call.1} parent=1 // pred_region
      %s34 = ssub.s32 16384, 16384
      %35 = vsyncadd [#allocation6], %s34
      %s36 = sshll.u32 [#allocation5], 4
      %s37 = int_to_ptr.vmem [resolvable:$true] %s36
      %42 = dma.hbm_to_vmem [thread:$0]  %s1, 16384, %s37, [#allocation6], 256, 256, 16
    $region9: #{tpu_custom_call.1} parent=1 // pred_fallthru
      _
    // Predicated region
    $region10: #{tpu_custom_call.1} parent=1 // pred_check
      _
    $region11: #{tpu_custom_call.1} parent=1 // pred_check_branch
      %44 = sbr.rel (0) target = $region13
    $region12: #{tpu_custom_call.1} parent=1 // pred_region
      _
    $region13: #{tpu_custom_call.1} parent=1 // pred_fallthru
      _
    // Predicated region
    $region14: #{tpu_custom_call.1} parent=1 // pred_check
      _
    $region15: #{tpu_custom_call.1} parent=1 // pred_check_branch
      %46 = sbr.rel (0) target = $region17
    $region16: #{tpu_custom_call.1} parent=1 // pred_region
      %s48 = ssub.s32 8192, 8192
      %49 = vsyncadd [#allocation6], %s48
      %s50 = sshll.u32 [#allocation7], 4
      %s51 = int_to_ptr.vmem [resolvable:$true] %s50
      %56 = dma.hbm_to_vmem [thread:$0]  %s3, 8192, %s51, [#allocation6], 128, 128, 8
    $region17: #{tpu_custom_call.1} parent=1 // pred_fallthru
      _
    // Predicated region
    $region18: #{tpu_custom_call.1} parent=1 // pred_check
      _
    $region19: #{tpu_custom_call.1} parent=1 // pred_check_branch
      %58 = sbr.rel (0) target = $region21
    $region20: #{tpu_custom_call.1} parent=1 // pred_region
      _
    $region21: #{tpu_custom_call.1} parent=1 // pred_fallthru
      _
    // Predicated region
    $region22: #{tpu_custom_call.1} parent=1 // pred_check
      _
    $region23: #{tpu_custom_call.1} parent=1 // pred_check_branch
      %60 = sbr.rel (0) target = $region25
    $region24: #{tpu_custom_call.1} parent=1 // pred_region
      %s62 = ssub.s32 4096, 4096
      %63 = vsyncadd [#allocation9], %s62
      %s64 = sshll.u32 [#allocation8], 4
      %s65 = int_to_ptr.vmem [resolvable:$true] %s64
      %70 = dma.hbm_to_vmem [thread:$0]  %s5, 4096, %s65, [#allocation9], 128, 128, 8
    $region25: #{tpu_custom_call.1} parent=1 // pred_fallthru
      _
    // Predicated region
    $region26: #{tpu_custom_call.1} parent=1 // pred_check
      _
    $region27: #{tpu_custom_call.1} parent=1 // pred_check_branch
      %72 = sbr.rel (0) target = $region29
    $region28: #{tpu_custom_call.1} parent=1 // pred_region
      _
    $region29: #{tpu_custom_call.1} parent=1 // pred_fallthru
      _
    // Predicated region
    $region30: #{tpu_custom_call.1} parent=1 // pred_check
      _
    $region31: #{tpu_custom_call.1} parent=1 // pred_check_branch
      %74 = sbr.rel (0) target = $region33
    $region32: #{tpu_custom_call.1} parent=1 // pred_region
      %s76 = ssub.s32 2048, 2048
      %77 = vsyncadd [#allocation9], %s76
      %s78 = sshll.u32 [#allocation10], 4
      %s79 = int_to_ptr.vmem [resolvable:$true] %s78
      %84 = dma.hbm_to_vmem [thread:$0]  %s7, 2048, %s79, [#allocation9], 64, 64, 4
    $region33: #{tpu_custom_call.1} parent=1 // pred_fallthru
      _
    // Predicated region
    $region34: #{tpu_custom_call.1} parent=1 // pred_check
      _
    $region35: #{tpu_custom_call.1} parent=1 // pred_check_branch
      %86 = sbr.rel (0) target = $region37
    $region36: #{tpu_custom_call.1} parent=1 // pred_region
      _
    $region37: #{tpu_custom_call.1} parent=1 // pred_fallthru
      _
    // Predicated region
    $region38: #{tpu_custom_call.1} parent=1 // pred_check
      _
    $region39: #{tpu_custom_call.1} parent=1 // pred_check_branch
      %88 = sbr.rel (0) target = $region41
    $region40: #{tpu_custom_call.1} parent=1 // pred_region
      %s90 = ssub.s32 1024, 1024
      %91 = vsyncadd [#allocation12], %s90
      %s92 = sshll.u32 [#allocation11], 4
      %s93 = int_to_ptr.vmem [resolvable:$true] %s92
      %98 = dma.hbm_to_vmem [thread:$0]  %s9, 1024, %s93, [#allocation12], 64, 64, 4
    $region41: #{tpu_custom_call.1} parent=1 // pred_fallthru
      _
    // Predicated region
    $region42: #{tpu_custom_call.1} parent=1 // pred_check
      _
    $region43: #{tpu_custom_call.1} parent=1 // pred_check_branch
      %100 = sbr.rel (0) target = $region45
    $region44: #{tpu_custom_call.1} parent=1 // pred_region
      _
    $region45: #{tpu_custom_call.1} parent=1 // pred_fallthru
      _
    // Predicated region
    $region46: #{tpu_custom_call.1} parent=1 // pred_check
      _
    $region47: #{tpu_custom_call.1} parent=1 // pred_check_branch
      %102 = sbr.rel (0) target = $region49
    $region48: #{tpu_custom_call.1} parent=1 // pred_region
      %103 = dma.done [#allocation3], 512
    $region49: #{tpu_custom_call.1} parent=1 // pred_fallthru
      _
    // Predicated region
    $region50: #{tpu_custom_call.1} parent=1 // pred_check
      _
    $region51: #{tpu_custom_call.1} parent=1 // pred_check_branch
      %105 = sbr.rel (0) target = $region53
    $region52: #{tpu_custom_call.1} parent=1 // pred_region
      %106 = dma.done [#allocation6], 16384
    $region53: #{tpu_custom_call.1} parent=1 // pred_fallthru
      _
    // Predicated region
    $region54: #{tpu_custom_call.1} parent=1 // pred_check
      _
    $region55: #{tpu_custom_call.1} parent=1 // pred_check_branch
      %108 = sbr.rel (0) target = $region57
    $region56: #{tpu_custom_call.1} parent=1 // pred_region
      %109 = dma.done [#allocation6], 8192
    $region57: #{tpu_custom_call.1} parent=1 // pred_fallthru
      _
    // Predicated region
    $region58: #{tpu_custom_call.1} parent=1 // pred_check
      _
    $region59: #{tpu_custom_call.1} parent=1 // pred_check_branch
      %111 = sbr.rel (0) target = $region61
    $region60: #{tpu_custom_call.1} parent=1 // pred_region
      %112 = dma.done [#allocation9], 4096
    $region61: #{tpu_custom_call.1} parent=1 // pred_fallthru
      _
    // Predicated region
    $region62: #{tpu_custom_call.1} parent=1 // pred_check
      _
    $region63: #{tpu_custom_call.1} parent=1 // pred_check_branch
      %114 = sbr.rel (0) target = $region65
    $region64: #{tpu_custom_call.1} parent=1 // pred_region
      %115 = dma.done [#allocation9], 2048
    $region65: #{tpu_custom_call.1} parent=1 // pred_fallthru
      _
    // Predicated region
    $region66: #{tpu_custom_call.1} parent=1 // pred_check
      _
    $region67: #{tpu_custom_call.1} parent=1 // pred_check_branch
      %117 = sbr.rel (0) target = $region69
    $region68: #{tpu_custom_call.1} parent=1 // pred_region
      %118 = dma.done [#allocation12], 1024
    $region69: #{tpu_custom_call.1} parent=1 // pred_fallthru
      _
    %v120 = vld [vmem:[#allocation2] sm:$0xff]
    %v121 = vld [vmem:[#allocation2 + $0x8] sm:$0xff]
    %v122 = vld [vmem:[#allocation2 + $0x10] sm:$0xff]
    %v123 = vld [vmem:[#allocation2 + $0x18] sm:$0xff]
    %v124 = vpack.c.bf16 %v120, %v120
    %v125 = vpack.c.bf16 %v121, %v121
    %v126 = vpack.c.bf16 %v122, %v122
    %v127 = vpack.c.bf16 %v123, %v123
    %v128 = vld [vmem:[#allocation5] sm:$0xff]
    %v129 = vld [vmem:[#allocation5 + $0x8] sm:$0xff]
    %v130 = vld [vmem:[#allocation5 + $0x10] sm:$0xff]
    %v131 = vld [vmem:[#allocation5 + $0x18] sm:$0xff]
    %v132 = vld [vmem:[#allocation5 + $0x20] sm:$0xff]
    %v133 = vld [vmem:[#allocation5 + $0x28] sm:$0xff]
    %v134 = vld [vmem:[#allocation5 + $0x30] sm:$0xff]
    %v135 = vld [vmem:[#allocation5 + $0x38] sm:$0xff]
    %v136 = vld [vmem:[#allocation5 + $0x40] sm:$0xff]
    %v137 = vld [vmem:[#allocation5 + $0x48] sm:$0xff]
    %v138 = vld [vmem:[#allocation5 + $0x50] sm:$0xff]
    %v139 = vld [vmem:[#allocation5 + $0x58] sm:$0xff]
    %v140 = vld [vmem:[#allocation5 + $0x60] sm:$0xff]
    %v141 = vld [vmem:[#allocation5 + $0x68] sm:$0xff]
    %v142 = vld [vmem:[#allocation5 + $0x70] sm:$0xff]
    %v143 = vld [vmem:[#allocation5 + $0x78] sm:$0xff]
    %v144 = vld [vmem:[#allocation5 + $0x80] sm:$0xff]
    %v145 = vld [vmem:[#allocation5 + $0x88] sm:$0xff]
    %v146 = vld [vmem:[#allocation5 + $0x90] sm:$0xff]
    %v147 = vld [vmem:[#allocation5 + $0x98] sm:$0xff]
    %v148 = vld [vmem:[#allocation5 + $0xa0] sm:$0xff]
    %v149 = vld [vmem:[#allocation5 + $0xa8] sm:$0xff]
    %v150 = vld [vmem:[#allocation5 + $0xb0] sm:$0xff]
    %v151 = vld [vmem:[#allocation5 + $0xb8] sm:$0xff]
    %v152 = vld [vmem:[#allocation5 + $0xc0] sm:$0xff]
    %v153 = vld [vmem:[#allocation5 + $0xc8] sm:$0xff]
    %v154 = vld [vmem:[#allocation5 + $0xd0] sm:$0xff]
    %v155 = vld [vmem:[#allocation5 + $0xd8] sm:$0xff]
    %v156 = vld [vmem:[#allocation5 + $0xe0] sm:$0xff]
    %v157 = vld [vmem:[#allocation5 + $0xe8] sm:$0xff]
    %v158 = vld [vmem:[#allocation5 + $0xf0] sm:$0xff]
    %v159 = vld [vmem:[#allocation5 + $0xf8] sm:$0xff]
    %v160 = vld [vmem:[#allocation5 + $0x100] sm:$0xff]
    %v161 = vld [vmem:[#allocation5 + $0x108] sm:$0xff]
    %v162 = vld [vmem:[#allocation5 + $0x110] sm:$0xff]
    %v163 = vld [vmem:[#allocation5 + $0x118] sm:$0xff]
    %v164 = vld [vmem:[#allocation5 + $0x120] sm:$0xff]
    %v165 = vld [vmem:[#allocation5 + $0x128] sm:$0xff]
    %v166 = vld [vmem:[#allocation5 + $0x130] sm:$0xff]
    %v167 = vld [vmem:[#allocation5 + $0x138] sm:$0xff]
    %v168 = vld [vmem:[#allocation5 + $0x140] sm:$0xff]
    %v169 = vld [vmem:[#allocation5 + $0x148] sm:$0xff]
    %v170 = vld [vmem:[#allocation5 + $0x150] sm:$0xff]
    %v171 = vld [vmem:[#allocation5 + $0x158] sm:$0xff]
    %v172 = vld [vmem:[#allocation5 + $0x160] sm:$0xff]
    %v173 = vld [vmem:[#allocation5 + $0x168] sm:$0xff]
    %v174 = vld [vmem:[#allocation5 + $0x170] sm:$0xff]
    %v175 = vld [vmem:[#allocation5 + $0x178] sm:$0xff]
    %v176 = vld [vmem:[#allocation5 + $0x180] sm:$0xff]
    %v177 = vld [vmem:[#allocation5 + $0x188] sm:$0xff]
    %v178 = vld [vmem:[#allocation5 + $0x190] sm:$0xff]
    %v179 = vld [vmem:[#allocation5 + $0x198] sm:$0xff]
    %v180 = vld [vmem:[#allocation5 + $0x1a0] sm:$0xff]
    %v181 = vld [vmem:[#allocation5 + $0x1a8] sm:$0xff]
    %v182 = vld [vmem:[#allocation5 + $0x1b0] sm:$0xff]
    %v183 = vld [vmem:[#allocation5 + $0x1b8] sm:$0xff]
    %v184 = vld [vmem:[#allocation5 + $0x1c0] sm:$0xff]
    %v185 = vld [vmem:[#allocation5 + $0x1c8] sm:$0xff]
    %v186 = vld [vmem:[#allocation5 + $0x1d0] sm:$0xff]
    %v187 = vld [vmem:[#allocation5 + $0x1d8] sm:$0xff]
    %v188 = vld [vmem:[#allocation5 + $0x1e0] sm:$0xff]
    %v189 = vld [vmem:[#allocation5 + $0x1e8] sm:$0xff]
    %v190 = vld [vmem:[#allocation5 + $0x1f0] sm:$0xff]
    %v191 = vld [vmem:[#allocation5 + $0x1f8] sm:$0xff]
    %v192 = vld [vmem:[#allocation5 + $0x200] sm:$0xff]
    %v193 = vld [vmem:[#allocation5 + $0x208] sm:$0xff]
    %v194 = vld [vmem:[#allocation5 + $0x210] sm:$0xff]
    %v195 = vld [vmem:[#allocation5 + $0x218] sm:$0xff]
    %v196 = vld [vmem:[#allocation5 + $0x220] sm:$0xff]
    %v197 = vld [vmem:[#allocation5 + $0x228] sm:$0xff]
    %v198 = vld [vmem:[#allocation5 + $0x230] sm:$0xff]
    %v199 = vld [vmem:[#allocation5 + $0x238] sm:$0xff]
    %v200 = vld [vmem:[#allocation5 + $0x240] sm:$0xff]
    %v201 = vld [vmem:[#allocation5 + $0x248] sm:$0xff]
    %v202 = vld [vmem:[#allocation5 + $0x250] sm:$0xff]
    %v203 = vld [vmem:[#allocation5 + $0x258] sm:$0xff]
    %v204 = vld [vmem:[#allocation5 + $0x260] sm:$0xff]
    %v205 = vld [vmem:[#allocation5 + $0x268] sm:$0xff]
    %v206 = vld [vmem:[#allocation5 + $0x270] sm:$0xff]
    %v207 = vld [vmem:[#allocation5 + $0x278] sm:$0xff]
    %v208 = vld [vmem:[#allocation5 + $0x280] sm:$0xff]
    %v209 = vld [vmem:[#allocation5 + $0x288] sm:$0xff]
    %v210 = vld [vmem:[#allocation5 + $0x290] sm:$0xff]
    %v211 = vld [vmem:[#allocation5 + $0x298] sm:$0xff]
    %v212 = vld [vmem:[#allocation5 + $0x2a0] sm:$0xff]
    %v213 = vld [vmem:[#allocation5 + $0x2a8] sm:$0xff]
    %v214 = vld [vmem:[#allocation5 + $0x2b0] sm:$0xff]
    %v215 = vld [vmem:[#allocation5 + $0x2b8] sm:$0xff]
    %v216 = vld [vmem:[#allocation5 + $0x2c0] sm:$0xff]
    %v217 = vld [vmem:[#allocation5 + $0x2c8] sm:$0xff]
    %v218 = vld [vmem:[#allocation5 + $0x2d0] sm:$0xff]
    %v219 = vld [vmem:[#allocation5 + $0x2d8] sm:$0xff]
    %v220 = vld [vmem:[#allocation5 + $0x2e0] sm:$0xff]
    %v221 = vld [vmem:[#allocation5 + $0x2e8] sm:$0xff]
    %v222 = vld [vmem:[#allocation5 + $0x2f0] sm:$0xff]
    %v223 = vld [vmem:[#allocation5 + $0x2f8] sm:$0xff]
    %v224 = vld [vmem:[#allocation5 + $0x300] sm:$0xff]
    %v225 = vld [vmem:[#allocation5 + $0x308] sm:$0xff]
    %v226 = vld [vmem:[#allocation5 + $0x310] sm:$0xff]
    %v227 = vld [vmem:[#allocation5 + $0x318] sm:$0xff]
    %v228 = vld [vmem:[#allocation5 + $0x320] sm:$0xff]
    %v229 = vld [vmem:[#allocation5 + $0x328] sm:$0xff]
    %v230 = vld [vmem:[#allocation5 + $0x330] sm:$0xff]
    %v231 = vld [vmem:[#allocation5 + $0x338] sm:$0xff]
    %v232 = vld [vmem:[#allocation5 + $0x340] sm:$0xff]
    %v233 = vld [vmem:[#allocation5 + $0x348] sm:$0xff]
    %v234 = vld [vmem:[#allocation5 + $0x350] sm:$0xff]
    %v235 = vld [vmem:[#allocation5 + $0x358] sm:$0xff]
    %v236 = vld [vmem:[#allocation5 + $0x360] sm:$0xff]
    %v237 = vld [vmem:[#allocation5 + $0x368] sm:$0xff]
    %v238 = vld [vmem:[#allocation5 + $0x370] sm:$0xff]
    %v239 = vld [vmem:[#allocation5 + $0x378] sm:$0xff]
    %v240 = vld [vmem:[#allocation5 + $0x380] sm:$0xff]
    %v241 = vld [vmem:[#allocation5 + $0x388] sm:$0xff]
    %v242 = vld [vmem:[#allocation5 + $0x390] sm:$0xff]
    %v243 = vld [vmem:[#allocation5 + $0x398] sm:$0xff]
    %v244 = vld [vmem:[#allocation5 + $0x3a0] sm:$0xff]
    %v245 = vld [vmem:[#allocation5 + $0x3a8] sm:$0xff]
    %v246 = vld [vmem:[#allocation5 + $0x3b0] sm:$0xff]
    %v247 = vld [vmem:[#allocation5 + $0x3b8] sm:$0xff]
    %v248 = vld [vmem:[#allocation5 + $0x3c0] sm:$0xff]
    %v249 = vld [vmem:[#allocation5 + $0x3c8] sm:$0xff]
    %v250 = vld [vmem:[#allocation5 + $0x3d0] sm:$0xff]
    %v251 = vld [vmem:[#allocation5 + $0x3d8] sm:$0xff]
    %v252 = vld [vmem:[#allocation5 + $0x3e0] sm:$0xff]
    %v253 = vld [vmem:[#allocation5 + $0x3e8] sm:$0xff]
    %v254 = vld [vmem:[#allocation5 + $0x3f0] sm:$0xff]
    %v255 = vld [vmem:[#allocation5 + $0x3f8] sm:$0xff]
    %v384 = vunpack.c.l.b16 %v128
    %v385 = vunpack.c.h.b16 %v128
    %v386 = vunpack.c.l.b16 %v129
    %v387 = vunpack.c.h.b16 %v129
    %v388 = vunpack.c.l.b16 %v130
    %v389 = vunpack.c.h.b16 %v130
    %v390 = vunpack.c.l.b16 %v131
    %v391 = vunpack.c.h.b16 %v131
    %v392 = vunpack.c.l.b16 %v132
    %v393 = vunpack.c.h.b16 %v132
    %v394 = vunpack.c.l.b16 %v133
    %v395 = vunpack.c.h.b16 %v133
    %v396 = vunpack.c.l.b16 %v134
    %v397 = vunpack.c.h.b16 %v134
    %v398 = vunpack.c.l.b16 %v135
    %v399 = vunpack.c.h.b16 %v135
    %v400 = vunpack.c.l.b16 %v136
    %v401 = vunpack.c.h.b16 %v136
    %v402 = vunpack.c.l.b16 %v137
    %v403 = vunpack.c.h.b16 %v137
    %v404 = vunpack.c.l.b16 %v138
    %v405 = vunpack.c.h.b16 %v138
    %v406 = vunpack.c.l.b16 %v139
    %v407 = vunpack.c.h.b16 %v139
    %v408 = vunpack.c.l.b16 %v140
    %v409 = vunpack.c.h.b16 %v140
    %v410 = vunpack.c.l.b16 %v141
    %v411 = vunpack.c.h.b16 %v141
    %v412 = vunpack.c.l.b16 %v142
    %v413 = vunpack.c.h.b16 %v142
    %v414 = vunpack.c.l.b16 %v143
    %v415 = vunpack.c.h.b16 %v143
    %v416 = vunpack.c.l.b16 %v144
    %v417 = vunpack.c.h.b16 %v144
    %v418 = vunpack.c.l.b16 %v145
    %v419 = vunpack.c.h.b16 %v145
    %v420 = vunpack.c.l.b16 %v146
    %v421 = vunpack.c.h.b16 %v146
    %v422 = vunpack.c.l.b16 %v147
    %v423 = vunpack.c.h.b16 %v147
    %v424 = vunpack.c.l.b16 %v148
    %v425 = vunpack.c.h.b16 %v148
    %v426 = vunpack.c.l.b16 %v149
    %v427 = vunpack.c.h.b16 %v149
    %v428 = vunpack.c.l.b16 %v150
    %v429 = vunpack.c.h.b16 %v150
    %v430 = vunpack.c.l.b16 %v151
    %v431 = vunpack.c.h.b16 %v151
    %v432 = vunpack.c.l.b16 %v152
    %v433 = vunpack.c.h.b16 %v152
    %v434 = vunpack.c.l.b16 %v153
    %v435 = vunpack.c.h.b16 %v153
    %v436 = vunpack.c.l.b16 %v154
    %v437 = vunpack.c.h.b16 %v154
    %v438 = vunpack.c.l.b16 %v155
    %v439 = vunpack.c.h.b16 %v155
    %v440 = vunpack.c.l.b16 %v156
    %v441 = vunpack.c.h.b16 %v156
    %v442 = vunpack.c.l.b16 %v157
    %v443 = vunpack.c.h.b16 %v157
    %v444 = vunpack.c.l.b16 %v158
    %v445 = vunpack.c.h.b16 %v158
    %v446 = vunpack.c.l.b16 %v159
    %v447 = vunpack.c.h.b16 %v159
    %v448 = vunpack.c.l.b16 %v160
    %v449 = vunpack.c.h.b16 %v160
    %v450 = vunpack.c.l.b16 %v161
    %v451 = vunpack.c.h.b16 %v161
    %v452 = vunpack.c.l.b16 %v162
    %v453 = vunpack.c.h.b16 %v162
    %v454 = vunpack.c.l.b16 %v163
    %v455 = vunpack.c.h.b16 %v163
    %v456 = vunpack.c.l.b16 %v164
    %v457 = vunpack.c.h.b16 %v164
    %v458 = vunpack.c.l.b16 %v165
    %v459 = vunpack.c.h.b16 %v165
    %v460 = vunpack.c.l.b16 %v166
    %v461 = vunpack.c.h.b16 %v166
    %v462 = vunpack.c.l.b16 %v167
    %v463 = vunpack.c.h.b16 %v167
    %v464 = vunpack.c.l.b16 %v168
    %v465 = vunpack.c.h.b16 %v168
    %v466 = vunpack.c.l.b16 %v169
    %v467 = vunpack.c.h.b16 %v169
    %v468 = vunpack.c.l.b16 %v170
    %v469 = vunpack.c.h.b16 %v170
    %v470 = vunpack.c.l.b16 %v171
    %v471 = vunpack.c.h.b16 %v171
    %v472 = vunpack.c.l.b16 %v172
    %v473 = vunpack.c.h.b16 %v172
    %v474 = vunpack.c.l.b16 %v173
    %v475 = vunpack.c.h.b16 %v173
    %v476 = vunpack.c.l.b16 %v174
    %v477 = vunpack.c.h.b16 %v174
    %v478 = vunpack.c.l.b16 %v175
    %v479 = vunpack.c.h.b16 %v175
    %v480 = vunpack.c.l.b16 %v176
    %v481 = vunpack.c.h.b16 %v176
    %v482 = vunpack.c.l.b16 %v177
    %v483 = vunpack.c.h.b16 %v177
    %v484 = vunpack.c.l.b16 %v178
    %v485 = vunpack.c.h.b16 %v178
    %v486 = vunpack.c.l.b16 %v179
    %v487 = vunpack.c.h.b16 %v179
    %v488 = vunpack.c.l.b16 %v180
    %v489 = vunpack.c.h.b16 %v180
    %v490 = vunpack.c.l.b16 %v181
    %v491 = vunpack.c.h.b16 %v181
    %v492 = vunpack.c.l.b16 %v182
    %v493 = vunpack.c.h.b16 %v182
    %v494 = vunpack.c.l.b16 %v183
    %v495 = vunpack.c.h.b16 %v183
    %v496 = vunpack.c.l.b16 %v184
    %v497 = vunpack.c.h.b16 %v184
    %v498 = vunpack.c.l.b16 %v185
    %v499 = vunpack.c.h.b16 %v185
    %v500 = vunpack.c.l.b16 %v186
    %v501 = vunpack.c.h.b16 %v186
    %v502 = vunpack.c.l.b16 %v187
    %v503 = vunpack.c.h.b16 %v187
    %v504 = vunpack.c.l.b16 %v188
    %v505 = vunpack.c.h.b16 %v188
    %v506 = vunpack.c.l.b16 %v189
    %v507 = vunpack.c.h.b16 %v189
    %v508 = vunpack.c.l.b16 %v190
    %v509 = vunpack.c.h.b16 %v190
    %v510 = vunpack.c.l.b16 %v191
    %v511 = vunpack.c.h.b16 %v191
    %v512 = vunpack.c.l.b16 %v192
    %v513 = vunpack.c.h.b16 %v192
    %v514 = vunpack.c.l.b16 %v193
    %v515 = vunpack.c.h.b16 %v193
    %v516 = vunpack.c.l.b16 %v194
    %v517 = vunpack.c.h.b16 %v194
    %v518 = vunpack.c.l.b16 %v195
    %v519 = vunpack.c.h.b16 %v195
    %v520 = vunpack.c.l.b16 %v196
    %v521 = vunpack.c.h.b16 %v196
    %v522 = vunpack.c.l.b16 %v197
    %v523 = vunpack.c.h.b16 %v197
    %v524 = vunpack.c.l.b16 %v198
    %v525 = vunpack.c.h.b16 %v198
    %v526 = vunpack.c.l.b16 %v199
    %v527 = vunpack.c.h.b16 %v199
    %v528 = vunpack.c.l.b16 %v200
    %v529 = vunpack.c.h.b16 %v200
    %v530 = vunpack.c.l.b16 %v201
    %v531 = vunpack.c.h.b16 %v201
    %v532 = vunpack.c.l.b16 %v202
    %v533 = vunpack.c.h.b16 %v202
    %v534 = vunpack.c.l.b16 %v203
    %v535 = vunpack.c.h.b16 %v203
    %v536 = vunpack.c.l.b16 %v204
    %v537 = vunpack.c.h.b16 %v204
    %v538 = vunpack.c.l.b16 %v205
    %v539 = vunpack.c.h.b16 %v205
    %v540 = vunpack.c.l.b16 %v206
    %v541 = vunpack.c.h.b16 %v206
    %v542 = vunpack.c.l.b16 %v207
    %v543 = vunpack.c.h.b16 %v207
    %v544 = vunpack.c.l.b16 %v208
    %v545 = vunpack.c.h.b16 %v208
    %v546 = vunpack.c.l.b16 %v209
    %v547 = vunpack.c.h.b16 %v209
    %v548 = vunpack.c.l.b16 %v210
    %v549 = vunpack.c.h.b16 %v210
    %v550 = vunpack.c.l.b16 %v211
    %v551 = vunpack.c.h.b16 %v211
    %v552 = vunpack.c.l.b16 %v212
    %v553 = vunpack.c.h.b16 %v212
    %v554 = vunpack.c.l.b16 %v213
    %v555 = vunpack.c.h.b16 %v213
    %v556 = vunpack.c.l.b16 %v214
    %v557 = vunpack.c.h.b16 %v214
    %v558 = vunpack.c.l.b16 %v215
    %v559 = vunpack.c.h.b16 %v215
    %v560 = vunpack.c.l.b16 %v216
    %v561 = vunpack.c.h.b16 %v216
    %v562 = vunpack.c.l.b16 %v217
    %v563 = vunpack.c.h.b16 %v217
    %v564 = vunpack.c.l.b16 %v218
    %v565 = vunpack.c.h.b16 %v218
    %v566 = vunpack.c.l.b16 %v219
    %v567 = vunpack.c.h.b16 %v219
    %v568 = vunpack.c.l.b16 %v220
    %v569 = vunpack.c.h.b16 %v220
    %v570 = vunpack.c.l.b16 %v221
    %v571 = vunpack.c.h.b16 %v221
    %v572 = vunpack.c.l.b16 %v222
    %v573 = vunpack.c.h.b16 %v222
    %v574 = vunpack.c.l.b16 %v223
    %v575 = vunpack.c.h.b16 %v223
    %v576 = vunpack.c.l.b16 %v224
    %v577 = vunpack.c.h.b16 %v224
    %v578 = vunpack.c.l.b16 %v225
    %v579 = vunpack.c.h.b16 %v225
    %v580 = vunpack.c.l.b16 %v226
    %v581 = vunpack.c.h.b16 %v226
    %v582 = vunpack.c.l.b16 %v227
    %v583 = vunpack.c.h.b16 %v227
    %v584 = vunpack.c.l.b16 %v228
    %v585 = vunpack.c.h.b16 %v228
    %v586 = vunpack.c.l.b16 %v229
    %v587 = vunpack.c.h.b16 %v229
    %v588 = vunpack.c.l.b16 %v230
    %v589 = vunpack.c.h.b16 %v230
    %v590 = vunpack.c.l.b16 %v231
    %v591 = vunpack.c.h.b16 %v231
    %v592 = vunpack.c.l.b16 %v232
    %v593 = vunpack.c.h.b16 %v232
    %v594 = vunpack.c.l.b16 %v233
    %v595 = vunpack.c.h.b16 %v233
    %v596 = vunpack.c.l.b16 %v234
    %v597 = vunpack.c.h.b16 %v234
    %v598 = vunpack.c.l.b16 %v235
    %v599 = vunpack.c.h.b16 %v235
    %v600 = vunpack.c.l.b16 %v236
    %v601 = vunpack.c.h.b16 %v236
    %v602 = vunpack.c.l.b16 %v237
    %v603 = vunpack.c.h.b16 %v237
    %v604 = vunpack.c.l.b16 %v238
    %v605 = vunpack.c.h.b16 %v238
    %v606 = vunpack.c.l.b16 %v239
    %v607 = vunpack.c.h.b16 %v239
    %v608 = vunpack.c.l.b16 %v240
    %v609 = vunpack.c.h.b16 %v240
    %v610 = vunpack.c.l.b16 %v241
    %v611 = vunpack.c.h.b16 %v241
    %v612 = vunpack.c.l.b16 %v242
    %v613 = vunpack.c.h.b16 %v242
    %v614 = vunpack.c.l.b16 %v243
    %v615 = vunpack.c.h.b16 %v243
    %v616 = vunpack.c.l.b16 %v244
    %v617 = vunpack.c.h.b16 %v244
    %v618 = vunpack.c.l.b16 %v245
    %v619 = vunpack.c.h.b16 %v245
    %v620 = vunpack.c.l.b16 %v246
    %v621 = vunpack.c.h.b16 %v246
    %v622 = vunpack.c.l.b16 %v247
    %v623 = vunpack.c.h.b16 %v247
    %v624 = vunpack.c.l.b16 %v248
    %v625 = vunpack.c.h.b16 %v248
    %v626 = vunpack.c.l.b16 %v249
    %v627 = vunpack.c.h.b16 %v249
    %v628 = vunpack.c.l.b16 %v250
    %v629 = vunpack.c.h.b16 %v250
    %v630 = vunpack.c.l.b16 %v251
    %v631 = vunpack.c.h.b16 %v251
    %v632 = vunpack.c.l.b16 %v252
    %v633 = vunpack.c.h.b16 %v252
    %v634 = vunpack.c.l.b16 %v253
    %v635 = vunpack.c.h.b16 %v253
    %v636 = vunpack.c.l.b16 %v254
    %v637 = vunpack.c.h.b16 %v254
    %v638 = vunpack.c.l.b16 %v255
    %v639 = vunpack.c.h.b16 %v255
    %v640 = vpack.c.b16 %v388, %v384
    %v641 = vpack.c.b16 %v389, %v385
    %v642 = vpack.c.b16 %v390, %v386
    %v643 = vpack.c.b16 %v391, %v387
    %v644 = vpack.c.b16 %v396, %v392
    %v645 = vpack.c.b16 %v397, %v393
    %v646 = vpack.c.b16 %v398, %v394
    %v647 = vpack.c.b16 %v399, %v395
    %v648 = vpack.c.b16 %v404, %v400
    %v649 = vpack.c.b16 %v405, %v401
    %v650 = vpack.c.b16 %v406, %v402
    %v651 = vpack.c.b16 %v407, %v403
    %v652 = vpack.c.b16 %v412, %v408
    %v653 = vpack.c.b16 %v413, %v409
    %v654 = vpack.c.b16 %v414, %v410
    %v655 = vpack.c.b16 %v415, %v411
    %v656 = vpack.c.b16 %v420, %v416
    %v657 = vpack.c.b16 %v421, %v417
    %v658 = vpack.c.b16 %v422, %v418
    %v659 = vpack.c.b16 %v423, %v419
    %v660 = vpack.c.b16 %v428, %v424
    %v661 = vpack.c.b16 %v429, %v425
    %v662 = vpack.c.b16 %v430, %v426
    %v663 = vpack.c.b16 %v431, %v427
    %v664 = vpack.c.b16 %v436, %v432
    %v665 = vpack.c.b16 %v437, %v433
    %v666 = vpack.c.b16 %v438, %v434
    %v667 = vpack.c.b16 %v439, %v435
    %v668 = vpack.c.b16 %v444, %v440
    %v669 = vpack.c.b16 %v445, %v441
    %v670 = vpack.c.b16 %v446, %v442
    %v671 = vpack.c.b16 %v447, %v443
    %v672 = vpack.c.b16 %v452, %v448
    %v673 = vpack.c.b16 %v453, %v449
    %v674 = vpack.c.b16 %v454, %v450
    %v675 = vpack.c.b16 %v455, %v451
    %v676 = vpack.c.b16 %v460, %v456
    %v677 = vpack.c.b16 %v461, %v457
    %v678 = vpack.c.b16 %v462, %v458
    %v679 = vpack.c.b16 %v463, %v459
    %v680 = vpack.c.b16 %v468, %v464
    %v681 = vpack.c.b16 %v469, %v465
    %v682 = vpack.c.b16 %v470, %v466
    %v683 = vpack.c.b16 %v471, %v467
    %v684 = vpack.c.b16 %v476, %v472
    %v685 = vpack.c.b16 %v477, %v473
    %v686 = vpack.c.b16 %v478, %v474
    %v687 = vpack.c.b16 %v479, %v475
    %v688 = vpack.c.b16 %v484, %v480
    %v689 = vpack.c.b16 %v485, %v481
    %v690 = vpack.c.b16 %v486, %v482
    %v691 = vpack.c.b16 %v487, %v483
    %v692 = vpack.c.b16 %v492, %v488
    %v693 = vpack.c.b16 %v493, %v489
    %v694 = vpack.c.b16 %v494, %v490
    %v695 = vpack.c.b16 %v495, %v491
    %v696 = vpack.c.b16 %v500, %v496
    %v697 = vpack.c.b16 %v501, %v497
    %v698 = vpack.c.b16 %v502, %v498
    %v699 = vpack.c.b16 %v503, %v499
    %v700 = vpack.c.b16 %v508, %v504
    %v701 = vpack.c.b16 %v509, %v505
    %v702 = vpack.c.b16 %v510, %v506
    %v703 = vpack.c.b16 %v511, %v507
    %v704 = vpack.c.b16 %v516, %v512
    %v705 = vpack.c.b16 %v517, %v513
    %v706 = vpack.c.b16 %v518, %v514
    %v707 = vpack.c.b16 %v519, %v515
    %v708 = vpack.c.b16 %v524, %v520
    %v709 = vpack.c.b16 %v525, %v521
    %v710 = vpack.c.b16 %v526, %v522
    %v711 = vpack.c.b16 %v527, %v523
    %v712 = vpack.c.b16 %v532, %v528
    %v713 = vpack.c.b16 %v533, %v529
    %v714 = vpack.c.b16 %v534, %v530
    %v715 = vpack.c.b16 %v535, %v531
    %v716 = vpack.c.b16 %v540, %v536
    %v717 = vpack.c.b16 %v541, %v537
    %v718 = vpack.c.b16 %v542, %v538
    %v719 = vpack.c.b16 %v543, %v539
    %v720 = vpack.c.b16 %v548, %v544
    %v721 = vpack.c.b16 %v549, %v545
    %v722 = vpack.c.b16 %v550, %v546
    %v723 = vpack.c.b16 %v551, %v547
    %v724 = vpack.c.b16 %v556, %v552
    %v725 = vpack.c.b16 %v557, %v553
    %v726 = vpack.c.b16 %v558, %v554
    %v727 = vpack.c.b16 %v559, %v555
    %v728 = vpack.c.b16 %v564, %v560
    %v729 = vpack.c.b16 %v565, %v561
    %v730 = vpack.c.b16 %v566, %v562
    %v731 = vpack.c.b16 %v567, %v563
    %v732 = vpack.c.b16 %v572, %v568
    %v733 = vpack.c.b16 %v573, %v569
    %v734 = vpack.c.b16 %v574, %v570
    %v735 = vpack.c.b16 %v575, %v571
    %v736 = vpack.c.b16 %v580, %v576
    %v737 = vpack.c.b16 %v581, %v577
    %v738 = vpack.c.b16 %v582, %v578
    %v739 = vpack.c.b16 %v583, %v579
    %v740 = vpack.c.b16 %v588, %v584
    %v741 = vpack.c.b16 %v589, %v585
    %v742 = vpack.c.b16 %v590, %v586
    %v743 = vpack.c.b16 %v591, %v587
    %v744 = vpack.c.b16 %v596, %v592
    %v745 = vpack.c.b16 %v597, %v593
    %v746 = vpack.c.b16 %v598, %v594
    %v747 = vpack.c.b16 %v599, %v595
    %v748 = vpack.c.b16 %v604, %v600
    %v749 = vpack.c.b16 %v605, %v601
    %v750 = vpack.c.b16 %v606, %v602
    %v751 = vpack.c.b16 %v607, %v603
    %v752 = vpack.c.b16 %v612, %v608
    %v753 = vpack.c.b16 %v613, %v609
    %v754 = vpack.c.b16 %v614, %v610
    %v755 = vpack.c.b16 %v615, %v611
    %v756 = vpack.c.b16 %v620, %v616
    %v757 = vpack.c.b16 %v621, %v617
    %v758 = vpack.c.b16 %v622, %v618
    %v759 = vpack.c.b16 %v623, %v619
    %v760 = vpack.c.b16 %v628, %v624
    %v761 = vpack.c.b16 %v629, %v625
    %v762 = vpack.c.b16 %v630, %v626
    %v763 = vpack.c.b16 %v631, %v627
    %v764 = vpack.c.b16 %v636, %v632
    %v765 = vpack.c.b16 %v637, %v633
    %v766 = vpack.c.b16 %v638, %v634
    %v767 = vpack.c.b16 %v639, %v635
    %896 = vmatprep.subr.bf16.mxu0 %v641
    %897 = vmatpush1.bf16.msra.mxu0 %v640
    %898 = vmatprep.subr.bf16.mxu0 %v645
    %899 = vmatpush1.bf16.msra.mxu0 %v644
    %900 = vmatprep.subr.bf16.mxu0 %v649
    %901 = vmatpush1.bf16.msra.mxu0 %v648
    %902 = vmatprep.subr.bf16.mxu0 %v653
    %903 = vmatpush1.bf16.msra.mxu0 %v652
    %904 = vmatprep.subr.bf16.mxu0 %v657
    %905 = vmatpush1.bf16.msra.mxu0 %v656
    %906 = vmatprep.subr.bf16.mxu0 %v661
    %907 = vmatpush1.bf16.msra.mxu0 %v660
    %908 = vmatprep.subr.bf16.mxu0 %v665
    %909 = vmatpush1.bf16.msra.mxu0 %v664
    %910 = vmatprep.subr.bf16.mxu0 %v669
    %911 = vmatpush1.bf16.msra.mxu0 %v668
    %912 = vmatprep.subr.bf16.mxu0 %v673
    %913 = vmatpush1.bf16.msra.mxu0 %v672
    %914 = vmatprep.subr.bf16.mxu0 %v677
    %915 = vmatpush1.bf16.msra.mxu0 %v676
    %916 = vmatprep.subr.bf16.mxu0 %v681
    %917 = vmatpush1.bf16.msra.mxu0 %v680
    %918 = vmatprep.subr.bf16.mxu0 %v685
    %919 = vmatpush1.bf16.msra.mxu0 %v684
    %920 = vmatprep.subr.bf16.mxu0 %v689
    %921 = vmatpush1.bf16.msra.mxu0 %v688
    %922 = vmatprep.subr.bf16.mxu0 %v693
    %923 = vmatpush1.bf16.msra.mxu0 %v692
    %924 = vmatprep.subr.bf16.mxu0 %v697
    %925 = vmatpush1.bf16.msra.mxu0 %v696
    %926 = vmatprep.subr.bf16.mxu0 %v701
    %927 = vmatpush1.bf16.msra.mxu0 %v700
    %928 = vmatprep.mubr.bf16.mxu0 %v125
    %929 = vmatmul.mubr.bf16.gmra.mrb[0].mxu0 %v124
    %v930 = vpop.f32.mrb[0].mxu0
    %v931 = vadd.f32 0.0, %v930
    %v932 = vpop.f32.mrb[0].mxu0
    %v933 = vadd.f32 0.0, %v932
    %v934 = vpop.f32.mrb[0].mxu0
    %v935 = vpop.f32.mrb[0].mxu0
    %936 = vdwg.mxu0
    %937 = vmatprep.subr.bf16.mxu0 %v705
    %938 = vmatpush1.bf16.msra.mxu0 %v704
    %939 = vmatprep.subr.bf16.mxu0 %v709
    %940 = vmatpush1.bf16.msra.mxu0 %v708
    %941 = vmatprep.subr.bf16.mxu0 %v713
    %942 = vmatpush1.bf16.msra.mxu0 %v712
    %943 = vmatprep.subr.bf16.mxu0 %v717
    %944 = vmatpush1.bf16.msra.mxu0 %v716
    %945 = vmatprep.subr.bf16.mxu0 %v721
    %946 = vmatpush1.bf16.msra.mxu0 %v720
    %947 = vmatprep.subr.bf16.mxu0 %v725
    %948 = vmatpush1.bf16.msra.mxu0 %v724
    %949 = vmatprep.subr.bf16.mxu0 %v729
    %950 = vmatpush1.bf16.msra.mxu0 %v728
    %951 = vmatprep.subr.bf16.mxu0 %v733
    %952 = vmatpush1.bf16.msra.mxu0 %v732
    %953 = vmatprep.subr.bf16.mxu0 %v737
    %954 = vmatpush1.bf16.msra.mxu0 %v736
    %955 = vmatprep.subr.bf16.mxu0 %v741
    %956 = vmatpush1.bf16.msra.mxu0 %v740
    %957 = vmatprep.subr.bf16.mxu0 %v745
    %958 = vmatpush1.bf16.msra.mxu0 %v744
    %959 = vmatprep.subr.bf16.mxu0 %v749
    %960 = vmatpush1.bf16.msra.mxu0 %v748
    %961 = vmatprep.subr.bf16.mxu0 %v753
    %962 = vmatpush1.bf16.msra.mxu0 %v752
    %963 = vmatprep.subr.bf16.mxu0 %v757
    %964 = vmatpush1.bf16.msra.mxu0 %v756
    %965 = vmatprep.subr.bf16.mxu0 %v761
    %966 = vmatpush1.bf16.msra.mxu0 %v760
    %967 = vmatprep.subr.bf16.mxu0 %v765
    %968 = vmatpush1.bf16.msra.mxu0 %v764
    %969 = vmatprep.mubr.bf16.mxu0 %v127
    %970 = vmatmul.mubr.bf16.gmra.mrb[0].mxu0 %v126
    %v971 = vpop.f32.mrb[0].mxu0
    %v972 = vadd.f32 %v931, %v971
    %v973 = vpop.f32.mrb[0].mxu0
    %v974 = vadd.f32 %v933, %v973
    %v975 = vpop.f32.mrb[0].mxu0
    %v976 = vpop.f32.mrb[0].mxu0
    %977 = vdwg.mxu0
    %978 = vmatprep.subr.bf16.mxu0 %v643
    %979 = vmatpush1.bf16.msra.mxu0 %v642
    %980 = vmatprep.subr.bf16.mxu0 %v647
    %981 = vmatpush1.bf16.msra.mxu0 %v646
    %982 = vmatprep.subr.bf16.mxu0 %v651
    %983 = vmatpush1.bf16.msra.mxu0 %v650
    %984 = vmatprep.subr.bf16.mxu0 %v655
    %985 = vmatpush1.bf16.msra.mxu0 %v654
    %986 = vmatprep.subr.bf16.mxu0 %v659
    %987 = vmatpush1.bf16.msra.mxu0 %v658
    %988 = vmatprep.subr.bf16.mxu0 %v663
    %989 = vmatpush1.bf16.msra.mxu0 %v662
    %990 = vmatprep.subr.bf16.mxu0 %v667
    %991 = vmatpush1.bf16.msra.mxu0 %v666
    %992 = vmatprep.subr.bf16.mxu0 %v671
    %993 = vmatpush1.bf16.msra.mxu0 %v670
    %994 = vmatprep.subr.bf16.mxu0 %v675
    %995 = vmatpush1.bf16.msra.mxu0 %v674
    %996 = vmatprep.subr.bf16.mxu0 %v679
    %997 = vmatpush1.bf16.msra.mxu0 %v678
    %998 = vmatprep.subr.bf16.mxu0 %v683
    %999 = vmatpush1.bf16.msra.mxu0 %v682
    %1000 = vmatprep.subr.bf16.mxu0 %v687
    %1001 = vmatpush1.bf16.msra.mxu0 %v686
    %1002 = vmatprep.subr.bf16.mxu0 %v691
    %1003 = vmatpush1.bf16.msra.mxu0 %v690
    %1004 = vmatprep.subr.bf16.mxu0 %v695
    %1005 = vmatpush1.bf16.msra.mxu0 %v694
    %1006 = vmatprep.subr.bf16.mxu0 %v699
    %1007 = vmatpush1.bf16.msra.mxu0 %v698
    %1008 = vmatprep.subr.bf16.mxu0 %v703
    %1009 = vmatpush1.bf16.msra.mxu0 %v702
    %1010 = vmatprep.mubr.bf16.mxu0 %v125
    %1011 = vmatmul.mubr.bf16.gmra.mrb[0].mxu0 %v124
    %v1012 = vpop.f32.mrb[0].mxu0
    %v1013 = vadd.f32 0.0, %v1012
    %v1014 = vpop.f32.mrb[0].mxu0
    %v1015 = vadd.f32 0.0, %v1014
    %v1016 = vpop.f32.mrb[0].mxu0
    %v1017 = vpop.f32.mrb[0].mxu0
    %1018 = vdwg.mxu0
    %1019 = vmatprep.subr.bf16.mxu0 %v707
    %1020 = vmatpush1.bf16.msra.mxu0 %v706
    %1021 = vmatprep.subr.bf16.mxu0 %v711
    %1022 = vmatpush1.bf16.msra.mxu0 %v710
    %1023 = vmatprep.subr.bf16.mxu0 %v715
    %1024 = vmatpush1.bf16.msra.mxu0 %v714
    %1025 = vmatprep.subr.bf16.mxu0 %v719
    %1026 = vmatpush1.bf16.msra.mxu0 %v718
    %1027 = vmatprep.subr.bf16.mxu0 %v723
    %1028 = vmatpush1.bf16.msra.mxu0 %v722
    %1029 = vmatprep.subr.bf16.mxu0 %v727
    %1030 = vmatpush1.bf16.msra.mxu0 %v726
    %1031 = vmatprep.subr.bf16.mxu0 %v731
    %1032 = vmatpush1.bf16.msra.mxu0 %v730
    %1033 = vmatprep.subr.bf16.mxu0 %v735
    %1034 = vmatpush1.bf16.msra.mxu0 %v734
    %1035 = vmatprep.subr.bf16.mxu0 %v739
    %1036 = vmatpush1.bf16.msra.mxu0 %v738
    %1037 = vmatprep.subr.bf16.mxu0 %v743
    %1038 = vmatpush1.bf16.msra.mxu0 %v742
    %1039 = vmatprep.subr.bf16.mxu0 %v747
    %1040 = vmatpush1.bf16.msra.mxu0 %v746
    %1041 = vmatprep.subr.bf16.mxu0 %v751
    %1042 = vmatpush1.bf16.msra.mxu0 %v750
    %1043 = vmatprep.subr.bf16.mxu0 %v755
    %1044 = vmatpush1.bf16.msra.mxu0 %v754
    %1045 = vmatprep.subr.bf16.mxu0 %v759
    %1046 = vmatpush1.bf16.msra.mxu0 %v758
    %1047 = vmatprep.subr.bf16.mxu0 %v763
    %1048 = vmatpush1.bf16.msra.mxu0 %v762
    %1049 = vmatprep.subr.bf16.mxu0 %v767
    %1050 = vmatpush1.bf16.msra.mxu0 %v766
    %1051 = vmatprep.mubr.bf16.mxu0 %v127
    %1052 = vmatmul.mubr.bf16.gmra.mrb[0].mxu0 %v126
    %v1053 = vpop.f32.mrb[0].mxu0
    %v1054 = vadd.f32 %v1013, %v1053
    %v1055 = vpop.f32.mrb[0].mxu0
    %v1056 = vadd.f32 %v1015, %v1055
    %v1057 = vpop.f32.mrb[0].mxu0
    %v1058 = vpop.f32.mrb[0].mxu0
    %1059 = vdwg.mxu0
    %v1060 = vpack.c.bf16 %v972, %v972
    %v1061 = vpack.c.bf16 %v974, %v974
    %v1062 = vpack.c.bf16 %v1054, %v1054
    %v1063 = vpack.c.bf16 %v1056, %v1056
    %v1064 = vld [vmem:[%s2] sm:$0xf]
    %v1067 = vunpack.c.l.s4 1966171168
    %v1068 = vunpack.c.0.s8 %v1067
    %v1069 = vlaneseq
    %v1070 = vshrl.u32 %v1069, 7
    %v1071 = vsub.s32 %v1068, %v1070
    %v1072 = vrot.slane %v1064, %v1071
    %v1073 = vcombine.high %v1072, %v1072
    %v1075 = vunpack.c.l.s4 1966171168
    %v1076 = vunpack.c.0.s8 %v1075
    %v1077 = vlaneseq
    %v1078 = vshrl.u32 %v1077, 7
    %v1079 = vsub.s32 %v1076, %v1078
    %v1080 = vrot.slane %v1072, %v1079
    %v1082 = vunpack.c.l.s4 1966171168
    %v1083 = vunpack.c.0.s8 %v1082
    %v1084 = vlaneseq
    %v1085 = vshrl.u32 %v1084, 7
    %v1086 = vsub.s32 %v1083, %v1085
    %v1087 = vrot.slane %v1073, %v1086
    %v1088 = vcombine.high %v1080, %v1080
    %v1089 = vcombine.high %v1087, %v1087
    %v1091 = vpack.i.b16 %v1080, %v1080
    %v1093 = vlaneseq
    %v1094 = vshrl.u32 %v1093, 7
    %v1095 = vsub.s32 0, %v1094
    %v1096 = vrot.slane %v1091, %v1095
    %v1098 = vpack.i.b16 %v1087, %v1087
    %v1100 = vlaneseq
    %v1101 = vshrl.u32 %v1100, 7
    %v1102 = vsub.s32 0, %v1101
    %v1103 = vrot.slane %v1098, %v1102
    %v1105 = vpack.i.b16 %v1088, %v1088
    %v1107 = vlaneseq
    %v1108 = vshrl.u32 %v1107, 7
    %v1109 = vsub.s32 0, %v1108
    %v1110 = vrot.slane %v1105, %v1109
    %v1112 = vpack.i.b16 %v1089, %v1089
    %v1114 = vlaneseq
    %v1115 = vshrl.u32 %v1114, 7
    %v1116 = vsub.s32 0, %v1115
    %v1117 = vrot.slane %v1112, %v1116
    %v1118 = vadd.bf16 %v1060, %v1096
    %v1119 = vadd.bf16 %v1061, %v1103
    %v1120 = vadd.bf16 %v1062, %v1110
    %v1121 = vadd.bf16 %v1063, %v1117
    %v1122 = vmax.bf16 %v1118, 0
    %v1123 = vmax.bf16 %v1119, 0
    %v1124 = vmax.bf16 %v1120, 0
    %v1125 = vmax.bf16 %v1121, 0
    %v1126 = vld [vmem:[#allocation7] sm:$0xff]
    %v1127 = vld [vmem:[#allocation7 + $0x8] sm:$0xff]
    %v1128 = vld [vmem:[#allocation7 + $0x10] sm:$0xff]
    %v1129 = vld [vmem:[#allocation7 + $0x18] sm:$0xff]
    %v1130 = vld [vmem:[#allocation7 + $0x20] sm:$0xff]
    %v1131 = vld [vmem:[#allocation7 + $0x28] sm:$0xff]
    %v1132 = vld [vmem:[#allocation7 + $0x30] sm:$0xff]
    %v1133 = vld [vmem:[#allocation7 + $0x38] sm:$0xff]
    %v1134 = vld [vmem:[#allocation7 + $0x40] sm:$0xff]
    %v1135 = vld [vmem:[#allocation7 + $0x48] sm:$0xff]
    %v1136 = vld [vmem:[#allocation7 + $0x50] sm:$0xff]
    %v1137 = vld [vmem:[#allocation7 + $0x58] sm:$0xff]
    %v1138 = vld [vmem:[#allocation7 + $0x60] sm:$0xff]
    %v1139 = vld [vmem:[#allocation7 + $0x68] sm:$0xff]
    %v1140 = vld [vmem:[#allocation7 + $0x70] sm:$0xff]
    %v1141 = vld [vmem:[#allocation7 + $0x78] sm:$0xff]
    %v1142 = vld [vmem:[#allocation7 + $0x80] sm:$0xff]
    %v1143 = vld [vmem:[#allocation7 + $0x88] sm:$0xff]
    %v1144 = vld [vmem:[#allocation7 + $0x90] sm:$0xff]
    %v1145 = vld [vmem:[#allocation7 + $0x98] sm:$0xff]
    %v1146 = vld [vmem:[#allocation7 + $0xa0] sm:$0xff]
    %v1147 = vld [vmem:[#allocation7 + $0xa8] sm:$0xff]
    %v1148 = vld [vmem:[#allocation7 + $0xb0] sm:$0xff]
    %v1149 = vld [vmem:[#allocation7 + $0xb8] sm:$0xff]
    %v1150 = vld [vmem:[#allocation7 + $0xc0] sm:$0xff]
    %v1151 = vld [vmem:[#allocation7 + $0xc8] sm:$0xff]
    %v1152 = vld [vmem:[#allocation7 + $0xd0] sm:$0xff]
    %v1153 = vld [vmem:[#allocation7 + $0xd8] sm:$0xff]
    %v1154 = vld [vmem:[#allocation7 + $0xe0] sm:$0xff]
    %v1155 = vld [vmem:[#allocation7 + $0xe8] sm:$0xff]
    %v1156 = vld [vmem:[#allocation7 + $0xf0] sm:$0xff]
    %v1157 = vld [vmem:[#allocation7 + $0xf8] sm:$0xff]
    %v1158 = vld [vmem:[#allocation7 + $0x100] sm:$0xff]
    %v1159 = vld [vmem:[#allocation7 + $0x108] sm:$0xff]
    %v1160 = vld [vmem:[#allocation7 + $0x110] sm:$0xff]
    %v1161 = vld [vmem:[#allocation7 + $0x118] sm:$0xff]
    %v1162 = vld [vmem:[#allocation7 + $0x120] sm:$0xff]
    %v1163 = vld [vmem:[#allocation7 + $0x128] sm:$0xff]
    %v1164 = vld [vmem:[#allocation7 + $0x130] sm:$0xff]
    %v1165 = vld [vmem:[#allocation7 + $0x138] sm:$0xff]
    %v1166 = vld [vmem:[#allocation7 + $0x140] sm:$0xff]
    %v1167 = vld [vmem:[#allocation7 + $0x148] sm:$0xff]
    %v1168 = vld [vmem:[#allocation7 + $0x150] sm:$0xff]
    %v1169 = vld [vmem:[#allocation7 + $0x158] sm:$0xff]
    %v1170 = vld [vmem:[#allocation7 + $0x160] sm:$0xff]
    %v1171 = vld [vmem:[#allocation7 + $0x168] sm:$0xff]
    %v1172 = vld [vmem:[#allocation7 + $0x170] sm:$0xff]
    %v1173 = vld [vmem:[#allocation7 + $0x178] sm:$0xff]
    %v1174 = vld [vmem:[#allocation7 + $0x180] sm:$0xff]
    %v1175 = vld [vmem:[#allocation7 + $0x188] sm:$0xff]
    %v1176 = vld [vmem:[#allocation7 + $0x190] sm:$0xff]
    %v1177 = vld [vmem:[#allocation7 + $0x198] sm:$0xff]
    %v1178 = vld [vmem:[#allocation7 + $0x1a0] sm:$0xff]
    %v1179 = vld [vmem:[#allocation7 + $0x1a8] sm:$0xff]
    %v1180 = vld [vmem:[#allocation7 + $0x1b0] sm:$0xff]
    %v1181 = vld [vmem:[#allocation7 + $0x1b8] sm:$0xff]
    %v1182 = vld [vmem:[#allocation7 + $0x1c0] sm:$0xff]
    %v1183 = vld [vmem:[#allocation7 + $0x1c8] sm:$0xff]
    %v1184 = vld [vmem:[#allocation7 + $0x1d0] sm:$0xff]
    %v1185 = vld [vmem:[#allocation7 + $0x1d8] sm:$0xff]
    %v1186 = vld [vmem:[#allocation7 + $0x1e0] sm:$0xff]
    %v1187 = vld [vmem:[#allocation7 + $0x1e8] sm:$0xff]
    %v1188 = vld [vmem:[#allocation7 + $0x1f0] sm:$0xff]
    %v1189 = vld [vmem:[#allocation7 + $0x1f8] sm:$0xff]
    %v1254 = vunpack.c.l.b16 %v1126
    %v1255 = vunpack.c.h.b16 %v1126
    %v1256 = vunpack.c.l.b16 %v1127
    %v1257 = vunpack.c.h.b16 %v1127
    %v1258 = vunpack.c.l.b16 %v1128
    %v1259 = vunpack.c.h.b16 %v1128
    %v1260 = vunpack.c.l.b16 %v1129
    %v1261 = vunpack.c.h.b16 %v1129
    %v1262 = vunpack.c.l.b16 %v1130
    %v1263 = vunpack.c.h.b16 %v1130
    %v1264 = vunpack.c.l.b16 %v1131
    %v1265 = vunpack.c.h.b16 %v1131
    %v1266 = vunpack.c.l.b16 %v1132
    %v1267 = vunpack.c.h.b16 %v1132
    %v1268 = vunpack.c.l.b16 %v1133
    %v1269 = vunpack.c.h.b16 %v1133
    %v1270 = vunpack.c.l.b16 %v1134
    %v1271 = vunpack.c.h.b16 %v1134
    %v1272 = vunpack.c.l.b16 %v1135
    %v1273 = vunpack.c.h.b16 %v1135
    %v1274 = vunpack.c.l.b16 %v1136
    %v1275 = vunpack.c.h.b16 %v1136
    %v1276 = vunpack.c.l.b16 %v1137
    %v1277 = vunpack.c.h.b16 %v1137
    %v1278 = vunpack.c.l.b16 %v1138
    %v1279 = vunpack.c.h.b16 %v1138
    %v1280 = vunpack.c.l.b16 %v1139
    %v1281 = vunpack.c.h.b16 %v1139
    %v1282 = vunpack.c.l.b16 %v1140
    %v1283 = vunpack.c.h.b16 %v1140
    %v1284 = vunpack.c.l.b16 %v1141
    %v1285 = vunpack.c.h.b16 %v1141
    %v1286 = vunpack.c.l.b16 %v1142
    %v1287 = vunpack.c.h.b16 %v1142
    %v1288 = vunpack.c.l.b16 %v1143
    %v1289 = vunpack.c.h.b16 %v1143
    %v1290 = vunpack.c.l.b16 %v1144
    %v1291 = vunpack.c.h.b16 %v1144
    %v1292 = vunpack.c.l.b16 %v1145
    %v1293 = vunpack.c.h.b16 %v1145
    %v1294 = vunpack.c.l.b16 %v1146
    %v1295 = vunpack.c.h.b16 %v1146
    %v1296 = vunpack.c.l.b16 %v1147
    %v1297 = vunpack.c.h.b16 %v1147
    %v1298 = vunpack.c.l.b16 %v1148
    %v1299 = vunpack.c.h.b16 %v1148
    %v1300 = vunpack.c.l.b16 %v1149
    %v1301 = vunpack.c.h.b16 %v1149
    %v1302 = vunpack.c.l.b16 %v1150
    %v1303 = vunpack.c.h.b16 %v1150
    %v1304 = vunpack.c.l.b16 %v1151
    %v1305 = vunpack.c.h.b16 %v1151
    %v1306 = vunpack.c.l.b16 %v1152
    %v1307 = vunpack.c.h.b16 %v1152
    %v1308 = vunpack.c.l.b16 %v1153
    %v1309 = vunpack.c.h.b16 %v1153
    %v1310 = vunpack.c.l.b16 %v1154
    %v1311 = vunpack.c.h.b16 %v1154
    %v1312 = vunpack.c.l.b16 %v1155
    %v1313 = vunpack.c.h.b16 %v1155
    %v1314 = vunpack.c.l.b16 %v1156
    %v1315 = vunpack.c.h.b16 %v1156
    %v1316 = vunpack.c.l.b16 %v1157
    %v1317 = vunpack.c.h.b16 %v1157
    %v1318 = vunpack.c.l.b16 %v1158
    %v1319 = vunpack.c.h.b16 %v1158
    %v1320 = vunpack.c.l.b16 %v1159
    %v1321 = vunpack.c.h.b16 %v1159
    %v1322 = vunpack.c.l.b16 %v1160
    %v1323 = vunpack.c.h.b16 %v1160
    %v1324 = vunpack.c.l.b16 %v1161
    %v1325 = vunpack.c.h.b16 %v1161
    %v1326 = vunpack.c.l.b16 %v1162
    %v1327 = vunpack.c.h.b16 %v1162
    %v1328 = vunpack.c.l.b16 %v1163
    %v1329 = vunpack.c.h.b16 %v1163
    %v1330 = vunpack.c.l.b16 %v1164
    %v1331 = vunpack.c.h.b16 %v1164
    %v1332 = vunpack.c.l.b16 %v1165
    %v1333 = vunpack.c.h.b16 %v1165
    %v1334 = vunpack.c.l.b16 %v1166
    %v1335 = vunpack.c.h.b16 %v1166
    %v1336 = vunpack.c.l.b16 %v1167
    %v1337 = vunpack.c.h.b16 %v1167
    %v1338 = vunpack.c.l.b16 %v1168
    %v1339 = vunpack.c.h.b16 %v1168
    %v1340 = vunpack.c.l.b16 %v1169
    %v1341 = vunpack.c.h.b16 %v1169
    %v1342 = vunpack.c.l.b16 %v1170
    %v1343 = vunpack.c.h.b16 %v1170
    %v1344 = vunpack.c.l.b16 %v1171
    %v1345 = vunpack.c.h.b16 %v1171
    %v1346 = vunpack.c.l.b16 %v1172
    %v1347 = vunpack.c.h.b16 %v1172
    %v1348 = vunpack.c.l.b16 %v1173
    %v1349 = vunpack.c.h.b16 %v1173
    %v1350 = vunpack.c.l.b16 %v1174
    %v1351 = vunpack.c.h.b16 %v1174
    %v1352 = vunpack.c.l.b16 %v1175
    %v1353 = vunpack.c.h.b16 %v1175
    %v1354 = vunpack.c.l.b16 %v1176
    %v1355 = vunpack.c.h.b16 %v1176
    %v1356 = vunpack.c.l.b16 %v1177
    %v1357 = vunpack.c.h.b16 %v1177
    %v1358 = vunpack.c.l.b16 %v1178
    %v1359 = vunpack.c.h.b16 %v1178
    %v1360 = vunpack.c.l.b16 %v1179
    %v1361 = vunpack.c.h.b16 %v1179
    %v1362 = vunpack.c.l.b16 %v1180
    %v1363 = vunpack.c.h.b16 %v1180
    %v1364 = vunpack.c.l.b16 %v1181
    %v1365 = vunpack.c.h.b16 %v1181
    %v1366 = vunpack.c.l.b16 %v1182
    %v1367 = vunpack.c.h.b16 %v1182
    %v1368 = vunpack.c.l.b16 %v1183
    %v1369 = vunpack.c.h.b16 %v1183
    %v1370 = vunpack.c.l.b16 %v1184
    %v1371 = vunpack.c.h.b16 %v1184
    %v1372 = vunpack.c.l.b16 %v1185
    %v1373 = vunpack.c.h.b16 %v1185
    %v1374 = vunpack.c.l.b16 %v1186
    %v1375 = vunpack.c.h.b16 %v1186
    %v1376 = vunpack.c.l.b16 %v1187
    %v1377 = vunpack.c.h.b16 %v1187
    %v1378 = vunpack.c.l.b16 %v1188
    %v1379 = vunpack.c.h.b16 %v1188
    %v1380 = vunpack.c.l.b16 %v1189
    %v1381 = vunpack.c.h.b16 %v1189
    %v1382 = vpack.c.b16 %v1256, %v1254
    %v1383 = vpack.c.b16 %v1257, %v1255
    %v1384 = vpack.c.b16 %v1260, %v1258
    %v1385 = vpack.c.b16 %v1261, %v1259
    %v1386 = vpack.c.b16 %v1264, %v1262
    %v1387 = vpack.c.b16 %v1265, %v1263
    %v1388 = vpack.c.b16 %v1268, %v1266
    %v1389 = vpack.c.b16 %v1269, %v1267
    %v1390 = vpack.c.b16 %v1272, %v1270
    %v1391 = vpack.c.b16 %v1273, %v1271
    %v1392 = vpack.c.b16 %v1276, %v1274
    %v1393 = vpack.c.b16 %v1277, %v1275
    %v1394 = vpack.c.b16 %v1280, %v1278
    %v1395 = vpack.c.b16 %v1281, %v1279
    %v1396 = vpack.c.b16 %v1284, %v1282
    %v1397 = vpack.c.b16 %v1285, %v1283
    %v1398 = vpack.c.b16 %v1288, %v1286
    %v1399 = vpack.c.b16 %v1289, %v1287
    %v1400 = vpack.c.b16 %v1292, %v1290
    %v1401 = vpack.c.b16 %v1293, %v1291
    %v1402 = vpack.c.b16 %v1296, %v1294
    %v1403 = vpack.c.b16 %v1297, %v1295
    %v1404 = vpack.c.b16 %v1300, %v1298
    %v1405 = vpack.c.b16 %v1301, %v1299
    %v1406 = vpack.c.b16 %v1304, %v1302
    %v1407 = vpack.c.b16 %v1305, %v1303
    %v1408 = vpack.c.b16 %v1308, %v1306
    %v1409 = vpack.c.b16 %v1309, %v1307
    %v1410 = vpack.c.b16 %v1312, %v1310
    %v1411 = vpack.c.b16 %v1313, %v1311
    %v1412 = vpack.c.b16 %v1316, %v1314
    %v1413 = vpack.c.b16 %v1317, %v1315
    %v1414 = vpack.c.b16 %v1320, %v1318
    %v1415 = vpack.c.b16 %v1321, %v1319
    %v1416 = vpack.c.b16 %v1324, %v1322
    %v1417 = vpack.c.b16 %v1325, %v1323
    %v1418 = vpack.c.b16 %v1328, %v1326
    %v1419 = vpack.c.b16 %v1329, %v1327
    %v1420 = vpack.c.b16 %v1332, %v1330
    %v1421 = vpack.c.b16 %v1333, %v1331
    %v1422 = vpack.c.b16 %v1336, %v1334
    %v1423 = vpack.c.b16 %v1337, %v1335
    %v1424 = vpack.c.b16 %v1340, %v1338
    %v1425 = vpack.c.b16 %v1341, %v1339
    %v1426 = vpack.c.b16 %v1344, %v1342
    %v1427 = vpack.c.b16 %v1345, %v1343
    %v1428 = vpack.c.b16 %v1348, %v1346
    %v1429 = vpack.c.b16 %v1349, %v1347
    %v1430 = vpack.c.b16 %v1352, %v1350
    %v1431 = vpack.c.b16 %v1353, %v1351
    %v1432 = vpack.c.b16 %v1356, %v1354
    %v1433 = vpack.c.b16 %v1357, %v1355
    %v1434 = vpack.c.b16 %v1360, %v1358
    %v1435 = vpack.c.b16 %v1361, %v1359
    %v1436 = vpack.c.b16 %v1364, %v1362
    %v1437 = vpack.c.b16 %v1365, %v1363
    %v1438 = vpack.c.b16 %v1368, %v1366
    %v1439 = vpack.c.b16 %v1369, %v1367
    %v1440 = vpack.c.b16 %v1372, %v1370
    %v1441 = vpack.c.b16 %v1373, %v1371
    %v1442 = vpack.c.b16 %v1376, %v1374
    %v1443 = vpack.c.b16 %v1377, %v1375
    %v1444 = vpack.c.b16 %v1380, %v1378
    %v1445 = vpack.c.b16 %v1381, %v1379
    %1510 = vmatprep.subr.bf16.mxu0 %v1383
    %1511 = vmatpush1.bf16.msra.mxu0 %v1382
    %1512 = vmatprep.subr.bf16.mxu0 %v1385
    %1513 = vmatpush1.bf16.msra.mxu0 %v1384
    %1514 = vmatprep.subr.bf16.mxu0 %v1387
    %1515 = vmatpush1.bf16.msra.mxu0 %v1386
    %1516 = vmatprep.subr.bf16.mxu0 %v1389
    %1517 = vmatpush1.bf16.msra.mxu0 %v1388
    %1518 = vmatprep.subr.bf16.mxu0 %v1391
    %1519 = vmatpush1.bf16.msra.mxu0 %v1390
    %1520 = vmatprep.subr.bf16.mxu0 %v1393
    %1521 = vmatpush1.bf16.msra.mxu0 %v1392
    %1522 = vmatprep.subr.bf16.mxu0 %v1395
    %1523 = vmatpush1.bf16.msra.mxu0 %v1394
    %1524 = vmatprep.subr.bf16.mxu0 %v1397
    %1525 = vmatpush1.bf16.msra.mxu0 %v1396
    %1526 = vmatprep.subr.bf16.mxu0 %v1399
    %1527 = vmatpush1.bf16.msra.mxu0 %v1398
    %1528 = vmatprep.subr.bf16.mxu0 %v1401
    %1529 = vmatpush1.bf16.msra.mxu0 %v1400
    %1530 = vmatprep.subr.bf16.mxu0 %v1403
    %1531 = vmatpush1.bf16.msra.mxu0 %v1402
    %1532 = vmatprep.subr.bf16.mxu0 %v1405
    %1533 = vmatpush1.bf16.msra.mxu0 %v1404
    %1534 = vmatprep.subr.bf16.mxu0 %v1407
    %1535 = vmatpush1.bf16.msra.mxu0 %v1406
    %1536 = vmatprep.subr.bf16.mxu0 %v1409
    %1537 = vmatpush1.bf16.msra.mxu0 %v1408
    %1538 = vmatprep.subr.bf16.mxu0 %v1411
    %1539 = vmatpush1.bf16.msra.mxu0 %v1410
    %1540 = vmatprep.subr.bf16.mxu0 %v1413
    %1541 = vmatpush1.bf16.msra.mxu0 %v1412
    %1542 = vmatprep.mubr.bf16.mxu0 %v1123
    %1543 = vmatmul.mubr.bf16.gmra.mrb[0].mxu0 %v1122
    %v1544 = vpop.f32.mrb[0].mxu0
    %v1545 = vadd.f32 0.0, %v1544
    %v1546 = vpop.f32.mrb[0].mxu0
    %v1547 = vadd.f32 0.0, %v1546
    %v1548 = vpop.f32.mrb[0].mxu0
    %v1549 = vpop.f32.mrb[0].mxu0
    %1550 = vdwg.mxu0
    %1551 = vmatprep.subr.bf16.mxu0 %v1415
    %1552 = vmatpush1.bf16.msra.mxu0 %v1414
    %1553 = vmatprep.subr.bf16.mxu0 %v1417
    %1554 = vmatpush1.bf16.msra.mxu0 %v1416
    %1555 = vmatprep.subr.bf16.mxu0 %v1419
    %1556 = vmatpush1.bf16.msra.mxu0 %v1418
    %1557 = vmatprep.subr.bf16.mxu0 %v1421
    %1558 = vmatpush1.bf16.msra.mxu0 %v1420
    %1559 = vmatprep.subr.bf16.mxu0 %v1423
    %1560 = vmatpush1.bf16.msra.mxu0 %v1422
    %1561 = vmatprep.subr.bf16.mxu0 %v1425
    %1562 = vmatpush1.bf16.msra.mxu0 %v1424
    %1563 = vmatprep.subr.bf16.mxu0 %v1427
    %1564 = vmatpush1.bf16.msra.mxu0 %v1426
    %1565 = vmatprep.subr.bf16.mxu0 %v1429
    %1566 = vmatpush1.bf16.msra.mxu0 %v1428
    %1567 = vmatprep.subr.bf16.mxu0 %v1431
    %1568 = vmatpush1.bf16.msra.mxu0 %v1430
    %1569 = vmatprep.subr.bf16.mxu0 %v1433
    %1570 = vmatpush1.bf16.msra.mxu0 %v1432
    %1571 = vmatprep.subr.bf16.mxu0 %v1435
    %1572 = vmatpush1.bf16.msra.mxu0 %v1434
    %1573 = vmatprep.subr.bf16.mxu0 %v1437
    %1574 = vmatpush1.bf16.msra.mxu0 %v1436
    %1575 = vmatprep.subr.bf16.mxu0 %v1439
    %1576 = vmatpush1.bf16.msra.mxu0 %v1438
    %1577 = vmatprep.subr.bf16.mxu0 %v1441
    %1578 = vmatpush1.bf16.msra.mxu0 %v1440
    %1579 = vmatprep.subr.bf16.mxu0 %v1443
    %1580 = vmatpush1.bf16.msra.mxu0 %v1442
    %1581 = vmatprep.subr.bf16.mxu0 %v1445
    %1582 = vmatpush1.bf16.msra.mxu0 %v1444
    %1583 = vmatprep.mubr.bf16.mxu0 %v1125
    %1584 = vmatmul.mubr.bf16.gmra.mrb[0].mxu0 %v1124
    %v1585 = vpop.f32.mrb[0].mxu0
    %v1586 = vadd.f32 %v1545, %v1585
    %v1587 = vpop.f32.mrb[0].mxu0
    %v1588 = vadd.f32 %v1547, %v1587
    %v1589 = vpop.f32.mrb[0].mxu0
    %v1590 = vpop.f32.mrb[0].mxu0
    %1591 = vdwg.mxu0
    %v1592 = vpack.c.bf16 %v1586, %v1586
    %v1593 = vpack.c.bf16 %v1588, %v1588
    %v1594 = vld [vmem:[%s4] sm:$0x3]
    %v1597 = vunpack.c.l.s4 1966171168
    %v1598 = vunpack.c.0.s8 %v1597
    %v1599 = vlaneseq
    %v1600 = vshrl.u32 %v1599, 7
    %v1601 = vsub.s32 %v1598, %v1600
    %v1602 = vrot.slane %v1594, %v1601
    %v1603 = vcombine.high %v1602, %v1602
    %v1605 = vunpack.c.l.s4 1966171168
    %v1606 = vunpack.c.0.s8 %v1605
    %v1607 = vlaneseq
    %v1608 = vshrl.u32 %v1607, 7
    %v1609 = vsub.s32 %v1606, %v1608
    %v1610 = vrot.slane %v1602, %v1609
    %v1612 = vunpack.c.l.s4 1966171168
    %v1613 = vunpack.c.0.s8 %v1612
    %v1614 = vlaneseq
    %v1615 = vshrl.u32 %v1614, 7
    %v1616 = vsub.s32 %v1613, %v1615
    %v1617 = vrot.slane %v1603, %v1616
    %v1619 = vpack.i.b16 %v1610, %v1610
    %v1621 = vlaneseq
    %v1622 = vshrl.u32 %v1621, 7
    %v1623 = vsub.s32 0, %v1622
    %v1624 = vrot.slane %v1619, %v1623
    %v1626 = vpack.i.b16 %v1617, %v1617
    %v1628 = vlaneseq
    %v1629 = vshrl.u32 %v1628, 7
    %v1630 = vsub.s32 0, %v1629
    %v1631 = vrot.slane %v1626, %v1630
    %v1632 = vadd.bf16 %v1592, %v1624
    %v1633 = vadd.bf16 %v1593, %v1631
    %v1634 = vmax.bf16 %v1632, 0
    %v1635 = vmax.bf16 %v1633, 0
    %v1636 = vld [vmem:[#allocation8] sm:$0xff]
    %v1637 = vld [vmem:[#allocation8 + $0x8] sm:$0xff]
    %v1638 = vld [vmem:[#allocation8 + $0x10] sm:$0xff]
    %v1639 = vld [vmem:[#allocation8 + $0x18] sm:$0xff]
    %v1640 = vld [vmem:[#allocation8 + $0x20] sm:$0xff]
    %v1641 = vld [vmem:[#allocation8 + $0x28] sm:$0xff]
    %v1642 = vld [vmem:[#allocation8 + $0x30] sm:$0xff]
    %v1643 = vld [vmem:[#allocation8 + $0x38] sm:$0xff]
    %v1644 = vld [vmem:[#allocation8 + $0x40] sm:$0xff]
    %v1645 = vld [vmem:[#allocation8 + $0x48] sm:$0xff]
    %v1646 = vld [vmem:[#allocation8 + $0x50] sm:$0xff]
    %v1647 = vld [vmem:[#allocation8 + $0x58] sm:$0xff]
    %v1648 = vld [vmem:[#allocation8 + $0x60] sm:$0xff]
    %v1649 = vld [vmem:[#allocation8 + $0x68] sm:$0xff]
    %v1650 = vld [vmem:[#allocation8 + $0x70] sm:$0xff]
    %v1651 = vld [vmem:[#allocation8 + $0x78] sm:$0xff]
    %v1652 = vld [vmem:[#allocation8 + $0x80] sm:$0xff]
    %v1653 = vld [vmem:[#allocation8 + $0x88] sm:$0xff]
    %v1654 = vld [vmem:[#allocation8 + $0x90] sm:$0xff]
    %v1655 = vld [vmem:[#allocation8 + $0x98] sm:$0xff]
    %v1656 = vld [vmem:[#allocation8 + $0xa0] sm:$0xff]
    %v1657 = vld [vmem:[#allocation8 + $0xa8] sm:$0xff]
    %v1658 = vld [vmem:[#allocation8 + $0xb0] sm:$0xff]
    %v1659 = vld [vmem:[#allocation8 + $0xb8] sm:$0xff]
    %v1660 = vld [vmem:[#allocation8 + $0xc0] sm:$0xff]
    %v1661 = vld [vmem:[#allocation8 + $0xc8] sm:$0xff]
    %v1662 = vld [vmem:[#allocation8 + $0xd0] sm:$0xff]
    %v1663 = vld [vmem:[#allocation8 + $0xd8] sm:$0xff]
    %v1664 = vld [vmem:[#allocation8 + $0xe0] sm:$0xff]
    %v1665 = vld [vmem:[#allocation8 + $0xe8] sm:$0xff]
    %v1666 = vld [vmem:[#allocation8 + $0xf0] sm:$0xff]
    %v1667 = vld [vmem:[#allocation8 + $0xf8] sm:$0xff]
    %v1700 = vunpack.c.l.b16 %v1636
    %v1701 = vunpack.c.h.b16 %v1636
    %v1702 = vunpack.c.l.b16 %v1637
    %v1703 = vunpack.c.h.b16 %v1637
    %v1704 = vunpack.c.l.b16 %v1638
    %v1705 = vunpack.c.h.b16 %v1638
    %v1706 = vunpack.c.l.b16 %v1639
    %v1707 = vunpack.c.h.b16 %v1639
    %v1708 = vunpack.c.l.b16 %v1640
    %v1709 = vunpack.c.h.b16 %v1640
    %v1710 = vunpack.c.l.b16 %v1641
    %v1711 = vunpack.c.h.b16 %v1641
    %v1712 = vunpack.c.l.b16 %v1642
    %v1713 = vunpack.c.h.b16 %v1642
    %v1714 = vunpack.c.l.b16 %v1643
    %v1715 = vunpack.c.h.b16 %v1643
    %v1716 = vunpack.c.l.b16 %v1644
    %v1717 = vunpack.c.h.b16 %v1644
    %v1718 = vunpack.c.l.b16 %v1645
    %v1719 = vunpack.c.h.b16 %v1645
    %v1720 = vunpack.c.l.b16 %v1646
    %v1721 = vunpack.c.h.b16 %v1646
    %v1722 = vunpack.c.l.b16 %v1647
    %v1723 = vunpack.c.h.b16 %v1647
    %v1724 = vunpack.c.l.b16 %v1648
    %v1725 = vunpack.c.h.b16 %v1648
    %v1726 = vunpack.c.l.b16 %v1649
    %v1727 = vunpack.c.h.b16 %v1649
    %v1728 = vunpack.c.l.b16 %v1650
    %v1729 = vunpack.c.h.b16 %v1650
    %v1730 = vunpack.c.l.b16 %v1651
    %v1731 = vunpack.c.h.b16 %v1651
    %v1732 = vunpack.c.l.b16 %v1652
    %v1733 = vunpack.c.h.b16 %v1652
    %v1734 = vunpack.c.l.b16 %v1653
    %v1735 = vunpack.c.h.b16 %v1653
    %v1736 = vunpack.c.l.b16 %v1654
    %v1737 = vunpack.c.h.b16 %v1654
    %v1738 = vunpack.c.l.b16 %v1655
    %v1739 = vunpack.c.h.b16 %v1655
    %v1740 = vunpack.c.l.b16 %v1656
    %v1741 = vunpack.c.h.b16 %v1656
    %v1742 = vunpack.c.l.b16 %v1657
    %v1743 = vunpack.c.h.b16 %v1657
    %v1744 = vunpack.c.l.b16 %v1658
    %v1745 = vunpack.c.h.b16 %v1658
    %v1746 = vunpack.c.l.b16 %v1659
    %v1747 = vunpack.c.h.b16 %v1659
    %v1748 = vunpack.c.l.b16 %v1660
    %v1749 = vunpack.c.h.b16 %v1660
    %v1750 = vunpack.c.l.b16 %v1661
    %v1751 = vunpack.c.h.b16 %v1661
    %v1752 = vunpack.c.l.b16 %v1662
    %v1753 = vunpack.c.h.b16 %v1662
    %v1754 = vunpack.c.l.b16 %v1663
    %v1755 = vunpack.c.h.b16 %v1663
    %v1756 = vunpack.c.l.b16 %v1664
    %v1757 = vunpack.c.h.b16 %v1664
    %v1758 = vunpack.c.l.b16 %v1665
    %v1759 = vunpack.c.h.b16 %v1665
    %v1760 = vunpack.c.l.b16 %v1666
    %v1761 = vunpack.c.h.b16 %v1666
    %v1762 = vunpack.c.l.b16 %v1667
    %v1763 = vunpack.c.h.b16 %v1667
    %v1764 = vpack.c.b16 %v1702, %v1700
    %v1765 = vpack.c.b16 %v1703, %v1701
    %v1766 = vpack.c.b16 %v1706, %v1704
    %v1767 = vpack.c.b16 %v1707, %v1705
    %v1768 = vpack.c.b16 %v1710, %v1708
    %v1769 = vpack.c.b16 %v1711, %v1709
    %v1770 = vpack.c.b16 %v1714, %v1712
    %v1771 = vpack.c.b16 %v1715, %v1713
    %v1772 = vpack.c.b16 %v1718, %v1716
    %v1773 = vpack.c.b16 %v1719, %v1717
    %v1774 = vpack.c.b16 %v1722, %v1720
    %v1775 = vpack.c.b16 %v1723, %v1721
    %v1776 = vpack.c.b16 %v1726, %v1724
    %v1777 = vpack.c.b16 %v1727, %v1725
    %v1778 = vpack.c.b16 %v1730, %v1728
    %v1779 = vpack.c.b16 %v1731, %v1729
    %v1780 = vpack.c.b16 %v1734, %v1732
    %v1781 = vpack.c.b16 %v1735, %v1733
    %v1782 = vpack.c.b16 %v1738, %v1736
    %v1783 = vpack.c.b16 %v1739, %v1737
    %v1784 = vpack.c.b16 %v1742, %v1740
    %v1785 = vpack.c.b16 %v1743, %v1741
    %v1786 = vpack.c.b16 %v1746, %v1744
    %v1787 = vpack.c.b16 %v1747, %v1745
    %v1788 = vpack.c.b16 %v1750, %v1748
    %v1789 = vpack.c.b16 %v1751, %v1749
    %v1790 = vpack.c.b16 %v1754, %v1752
    %v1791 = vpack.c.b16 %v1755, %v1753
    %v1792 = vpack.c.b16 %v1758, %v1756
    %v1793 = vpack.c.b16 %v1759, %v1757
    %v1794 = vpack.c.b16 %v1762, %v1760
    %v1795 = vpack.c.b16 %v1763, %v1761
    %1828 = vmatprep.subr.bf16.mxu0 %v1765
    %1829 = vmatpush1.bf16.msra.mxu0 %v1764
    %1830 = vmatprep.subr.bf16.mxu0 %v1767
    %1831 = vmatpush1.bf16.msra.mxu0 %v1766
    %1832 = vmatprep.subr.bf16.mxu0 %v1769
    %1833 = vmatpush1.bf16.msra.mxu0 %v1768
    %1834 = vmatprep.subr.bf16.mxu0 %v1771
    %1835 = vmatpush1.bf16.msra.mxu0 %v1770
    %1836 = vmatprep.subr.bf16.mxu0 %v1773
    %1837 = vmatpush1.bf16.msra.mxu0 %v1772
    %1838 = vmatprep.subr.bf16.mxu0 %v1775
    %1839 = vmatpush1.bf16.msra.mxu0 %v1774
    %1840 = vmatprep.subr.bf16.mxu0 %v1777
    %1841 = vmatpush1.bf16.msra.mxu0 %v1776
    %1842 = vmatprep.subr.bf16.mxu0 %v1779
    %1843 = vmatpush1.bf16.msra.mxu0 %v1778
    %1844 = vmatprep.subr.bf16.mxu0 %v1781
    %1845 = vmatpush1.bf16.msra.mxu0 %v1780
    %1846 = vmatprep.subr.bf16.mxu0 %v1783
    %1847 = vmatpush1.bf16.msra.mxu0 %v1782
    %1848 = vmatprep.subr.bf16.mxu0 %v1785
    %1849 = vmatpush1.bf16.msra.mxu0 %v1784
    %1850 = vmatprep.subr.bf16.mxu0 %v1787
    %1851 = vmatpush1.bf16.msra.mxu0 %v1786
    %1852 = vmatprep.subr.bf16.mxu0 %v1789
    %1853 = vmatpush1.bf16.msra.mxu0 %v1788
    %1854 = vmatprep.subr.bf16.mxu0 %v1791
    %1855 = vmatpush1.bf16.msra.mxu0 %v1790
    %1856 = vmatprep.subr.bf16.mxu0 %v1793
    %1857 = vmatpush1.bf16.msra.mxu0 %v1792
    %1858 = vmatprep.subr.bf16.mxu0 %v1795
    %1859 = vmatpush1.bf16.msra.mxu0 %v1794
    %1860 = vmatprep.mubr.bf16.mxu0 %v1635
    %1861 = vmatmul.mubr.bf16.gmra.mrb[0].mxu0 %v1634
    %v1862 = vpop.f32.mrb[0].mxu0
    %v1863 = vadd.f32 0.0, %v1862
    %v1864 = vpop.f32.mrb[0].mxu0
    %v1865 = vadd.f32 0.0, %v1864
    %v1866 = vpop.f32.mrb[0].mxu0
    %v1867 = vpop.f32.mrb[0].mxu0
    %1868 = vdwg.mxu0
    %v1869 = vpack.c.bf16 %v1863, %v1863
    %v1870 = vpack.c.bf16 %v1865, %v1865
    %v1871 = vld [vmem:[%s6] sm:$0x3]
    %v1874 = vunpack.c.l.s4 1966171168
    %v1875 = vunpack.c.0.s8 %v1874
    %v1876 = vlaneseq
    %v1877 = vshrl.u32 %v1876, 7
    %v1878 = vsub.s32 %v1875, %v1877
    %v1879 = vrot.slane %v1871, %v1878
    %v1880 = vcombine.high %v1879, %v1879
    %v1882 = vunpack.c.l.s4 1966171168
    %v1883 = vunpack.c.0.s8 %v1882
    %v1884 = vlaneseq
    %v1885 = vshrl.u32 %v1884, 7
    %v1886 = vsub.s32 %v1883, %v1885
    %v1887 = vrot.slane %v1879, %v1886
    %v1889 = vunpack.c.l.s4 1966171168
    %v1890 = vunpack.c.0.s8 %v1889
    %v1891 = vlaneseq
    %v1892 = vshrl.u32 %v1891, 7
    %v1893 = vsub.s32 %v1890, %v1892
    %v1894 = vrot.slane %v1880, %v1893
    %v1896 = vpack.i.b16 %v1887, %v1887
    %v1898 = vlaneseq
    %v1899 = vshrl.u32 %v1898, 7
    %v1900 = vsub.s32 0, %v1899
    %v1901 = vrot.slane %v1896, %v1900
    %v1903 = vpack.i.b16 %v1894, %v1894
    %v1905 = vlaneseq
    %v1906 = vshrl.u32 %v1905, 7
    %v1907 = vsub.s32 0, %v1906
    %v1908 = vrot.slane %v1903, %v1907
    %v1909 = vadd.bf16 %v1869, %v1901
    %v1910 = vadd.bf16 %v1870, %v1908
    %v1911 = vmax.bf16 %v1909, 0
    %v1912 = vmax.bf16 %v1910, 0
    %v1913 = vld [vmem:[#allocation10] sm:$0xf]
    %v1914 = vld [vmem:[#allocation10 + $0x4] sm:$0xf]
    %v1915 = vld [vmem:[#allocation10 + $0x8] sm:$0xf]
    %v1916 = vld [vmem:[#allocation10 + $0xc] sm:$0xf]
    %v1917 = vld [vmem:[#allocation10 + $0x10] sm:$0xf]
    %v1918 = vld [vmem:[#allocation10 + $0x14] sm:$0xf]
    %v1919 = vld [vmem:[#allocation10 + $0x18] sm:$0xf]
    %v1920 = vld [vmem:[#allocation10 + $0x1c] sm:$0xf]
    %v1921 = vld [vmem:[#allocation10 + $0x20] sm:$0xf]
    %v1922 = vld [vmem:[#allocation10 + $0x24] sm:$0xf]
    %v1923 = vld [vmem:[#allocation10 + $0x28] sm:$0xf]
    %v1924 = vld [vmem:[#allocation10 + $0x2c] sm:$0xf]
    %v1925 = vld [vmem:[#allocation10 + $0x30] sm:$0xf]
    %v1926 = vld [vmem:[#allocation10 + $0x34] sm:$0xf]
    %v1927 = vld [vmem:[#allocation10 + $0x38] sm:$0xf]
    %v1928 = vld [vmem:[#allocation10 + $0x3c] sm:$0xf]
    %v1929 = vld [vmem:[#allocation10 + $0x40] sm:$0xf]
    %v1930 = vld [vmem:[#allocation10 + $0x44] sm:$0xf]
    %v1931 = vld [vmem:[#allocation10 + $0x48] sm:$0xf]
    %v1932 = vld [vmem:[#allocation10 + $0x4c] sm:$0xf]
    %v1933 = vld [vmem:[#allocation10 + $0x50] sm:$0xf]
    %v1934 = vld [vmem:[#allocation10 + $0x54] sm:$0xf]
    %v1935 = vld [vmem:[#allocation10 + $0x58] sm:$0xf]
    %v1936 = vld [vmem:[#allocation10 + $0x5c] sm:$0xf]
    %v1937 = vld [vmem:[#allocation10 + $0x60] sm:$0xf]
    %v1938 = vld [vmem:[#allocation10 + $0x64] sm:$0xf]
    %v1939 = vld [vmem:[#allocation10 + $0x68] sm:$0xf]
    %v1940 = vld [vmem:[#allocation10 + $0x6c] sm:$0xf]
    %v1941 = vld [vmem:[#allocation10 + $0x70] sm:$0xf]
    %v1942 = vld [vmem:[#allocation10 + $0x74] sm:$0xf]
    %v1943 = vld [vmem:[#allocation10 + $0x78] sm:$0xf]
    %v1944 = vld [vmem:[#allocation10 + $0x7c] sm:$0xf]
    %v1977 = vunpack.c.l.b16 %v1913
    %v1978 = vunpack.c.l.b16 %v1914
    %v1979 = vunpack.c.l.b16 %v1915
    %v1980 = vunpack.c.l.b16 %v1916
    %v1981 = vunpack.c.l.b16 %v1917
    %v1982 = vunpack.c.l.b16 %v1918
    %v1983 = vunpack.c.l.b16 %v1919
    %v1984 = vunpack.c.l.b16 %v1920
    %v1985 = vunpack.c.l.b16 %v1921
    %v1986 = vunpack.c.l.b16 %v1922
    %v1987 = vunpack.c.l.b16 %v1923
    %v1988 = vunpack.c.l.b16 %v1924
    %v1989 = vunpack.c.l.b16 %v1925
    %v1990 = vunpack.c.l.b16 %v1926
    %v1991 = vunpack.c.l.b16 %v1927
    %v1992 = vunpack.c.l.b16 %v1928
    %v1993 = vunpack.c.l.b16 %v1929
    %v1994 = vunpack.c.l.b16 %v1930
    %v1995 = vunpack.c.l.b16 %v1931
    %v1996 = vunpack.c.l.b16 %v1932
    %v1997 = vunpack.c.l.b16 %v1933
    %v1998 = vunpack.c.l.b16 %v1934
    %v1999 = vunpack.c.l.b16 %v1935
    %v2000 = vunpack.c.l.b16 %v1936
    %v2001 = vunpack.c.l.b16 %v1937
    %v2002 = vunpack.c.l.b16 %v1938
    %v2003 = vunpack.c.l.b16 %v1939
    %v2004 = vunpack.c.l.b16 %v1940
    %v2005 = vunpack.c.l.b16 %v1941
    %v2006 = vunpack.c.l.b16 %v1942
    %v2007 = vunpack.c.l.b16 %v1943
    %v2008 = vunpack.c.l.b16 %v1944
    %v2009 = vpack.c.b16 %v1978, %v1977
    %v2010 = vpack.c.b16 %v1980, %v1979
    %v2011 = vpack.c.b16 %v1982, %v1981
    %v2012 = vpack.c.b16 %v1984, %v1983
    %v2013 = vpack.c.b16 %v1986, %v1985
    %v2014 = vpack.c.b16 %v1988, %v1987
    %v2015 = vpack.c.b16 %v1990, %v1989
    %v2016 = vpack.c.b16 %v1992, %v1991
    %v2017 = vpack.c.b16 %v1994, %v1993
    %v2018 = vpack.c.b16 %v1996, %v1995
    %v2019 = vpack.c.b16 %v1998, %v1997
    %v2020 = vpack.c.b16 %v2000, %v1999
    %v2021 = vpack.c.b16 %v2002, %v2001
    %v2022 = vpack.c.b16 %v2004, %v2003
    %v2023 = vpack.c.b16 %v2006, %v2005
    %v2024 = vpack.c.b16 %v2008, %v2007
    %2041 = vmatprep.subr.bf16.mxu0 0
    %2042 = vmatpush1.bf16.msra.mxu0 %v2009
    %2043 = vmatprep.subr.bf16.mxu0 0
    %2044 = vmatpush1.bf16.msra.mxu0 %v2010
    %2045 = vmatprep.subr.bf16.mxu0 0
    %2046 = vmatpush1.bf16.msra.mxu0 %v2011
    %2047 = vmatprep.subr.bf16.mxu0 0
    %2048 = vmatpush1.bf16.msra.mxu0 %v2012
    %2049 = vmatprep.subr.bf16.mxu0 0
    %2050 = vmatpush1.bf16.msra.mxu0 %v2013
    %2051 = vmatprep.subr.bf16.mxu0 0
    %2052 = vmatpush1.bf16.msra.mxu0 %v2014
    %2053 = vmatprep.subr.bf16.mxu0 0
    %2054 = vmatpush1.bf16.msra.mxu0 %v2015
    %2055 = vmatprep.subr.bf16.mxu0 0
    %2056 = vmatpush1.bf16.msra.mxu0 %v2016
    %2057 = vmatprep.subr.bf16.mxu0 0
    %2058 = vmatpush1.bf16.msra.mxu0 %v2017
    %2059 = vmatprep.subr.bf16.mxu0 0
    %2060 = vmatpush1.bf16.msra.mxu0 %v2018
    %2061 = vmatprep.subr.bf16.mxu0 0
    %2062 = vmatpush1.bf16.msra.mxu0 %v2019
    %2063 = vmatprep.subr.bf16.mxu0 0
    %2064 = vmatpush1.bf16.msra.mxu0 %v2020
    %2065 = vmatprep.subr.bf16.mxu0 0
    %2066 = vmatpush1.bf16.msra.mxu0 %v2021
    %2067 = vmatprep.subr.bf16.mxu0 0
    %2068 = vmatpush1.bf16.msra.mxu0 %v2022
    %2069 = vmatprep.subr.bf16.mxu0 0
    %2070 = vmatpush1.bf16.msra.mxu0 %v2023
    %2071 = vmatprep.subr.bf16.mxu0 0
    %2072 = vmatpush1.bf16.msra.mxu0 %v2024
    %2073 = vmatprep.mubr.bf16.mxu0 %v1912
    %2074 = vmatmul.mubr.bf16.gmra.mrb[0].mxu0 %v1911
    %v2075 = vpop.f32.mrb[0].mxu0
    %v2076 = vadd.f32 0.0, %v2075
    %v2077 = vpop.f32.mrb[0].mxu0
    %v2078 = vpop.f32.mrb[0].mxu0
    %v2079 = vpop.f32.mrb[0].mxu0
    %2080 = vdwg.mxu0
    %v2081 = vpack.c.bf16 %v2076, %v2076
    %v2082 = vld [vmem:[%s8] sm:$0x1]
    %v2084 = vpack.i.b16 %v2082, %v2082
    %v2086 = vlaneseq
    %v2087 = vshrl.u32 %v2086, 7
    %v2088 = vsub.s32 0, %v2087
    %v2089 = vrot.slane %v2084, %v2088
    %v2090 = vadd.bf16 %v2081, %v2089
    %v2091 = vmax.bf16 %v2090, 0
    %v2092 = vld [vmem:[#allocation11] sm:$0xf]
    %v2093 = vld [vmem:[#allocation11 + $0x4] sm:$0xf]
    %v2094 = vld [vmem:[#allocation11 + $0x8] sm:$0xf]
    %v2095 = vld [vmem:[#allocation11 + $0xc] sm:$0xf]
    %v2096 = vld [vmem:[#allocation11 + $0x10] sm:$0xf]
    %v2097 = vld [vmem:[#allocation11 + $0x14] sm:$0xf]
    %v2098 = vld [vmem:[#allocation11 + $0x18] sm:$0xf]
    %v2099 = vld [vmem:[#allocation11 + $0x1c] sm:$0xf]
    %v2100 = vld [vmem:[#allocation11 + $0x20] sm:$0xf]
    %v2101 = vld [vmem:[#allocation11 + $0x24] sm:$0xf]
    %v2102 = vld [vmem:[#allocation11 + $0x28] sm:$0xf]
    %v2103 = vld [vmem:[#allocation11 + $0x2c] sm:$0xf]
    %v2104 = vld [vmem:[#allocation11 + $0x30] sm:$0xf]
    %v2105 = vld [vmem:[#allocation11 + $0x34] sm:$0xf]
    %v2106 = vld [vmem:[#allocation11 + $0x38] sm:$0xf]
    %v2107 = vld [vmem:[#allocation11 + $0x3c] sm:$0xf]
    %v2108 = vld [vmem:[%s10] sm:$0x1]
    %v2110 = vlaneseq
    %v2111 = vshrl.u32 %v2110, 7
    %v2112 = vsub.s32 0, %v2111
    %v2113 = vrot.slane %v2108, %v2112
    %v2131 = vunpack.c.l.b16 %v2092
    %v2132 = vunpack.c.l.b16 %v2093
    %v2133 = vunpack.c.l.b16 %v2094
    %v2134 = vunpack.c.l.b16 %v2095
    %v2135 = vunpack.c.l.b16 %v2096
    %v2136 = vunpack.c.l.b16 %v2097
    %v2137 = vunpack.c.l.b16 %v2098
    %v2138 = vunpack.c.l.b16 %v2099
    %v2139 = vunpack.c.l.b16 %v2100
    %v2140 = vunpack.c.l.b16 %v2101
    %v2141 = vunpack.c.l.b16 %v2102
    %v2142 = vunpack.c.l.b16 %v2103
    %v2143 = vunpack.c.l.b16 %v2104
    %v2144 = vunpack.c.l.b16 %v2105
    %v2145 = vunpack.c.l.b16 %v2106
    %v2146 = vunpack.c.l.b16 %v2107
    %v2147 = vpack.c.b16 %v2132, %v2131
    %v2148 = vpack.c.b16 %v2134, %v2133
    %v2149 = vpack.c.b16 %v2136, %v2135
    %v2150 = vpack.c.b16 %v2138, %v2137
    %v2151 = vpack.c.b16 %v2140, %v2139
    %v2152 = vpack.c.b16 %v2142, %v2141
    %v2153 = vpack.c.b16 %v2144, %v2143
    %v2154 = vpack.c.b16 %v2146, %v2145
    %2163 = vmatprep.subr.bf16.mxu0 0
    %2164 = vmatpush1.bf16.msra.mxu0 %v2147
    %2165 = vmatprep.subr.bf16.mxu0 0
    %2166 = vmatpush1.bf16.msra.mxu0 %v2148
    %2167 = vmatprep.subr.bf16.mxu0 0
    %2168 = vmatpush1.bf16.msra.mxu0 %v2149
    %2169 = vmatprep.subr.bf16.mxu0 0
    %2170 = vmatpush1.bf16.msra.mxu0 %v2150
    %2171 = vmatprep.subr.bf16.mxu0 0
    %2172 = vmatpush1.bf16.msra.mxu0 %v2151
    %2173 = vmatprep.subr.bf16.mxu0 0
    %2174 = vmatpush1.bf16.msra.mxu0 %v2152
    %2175 = vmatprep.subr.bf16.mxu0 0
    %2176 = vmatpush1.bf16.msra.mxu0 %v2153
    %2177 = vmatprep.subr.bf16.mxu0 0
    %2178 = vmatpush1.bf16.msra.mxu0 %v2154
    %2179 = vmatprep.subr.bf16.mxu0 0
    %2180 = vmatpush1.bf16.msra.mxu0 0
    %2181 = vmatprep.subr.bf16.mxu0 0
    %2182 = vmatpush1.bf16.msra.mxu0 0
    %2183 = vmatprep.subr.bf16.mxu0 0
    %2184 = vmatpush1.bf16.msra.mxu0 0
    %2185 = vmatprep.subr.bf16.mxu0 0
    %2186 = vmatpush1.bf16.msra.mxu0 0
    %2187 = vmatprep.subr.bf16.mxu0 0
    %2188 = vmatpush1.bf16.msra.mxu0 0
    %2189 = vmatprep.subr.bf16.mxu0 0
    %2190 = vmatpush1.bf16.msra.mxu0 0
    %2191 = vmatprep.subr.bf16.mxu0 0
    %2192 = vmatpush1.bf16.msra.mxu0 0
    %2193 = vmatprep.subr.bf16.mxu0 0
    %2194 = vmatpush1.bf16.msra.mxu0 0
    %2195 = vmatprep.mubr.bf16.mxu0 0
    %2196 = vmatmul.mubr.bf16.gmra.mrb[0].mxu0 %v2091
    %v2197 = vpop.f32.mrb[0].mxu0
    %v2198 = vadd.f32 %v2113, %v2197
    %v2199 = vpop.f32.mrb[0].mxu0
    %v2200 = vpop.f32.mrb[0].mxu0
    %v2201 = vpop.f32.mrb[0].mxu0
    %2202 = vdwg.mxu0
    %2203 = vst [vmem:[#allocation13] sm:$0xff] %v2198
    // Predicated region
    $region70: #{tpu_custom_call.1} parent=1 // pred_check
      _
    $region71: #{tpu_custom_call.1} parent=1 // pred_check_branch
      %2205 = sbr.rel (0) target = $region73
    $region72: #{tpu_custom_call.1} parent=1 // pred_region
      %s2207 = ssub.s32 128, 128
      %2208 = vsyncadd [#allocation4], %s2207
      %s2210 = sshll.u32 [#allocation13], 4
      %s2211 = int_to_ptr.vmem [resolvable:$true] %s2210
      %2213 = dma.vmem_to_hbm [thread:$0]  %s2211, 128, %s11, [#allocation4]
    $region73: #{tpu_custom_call.1} parent=1 // pred_fallthru
      _
    // Predicated region
    $region74: #{tpu_custom_call.1} parent=1 // pred_check
      _
    $region75: #{tpu_custom_call.1} parent=1 // pred_check_branch
      %2215 = sbr.rel (0) target = $region77
    $region76: #{tpu_custom_call.1} parent=1 // pred_region
      %2216 = dma.done [#allocation4], 128
    $region77: #{tpu_custom_call.1} parent=1 // pred_fallthru
      _
    %2217 = vsyncpa [#allocation3], 1
    %2218 = vsyncpa [#allocation6], 1
    %2219 = vsyncpa [#allocation9], 1
    %2220 = vsyncpa [#allocation12], 1
    %2221 = vsyncpa [#allocation4], 1

// kernel: tpu_custom_call.1
$region0: #{tpu_custom_call.1}
  #allocation0 [shape = 'u32[]', space=smem, size = 0x4, offset = 0x4, fixed_abs, tag = 'smem constant byte address 0x4 - core index']
  #allocation1 [shape = 'u32[144,128]{1,0:T(1,128)}', space=vmem, size = 0x12000, scoped, tag = 'internal scratch']
  %s0 = inlined_call_operand.hbm [shape: f32[8,512], index: 0, kind: input, shape index: {}]
  %s1 = inlined_call_operand.hbm [shape: bf16[512,512], index: 1, kind: input, shape index: {}]
  %s2 = inlined_call_operand.vmem [shape: bf16[1,512], index: 2, kind: input, shape index: {}]
  %s3 = inlined_call_operand.hbm [shape: bf16[512,256], index: 3, kind: input, shape index: {}]
  %s4 = inlined_call_operand.vmem [shape: bf16[1,256], index: 4, kind: input, shape index: {}]
  %s5 = inlined_call_operand.hbm [shape: bf16[256,256], index: 5, kind: input, shape index: {}]
  %s6 = inlined_call_operand.vmem [shape: bf16[1,256], index: 6, kind: input, shape index: {}]
  %s7 = inlined_call_operand.hbm [shape: bf16[256,128], index: 7, kind: input, shape index: {}]
  %s8 = inlined_call_operand.vmem [shape: bf16[1,128], index: 8, kind: input, shape index: {}]
  %s9 = inlined_call_operand.hbm [shape: bf16[128,128], index: 9, kind: input, shape index: {}]
  %s10 = inlined_call_operand.vmem [shape: f32[1,128], index: 10, kind: input, shape index: {}]
  %s11 = inlined_call_operand.hbm [shape: f32[8,128], index: 11, kind: output, shape index: {}]
  %s12 = sld [smem:[#allocation0]]
  $region78: #{tpu_custom_call.1} parent=0
    _
  %s14 = ssub.s32 1, %s12
  %s15 = scalar_select 0, %s14, %s12
  $region1: #{tpu_custom_call.1} parent=0
    #allocation2 [shape = 'u8[16384]{0}', space=vmem, size = 0x4000, scoped, tag = 'input window, operand 0, single buffered']
    #allocation3 [shape = 's32[1]{0}', space=sflag, size = 0x4, scoped, tag = 'scoped memory for tpu_custom_call.1']
    #allocation4 [shape = 's32[1]{0}', space=sflag, size = 0x4, scoped, tag = 'scoped memory for tpu_custom_call.1']
    #allocation5 [shape = 'u8[524288]{0}', space=vmem, size = 0x80000, scoped, tag = 'input window, operand 1, single buffered']
    #allocation6 [shape = 's32[1]{0}', space=sflag, size = 0x4, scoped, tag = 'scoped memory for tpu_custom_call.1']
    #allocation7 [shape = 'u8[262144]{0}', space=vmem, size = 0x40000, scoped, tag = 'input window, operand 3, single buffered']
    #allocation8 [shape = 'u8[131072]{0}', space=vmem, size = 0x20000, scoped, tag = 'input window, operand 5, single buffered']
    #allocation9 [shape = 's32[1]{0}', space=sflag, size = 0x4, scoped, tag = 'scoped memory for tpu_custom_call.1']
    #allocation10 [shape = 'u8[65536]{0}', space=vmem, size = 0x10000, scoped, tag = 'input window, operand 7, single buffered']
    #allocation11 [shape = 'u8[32768]{0}', space=vmem, size = 0x8000, scoped, tag = 'input window, operand 9, single buffered']
    #allocation12 [shape = 's32[1]{0}', space=sflag, size = 0x4, scoped, tag = 'scoped memory for tpu_custom_call.1']
    #allocation13 [shape = 'u8[4096]{0}', space=vmem, size = 0x1000, scoped, tag = 'output window, operand 0, single buffered']
    %16 = vsyncpa [#allocation3], 0
    %17 = vsyncpa [#allocation6], 0
    %18 = vsyncpa [#allocation9], 0
    %19 = vsyncpa [#allocation12], 0
    %20 = vsyncpa [#allocation4], 0
    // Predicated region
    $region2: #{tpu_custom_call.1} parent=1 // pred_check
      _
    $region3: #{tpu_custom_call.1} parent=1 // pred_check_branch
      %22 = sbr.rel (0) target = $region5
    $region4: #{tpu_custom_call.1} parent=1 // pred_region
      %s24 = ssub.s32 512, 512
      %25 = vsyncadd [#allocation3], %s24
      %s27 = sshll.u32 [#allocation2], 4
      %s28 = int_to_ptr.vmem [resolvable:$true] %s27
      %30 = dma.hbm_to_vmem [thread:$0]  %s0, 512, %s28, [#allocation3]
    $region5: #{tpu_custom_call.1} parent=1 // pred_fallthru
      _
    // Predicated region
    $region6: #{tpu_custom_call.1} parent=1 // pred_check
      _
    $region7: #{tpu_custom_call.1} parent=1 // pred_check_branch
      %32 = sbr.rel (0) target = $region9
    $region8: #{tpu_custom_call.1} parent=1 // pred_region
      %s34 = ssub.s32 16384, 16384
      %35 = vsyncadd [#allocation6], %s34
      %s36 = sshll.u32 [#allocation5], 4
      %s37 = int_to_ptr.vmem [resolvable:$true] %s36
      %42 = dma.hbm_to_vmem [thread:$0]  %s1, 16384, %s37, [#allocation6], 256, 256, 16
    $region9: #{tpu_custom_call.1} parent=1 // pred_fallthru
      _
    // Predicated region
    $region10: #{tpu_custom_call.1} parent=1 // pred_check
      _
    $region11: #{tpu_custom_call.1} parent=1 // pred_check_branch
      %44 = sbr.rel (0) target = $region13
    $region12: #{tpu_custom_call.1} parent=1 // pred_region
      _
    $region13: #{tpu_custom_call.1} parent=1 // pred_fallthru
      _
    // Predicated region
    $region14: #{tpu_custom_call.1} parent=1 // pred_check
      _
    $region15: #{tpu_custom_call.1} parent=1 // pred_check_branch
      %46 = sbr.rel (0) target = $region17
    $region16: #{tpu_custom_call.1} parent=1 // pred_region
      %s48 = ssub.s32 8192, 8192
      %49 = vsyncadd [#allocation6], %s48
      %s50 = sshll.u32 [#allocation7], 4
      %s51 = int_to_ptr.vmem [resolvable:$true] %s50
      %56 = dma.hbm_to_vmem [thread:$0]  %s3, 8192, %s51, [#allocation6], 128, 128, 8
    $region17: #{tpu_custom_call.1} parent=1 // pred_fallthru
      _
    // Predicated region
    $region18: #{tpu_custom_call.1} parent=1 // pred_check
      _
    $region19: #{tpu_custom_call.1} parent=1 // pred_check_branch
      %58 = sbr.rel (0) target = $region21
    $region20: #{tpu_custom_call.1} parent=1 // pred_region
      _
    $region21: #{tpu_custom_call.1} parent=1 // pred_fallthru
      _
    // Predicated region
    $region22: #{tpu_custom_call.1} parent=1 // pred_check
      _
    $region23: #{tpu_custom_call.1} parent=1 // pred_check_branch
      %60 = sbr.rel (0) target = $region25
    $region24: #{tpu_custom_call.1} parent=1 // pred_region
      %s62 = ssub.s32 4096, 4096
      %63 = vsyncadd [#allocation9], %s62
      %s64 = sshll.u32 [#allocation8], 4
      %s65 = int_to_ptr.vmem [resolvable:$true] %s64
      %70 = dma.hbm_to_vmem [thread:$0]  %s5, 4096, %s65, [#allocation9], 128, 128, 8
    $region25: #{tpu_custom_call.1} parent=1 // pred_fallthru
      _
    // Predicated region
    $region26: #{tpu_custom_call.1} parent=1 // pred_check
      _
    $region27: #{tpu_custom_call.1} parent=1 // pred_check_branch
      %72 = sbr.rel (0) target = $region29
    $region28: #{tpu_custom_call.1} parent=1 // pred_region
      _
    $region29: #{tpu_custom_call.1} parent=1 // pred_fallthru
      _
    // Predicated region
    $region30: #{tpu_custom_call.1} parent=1 // pred_check
      _
    $region31: #{tpu_custom_call.1} parent=1 // pred_check_branch
      %74 = sbr.rel (0) target = $region33
    $region32: #{tpu_custom_call.1} parent=1 // pred_region
      %s76 = ssub.s32 2048, 2048
      %77 = vsyncadd [#allocation9], %s76
      %s78 = sshll.u32 [#allocation10], 4
      %s79 = int_to_ptr.vmem [resolvable:$true] %s78
      %84 = dma.hbm_to_vmem [thread:$0]  %s7, 2048, %s79, [#allocation9], 64, 64, 4
    $region33: #{tpu_custom_call.1} parent=1 // pred_fallthru
      _
    // Predicated region
    $region34: #{tpu_custom_call.1} parent=1 // pred_check
      _
    $region35: #{tpu_custom_call.1} parent=1 // pred_check_branch
      %86 = sbr.rel (0) target = $region37
    $region36: #{tpu_custom_call.1} parent=1 // pred_region
      _
    $region37: #{tpu_custom_call.1} parent=1 // pred_fallthru
      _
    // Predicated region
    $region38: #{tpu_custom_call.1} parent=1 // pred_check
      _
    $region39: #{tpu_custom_call.1} parent=1 // pred_check_branch
      %88 = sbr.rel (0) target = $region41
    $region40: #{tpu_custom_call.1} parent=1 // pred_region
      %s90 = ssub.s32 1024, 1024
      %91 = vsyncadd [#allocation12], %s90
      %s92 = sshll.u32 [#allocation11], 4
      %s93 = int_to_ptr.vmem [resolvable:$true] %s92
      %98 = dma.hbm_to_vmem [thread:$0]  %s9, 1024, %s93, [#allocation12], 64, 64, 4
    $region41: #{tpu_custom_call.1} parent=1 // pred_fallthru
      _
    // Predicated region
    $region42: #{tpu_custom_call.1} parent=1 // pred_check
      _
    $region43: #{tpu_custom_call.1} parent=1 // pred_check_branch
      %100 = sbr.rel (0) target = $region45
    $region44: #{tpu_custom_call.1} parent=1 // pred_region
      _
    $region45: #{tpu_custom_call.1} parent=1 // pred_fallthru
      _
    // Predicated region
    $region46: #{tpu_custom_call.1} parent=1 // pred_check
      _
    $region47: #{tpu_custom_call.1} parent=1 // pred_check_branch
      %102 = sbr.rel (0) target = $region49
    $region48: #{tpu_custom_call.1} parent=1 // pred_region
      %103 = dma.done [#allocation3], 512
    $region49: #{tpu_custom_call.1} parent=1 // pred_fallthru
      _
    // Predicated region
    $region50: #{tpu_custom_call.1} parent=1 // pred_check
      _
    $region51: #{tpu_custom_call.1} parent=1 // pred_check_branch
      %105 = sbr.rel (0) target = $region53
    $region52: #{tpu_custom_call.1} parent=1 // pred_region
      %106 = dma.done [#allocation6], 16384
    $region53: #{tpu_custom_call.1} parent=1 // pred_fallthru
      _
    // Predicated region
    $region54: #{tpu_custom_call.1} parent=1 // pred_check
      _
    $region55: #{tpu_custom_call.1} parent=1 // pred_check_branch
      %108 = sbr.rel (0) target = $region57
    $region56: #{tpu_custom_call.1} parent=1 // pred_region
      %109 = dma.done [#allocation6], 8192
    $region57: #{tpu_custom_call.1} parent=1 // pred_fallthru
      _
    // Predicated region
    $region58: #{tpu_custom_call.1} parent=1 // pred_check
      _
    $region59: #{tpu_custom_call.1} parent=1 // pred_check_branch
      %111 = sbr.rel (0) target = $region61
    $region60: #{tpu_custom_call.1} parent=1 // pred_region
      %112 = dma.done [#allocation9], 4096
    $region61: #{tpu_custom_call.1} parent=1 // pred_fallthru
      _
    // Predicated region
    $region62: #{tpu_custom_call.1} parent=1 // pred_check
      _
    $region63: #{tpu_custom_call.1} parent=1 // pred_check_branch
      %114 = sbr.rel (0) target = $region65
    $region64: #{tpu_custom_call.1} parent=1 // pred_region
      %115 = dma.done [#allocation9], 2048
    $region65: #{tpu_custom_call.1} parent=1 // pred_fallthru
      _
    // Predicated region
    $region66: #{tpu_custom_call.1} parent=1 // pred_check
      _
    $region67: #{tpu_custom_call.1} parent=1 // pred_check_branch
      %117 = sbr.rel (0) target = $region69
    $region68: #{tpu_custom_call.1} parent=1 // pred_region
      %118 = dma.done [#allocation12], 1024
    $region69: #{tpu_custom_call.1} parent=1 // pred_fallthru
      _
    %v120 = vld [vmem:[#allocation2] sm:$0xff]
    %v121 = vld [vmem:[#allocation2 + $0x8] sm:$0xff]
    %v122 = vld [vmem:[#allocation2 + $0x10] sm:$0xff]
    %v123 = vld [vmem:[#allocation2 + $0x18] sm:$0xff]
    %v124 = vpack.c.bf16 %v120, %v120
    %v125 = vpack.c.bf16 %v121, %v121
    %v126 = vpack.c.bf16 %v122, %v122
    %v127 = vpack.c.bf16 %v123, %v123
    %v128 = vld [vmem:[#allocation5] sm:$0xff]
    %v129 = vld [vmem:[#allocation5 + $0x8] sm:$0xff]
    %v130 = vld [vmem:[#allocation5 + $0x10] sm:$0xff]
    %v131 = vld [vmem:[#allocation5 + $0x18] sm:$0xff]
    %v132 = vld [vmem:[#allocation5 + $0x20] sm:$0xff]
    %v133 = vld [vmem:[#allocation5 + $0x28] sm:$0xff]
    %v134 = vld [vmem:[#allocation5 + $0x30] sm:$0xff]
    %v135 = vld [vmem:[#allocation5 + $0x38] sm:$0xff]
    %v136 = vld [vmem:[#allocation5 + $0x40] sm:$0xff]
    %v137 = vld [vmem:[#allocation5 + $0x48] sm:$0xff]
    %v138 = vld [vmem:[#allocation5 + $0x50] sm:$0xff]
    %v139 = vld [vmem:[#allocation5 + $0x58] sm:$0xff]
    %v140 = vld [vmem:[#allocation5 + $0x60] sm:$0xff]
    %v141 = vld [vmem:[#allocation5 + $0x68] sm:$0xff]
    %v142 = vld [vmem:[#allocation5 + $0x70] sm:$0xff]
    %v143 = vld [vmem:[#allocation5 + $0x78] sm:$0xff]
    %v144 = vld [vmem:[#allocation5 + $0x80] sm:$0xff]
    %v145 = vld [vmem:[#allocation5 + $0x88] sm:$0xff]
    %v146 = vld [vmem:[#allocation5 + $0x90] sm:$0xff]
    %v147 = vld [vmem:[#allocation5 + $0x98] sm:$0xff]
    %v148 = vld [vmem:[#allocation5 + $0xa0] sm:$0xff]
    %v149 = vld [vmem:[#allocation5 + $0xa8] sm:$0xff]
    %v150 = vld [vmem:[#allocation5 + $0xb0] sm:$0xff]
    %v151 = vld [vmem:[#allocation5 + $0xb8] sm:$0xff]
    %v152 = vld [vmem:[#allocation5 + $0xc0] sm:$0xff]
    %v153 = vld [vmem:[#allocation5 + $0xc8] sm:$0xff]
    %v154 = vld [vmem:[#allocation5 + $0xd0] sm:$0xff]
    %v155 = vld [vmem:[#allocation5 + $0xd8] sm:$0xff]
    %v156 = vld [vmem:[#allocation5 + $0xe0] sm:$0xff]
    %v157 = vld [vmem:[#allocation5 + $0xe8] sm:$0xff]
    %v158 = vld [vmem:[#allocation5 + $0xf0] sm:$0xff]
    %v159 = vld [vmem:[#allocation5 + $0xf8] sm:$0xff]
    %v160 = vld [vmem:[#allocation5 + $0x100] sm:$0xff]
    %v161 = vld [vmem:[#allocation5 + $0x108] sm:$0xff]
    %v162 = vld [vmem:[#allocation5 + $0x110] sm:$0xff]
    %v163 = vld [vmem:[#allocation5 + $0x118] sm:$0xff]
    %v164 = vld [vmem:[#allocation5 + $0x120] sm:$0xff]
    %v165 = vld [vmem:[#allocation5 + $0x128] sm:$0xff]
    %v166 = vld [vmem:[#allocation5 + $0x130] sm:$0xff]
    %v167 = vld [vmem:[#allocation5 + $0x138] sm:$0xff]
    %v168 = vld [vmem:[#allocation5 + $0x140] sm:$0xff]
    %v169 = vld [vmem:[#allocation5 + $0x148] sm:$0xff]
    %v170 = vld [vmem:[#allocation5 + $0x150] sm:$0xff]
    %v171 = vld [vmem:[#allocation5 + $0x158] sm:$0xff]
    %v172 = vld [vmem:[#allocation5 + $0x160] sm:$0xff]
    %v173 = vld [vmem:[#allocation5 + $0x168] sm:$0xff]
    %v174 = vld [vmem:[#allocation5 + $0x170] sm:$0xff]
    %v175 = vld [vmem:[#allocation5 + $0x178] sm:$0xff]
    %v176 = vld [vmem:[#allocation5 + $0x180] sm:$0xff]
    %v177 = vld [vmem:[#allocation5 + $0x188] sm:$0xff]
    %v178 = vld [vmem:[#allocation5 + $0x190] sm:$0xff]
    %v179 = vld [vmem:[#allocation5 + $0x198] sm:$0xff]
    %v180 = vld [vmem:[#allocation5 + $0x1a0] sm:$0xff]
    %v181 = vld [vmem:[#allocation5 + $0x1a8] sm:$0xff]
    %v182 = vld [vmem:[#allocation5 + $0x1b0] sm:$0xff]
    %v183 = vld [vmem:[#allocation5 + $0x1b8] sm:$0xff]
    %v184 = vld [vmem:[#allocation5 + $0x1c0] sm:$0xff]
    %v185 = vld [vmem:[#allocation5 + $0x1c8] sm:$0xff]
    %v186 = vld [vmem:[#allocation5 + $0x1d0] sm:$0xff]
    %v187 = vld [vmem:[#allocation5 + $0x1d8] sm:$0xff]
    %v188 = vld [vmem:[#allocation5 + $0x1e0] sm:$0xff]
    %v189 = vld [vmem:[#allocation5 + $0x1e8] sm:$0xff]
    %v190 = vld [vmem:[#allocation5 + $0x1f0] sm:$0xff]
    %v191 = vld [vmem:[#allocation5 + $0x1f8] sm:$0xff]
    %v192 = vld [vmem:[#allocation5 + $0x200] sm:$0xff]
    %v193 = vld [vmem:[#allocation5 + $0x208] sm:$0xff]
    %v194 = vld [vmem:[#allocation5 + $0x210] sm:$0xff]
    %v195 = vld [vmem:[#allocation5 + $0x218] sm:$0xff]
    %v196 = vld [vmem:[#allocation5 + $0x220] sm:$0xff]
    %v197 = vld [vmem:[#allocation5 + $0x228] sm:$0xff]
    %v198 = vld [vmem:[#allocation5 + $0x230] sm:$0xff]
    %v199 = vld [vmem:[#allocation5 + $0x238] sm:$0xff]
    %v200 = vld [vmem:[#allocation5 + $0x240] sm:$0xff]
    %v201 = vld [vmem:[#allocation5 + $0x248] sm:$0xff]
    %v202 = vld [vmem:[#allocation5 + $0x250] sm:$0xff]
    %v203 = vld [vmem:[#allocation5 + $0x258] sm:$0xff]
    %v204 = vld [vmem:[#allocation5 + $0x260] sm:$0xff]
    %v205 = vld [vmem:[#allocation5 + $0x268] sm:$0xff]
    %v206 = vld [vmem:[#allocation5 + $0x270] sm:$0xff]
    %v207 = vld [vmem:[#allocation5 + $0x278] sm:$0xff]
    %v208 = vld [vmem:[#allocation5 + $0x280] sm:$0xff]
    %v209 = vld [vmem:[#allocation5 + $0x288] sm:$0xff]
    %v210 = vld [vmem:[#allocation5 + $0x290] sm:$0xff]
    %v211 = vld [vmem:[#allocation5 + $0x298] sm:$0xff]
    %v212 = vld [vmem:[#allocation5 + $0x2a0] sm:$0xff]
    %v213 = vld [vmem:[#allocation5 + $0x2a8] sm:$0xff]
    %v214 = vld [vmem:[#allocation5 + $0x2b0] sm:$0xff]
    %v215 = vld [vmem:[#allocation5 + $0x2b8] sm:$0xff]
    %v216 = vld [vmem:[#allocation5 + $0x2c0] sm:$0xff]
    %v217 = vld [vmem:[#allocation5 + $0x2c8] sm:$0xff]
    %v218 = vld [vmem:[#allocation5 + $0x2d0] sm:$0xff]
    %v219 = vld [vmem:[#allocation5 + $0x2d8] sm:$0xff]
    %v220 = vld [vmem:[#allocation5 + $0x2e0] sm:$0xff]
    %v221 = vld [vmem:[#allocation5 + $0x2e8] sm:$0xff]
    %v222 = vld [vmem:[#allocation5 + $0x2f0] sm:$0xff]
    %v223 = vld [vmem:[#allocation5 + $0x2f8] sm:$0xff]
    %v224 = vld [vmem:[#allocation5 + $0x300] sm:$0xff]
    %v225 = vld [vmem:[#allocation5 + $0x308] sm:$0xff]
    %v226 = vld [vmem:[#allocation5 + $0x310] sm:$0xff]
    %v227 = vld [vmem:[#allocation5 + $0x318] sm:$0xff]
    %v228 = vld [vmem:[#allocation5 + $0x320] sm:$0xff]
    %v229 = vld [vmem:[#allocation5 + $0x328] sm:$0xff]
    %v230 = vld [vmem:[#allocation5 + $0x330] sm:$0xff]
    %v231 = vld [vmem:[#allocation5 + $0x338] sm:$0xff]
    %v232 = vld [vmem:[#allocation5 + $0x340] sm:$0xff]
    %v233 = vld [vmem:[#allocation5 + $0x348] sm:$0xff]
    %v234 = vld [vmem:[#allocation5 + $0x350] sm:$0xff]
    %v235 = vld [vmem:[#allocation5 + $0x358] sm:$0xff]
    %v236 = vld [vmem:[#allocation5 + $0x360] sm:$0xff]
    %v237 = vld [vmem:[#allocation5 + $0x368] sm:$0xff]
    %v238 = vld [vmem:[#allocation5 + $0x370] sm:$0xff]
    %v239 = vld [vmem:[#allocation5 + $0x378] sm:$0xff]
    %v240 = vld [vmem:[#allocation5 + $0x380] sm:$0xff]
    %v241 = vld [vmem:[#allocation5 + $0x388] sm:$0xff]
    %v242 = vld [vmem:[#allocation5 + $0x390] sm:$0xff]
    %v243 = vld [vmem:[#allocation5 + $0x398] sm:$0xff]
    %v244 = vld [vmem:[#allocation5 + $0x3a0] sm:$0xff]
    %v245 = vld [vmem:[#allocation5 + $0x3a8] sm:$0xff]
    %v246 = vld [vmem:[#allocation5 + $0x3b0] sm:$0xff]
    %v247 = vld [vmem:[#allocation5 + $0x3b8] sm:$0xff]
    %v248 = vld [vmem:[#allocation5 + $0x3c0] sm:$0xff]
    %v249 = vld [vmem:[#allocation5 + $0x3c8] sm:$0xff]
    %v250 = vld [vmem:[#allocation5 + $0x3d0] sm:$0xff]
    %v251 = vld [vmem:[#allocation5 + $0x3d8] sm:$0xff]
    %v252 = vld [vmem:[#allocation5 + $0x3e0] sm:$0xff]
    %v253 = vld [vmem:[#allocation5 + $0x3e8] sm:$0xff]
    %v254 = vld [vmem:[#allocation5 + $0x3f0] sm:$0xff]
    %v255 = vld [vmem:[#allocation5 + $0x3f8] sm:$0xff]
    %v384 = vunpack.c.l.b16 %v128
    %v385 = vunpack.c.h.b16 %v128
    %v386 = vunpack.c.l.b16 %v129
    %v387 = vunpack.c.h.b16 %v129
    %v388 = vunpack.c.l.b16 %v130
    %v389 = vunpack.c.h.b16 %v130
    %v390 = vunpack.c.l.b16 %v131
    %v391 = vunpack.c.h.b16 %v131
    %v392 = vunpack.c.l.b16 %v132
    %v393 = vunpack.c.h.b16 %v132
    %v394 = vunpack.c.l.b16 %v133
    %v395 = vunpack.c.h.b16 %v133
    %v396 = vunpack.c.l.b16 %v134
    %v397 = vunpack.c.h.b16 %v134
    %v398 = vunpack.c.l.b16 %v135
    %v399 = vunpack.c.h.b16 %v135
    %v400 = vunpack.c.l.b16 %v136
    %v401 = vunpack.c.h.b16 %v136
    %v402 = vunpack.c.l.b16 %v137
    %v403 = vunpack.c.h.b16 %v137
    %v404 = vunpack.c.l.b16 %v138
    %v405 = vunpack.c.h.b16 %v138
    %v406 = vunpack.c.l.b16 %v139
    %v407 = vunpack.c.h.b16 %v139
    %v408 = vunpack.c.l.b16 %v140
    %v409 = vunpack.c.h.b16 %v140
    %v410 = vunpack.c.l.b16 %v141
    %v411 = vunpack.c.h.b16 %v141
    %v412 = vunpack.c.l.b16 %v142
    %v413 = vunpack.c.h.b16 %v142
    %v414 = vunpack.c.l.b16 %v143
    %v415 = vunpack.c.h.b16 %v143
    %v416 = vunpack.c.l.b16 %v144
    %v417 = vunpack.c.h.b16 %v144
    %v418 = vunpack.c.l.b16 %v145
    %v419 = vunpack.c.h.b16 %v145
    %v420 = vunpack.c.l.b16 %v146
    %v421 = vunpack.c.h.b16 %v146
    %v422 = vunpack.c.l.b16 %v147
    %v423 = vunpack.c.h.b16 %v147
    %v424 = vunpack.c.l.b16 %v148
    %v425 = vunpack.c.h.b16 %v148
    %v426 = vunpack.c.l.b16 %v149
    %v427 = vunpack.c.h.b16 %v149
    %v428 = vunpack.c.l.b16 %v150
    %v429 = vunpack.c.h.b16 %v150
    %v430 = vunpack.c.l.b16 %v151
    %v431 = vunpack.c.h.b16 %v151
    %v432 = vunpack.c.l.b16 %v152
    %v433 = vunpack.c.h.b16 %v152
    %v434 = vunpack.c.l.b16 %v153
    %v435 = vunpack.c.h.b16 %v153
    %v436 = vunpack.c.l.b16 %v154
    %v437 = vunpack.c.h.b16 %v154
    %v438 = vunpack.c.l.b16 %v155
    %v439 = vunpack.c.h.b16 %v155
    %v440 = vunpack.c.l.b16 %v156
    %v441 = vunpack.c.h.b16 %v156
    %v442 = vunpack.c.l.b16 %v157
    %v443 = vunpack.c.h.b16 %v157
    %v444 = vunpack.c.l.b16 %v158
    %v445 = vunpack.c.h.b16 %v158
    %v446 = vunpack.c.l.b16 %v159
    %v447 = vunpack.c.h.b16 %v159
    %v448 = vunpack.c.l.b16 %v160
    %v449 = vunpack.c.h.b16 %v160
    %v450 = vunpack.c.l.b16 %v161
    %v451 = vunpack.c.h.b16 %v161
    %v452 = vunpack.c.l.b16 %v162
    %v453 = vunpack.c.h.b16 %v162
    %v454 = vunpack.c.l.b16 %v163
    %v455 = vunpack.c.h.b16 %v163
    %v456 = vunpack.c.l.b16 %v164
    %v457 = vunpack.c.h.b16 %v164
    %v458 = vunpack.c.l.b16 %v165
    %v459 = vunpack.c.h.b16 %v165
    %v460 = vunpack.c.l.b16 %v166
    %v461 = vunpack.c.h.b16 %v166
    %v462 = vunpack.c.l.b16 %v167
    %v463 = vunpack.c.h.b16 %v167
    %v464 = vunpack.c.l.b16 %v168
    %v465 = vunpack.c.h.b16 %v168
    %v466 = vunpack.c.l.b16 %v169
    %v467 = vunpack.c.h.b16 %v169
    %v468 = vunpack.c.l.b16 %v170
    %v469 = vunpack.c.h.b16 %v170
    %v470 = vunpack.c.l.b16 %v171
    %v471 = vunpack.c.h.b16 %v171
    %v472 = vunpack.c.l.b16 %v172
    %v473 = vunpack.c.h.b16 %v172
    %v474 = vunpack.c.l.b16 %v173
    %v475 = vunpack.c.h.b16 %v173
    %v476 = vunpack.c.l.b16 %v174
    %v477 = vunpack.c.h.b16 %v174
    %v478 = vunpack.c.l.b16 %v175
    %v479 = vunpack.c.h.b16 %v175
    %v480 = vunpack.c.l.b16 %v176
    %v481 = vunpack.c.h.b16 %v176
    %v482 = vunpack.c.l.b16 %v177
    %v483 = vunpack.c.h.b16 %v177
    %v484 = vunpack.c.l.b16 %v178
    %v485 = vunpack.c.h.b16 %v178
    %v486 = vunpack.c.l.b16 %v179
    %v487 = vunpack.c.h.b16 %v179
    %v488 = vunpack.c.l.b16 %v180
    %v489 = vunpack.c.h.b16 %v180
    %v490 = vunpack.c.l.b16 %v181
    %v491 = vunpack.c.h.b16 %v181
    %v492 = vunpack.c.l.b16 %v182
    %v493 = vunpack.c.h.b16 %v182
    %v494 = vunpack.c.l.b16 %v183
    %v495 = vunpack.c.h.b16 %v183
    %v496 = vunpack.c.l.b16 %v184
    %v497 = vunpack.c.h.b16 %v184
    %v498 = vunpack.c.l.b16 %v185
    %v499 = vunpack.c.h.b16 %v185
    %v500 = vunpack.c.l.b16 %v186
    %v501 = vunpack.c.h.b16 %v186
    %v502 = vunpack.c.l.b16 %v187
    %v503 = vunpack.c.h.b16 %v187
    %v504 = vunpack.c.l.b16 %v188
    %v505 = vunpack.c.h.b16 %v188
    %v506 = vunpack.c.l.b16 %v189
    %v507 = vunpack.c.h.b16 %v189
    %v508 = vunpack.c.l.b16 %v190
    %v509 = vunpack.c.h.b16 %v190
    %v510 = vunpack.c.l.b16 %v191
    %v511 = vunpack.c.h.b16 %v191
    %v512 = vunpack.c.l.b16 %v192
    %v513 = vunpack.c.h.b16 %v192
    %v514 = vunpack.c.l.b16 %v193
    %v515 = vunpack.c.h.b16 %v193
    %v516 = vunpack.c.l.b16 %v194
    %v517 = vunpack.c.h.b16 %v194
    %v518 = vunpack.c.l.b16 %v195
    %v519 = vunpack.c.h.b16 %v195
    %v520 = vunpack.c.l.b16 %v196
    %v521 = vunpack.c.h.b16 %v196
    %v522 = vunpack.c.l.b16 %v197
    %v523 = vunpack.c.h.b16 %v197
    %v524 = vunpack.c.l.b16 %v198
    %v525 = vunpack.c.h.b16 %v198
    %v526 = vunpack.c.l.b16 %v199
    %v527 = vunpack.c.h.b16 %v199
    %v528 = vunpack.c.l.b16 %v200
    %v529 = vunpack.c.h.b16 %v200
    %v530 = vunpack.c.l.b16 %v201
    %v531 = vunpack.c.h.b16 %v201
    %v532 = vunpack.c.l.b16 %v202
    %v533 = vunpack.c.h.b16 %v202
    %v534 = vunpack.c.l.b16 %v203
    %v535 = vunpack.c.h.b16 %v203
    %v536 = vunpack.c.l.b16 %v204
    %v537 = vunpack.c.h.b16 %v204
    %v538 = vunpack.c.l.b16 %v205
    %v539 = vunpack.c.h.b16 %v205
    %v540 = vunpack.c.l.b16 %v206
    %v541 = vunpack.c.h.b16 %v206
    %v542 = vunpack.c.l.b16 %v207
    %v543 = vunpack.c.h.b16 %v207
    %v544 = vunpack.c.l.b16 %v208
    %v545 = vunpack.c.h.b16 %v208
    %v546 = vunpack.c.l.b16 %v209
    %v547 = vunpack.c.h.b16 %v209
    %v548 = vunpack.c.l.b16 %v210
    %v549 = vunpack.c.h.b16 %v210
    %v550 = vunpack.c.l.b16 %v211
    %v551 = vunpack.c.h.b16 %v211
    %v552 = vunpack.c.l.b16 %v212
    %v553 = vunpack.c.h.b16 %v212
    %v554 = vunpack.c.l.b16 %v213
    %v555 = vunpack.c.h.b16 %v213
    %v556 = vunpack.c.l.b16 %v214
    %v557 = vunpack.c.h.b16 %v214
    %v558 = vunpack.c.l.b16 %v215
    %v559 = vunpack.c.h.b16 %v215
    %v560 = vunpack.c.l.b16 %v216
    %v561 = vunpack.c.h.b16 %v216
    %v562 = vunpack.c.l.b16 %v217
    %v563 = vunpack.c.h.b16 %v217
    %v564 = vunpack.c.l.b16 %v218
    %v565 = vunpack.c.h.b16 %v218
    %v566 = vunpack.c.l.b16 %v219
    %v567 = vunpack.c.h.b16 %v219
    %v568 = vunpack.c.l.b16 %v220
    %v569 = vunpack.c.h.b16 %v220
    %v570 = vunpack.c.l.b16 %v221
    %v571 = vunpack.c.h.b16 %v221
    %v572 = vunpack.c.l.b16 %v222
    %v573 = vunpack.c.h.b16 %v222
    %v574 = vunpack.c.l.b16 %v223
    %v575 = vunpack.c.h.b16 %v223
    %v576 = vunpack.c.l.b16 %v224
    %v577 = vunpack.c.h.b16 %v224
    %v578 = vunpack.c.l.b16 %v225
    %v579 = vunpack.c.h.b16 %v225
    %v580 = vunpack.c.l.b16 %v226
    %v581 = vunpack.c.h.b16 %v226
    %v582 = vunpack.c.l.b16 %v227
    %v583 = vunpack.c.h.b16 %v227
    %v584 = vunpack.c.l.b16 %v228
    %v585 = vunpack.c.h.b16 %v228
    %v586 = vunpack.c.l.b16 %v229
    %v587 = vunpack.c.h.b16 %v229
    %v588 = vunpack.c.l.b16 %v230
    %v589 = vunpack.c.h.b16 %v230
    %v590 = vunpack.c.l.b16 %v231
    %v591 = vunpack.c.h.b16 %v231
    %v592 = vunpack.c.l.b16 %v232
    %v593 = vunpack.c.h.b16 %v232
    %v594 = vunpack.c.l.b16 %v233
    %v595 = vunpack.c.h.b16 %v233
    %v596 = vunpack.c.l.b16 %v234
    %v597 = vunpack.c.h.b16 %v234
    %v598 = vunpack.c.l.b16 %v235
    %v599 = vunpack.c.h.b16 %v235
    %v600 = vunpack.c.l.b16 %v236
    %v601 = vunpack.c.h.b16 %v236
    %v602 = vunpack.c.l.b16 %v237
    %v603 = vunpack.c.h.b16 %v237
    %v604 = vunpack.c.l.b16 %v238
    %v605 = vunpack.c.h.b16 %v238
    %v606 = vunpack.c.l.b16 %v239
    %v607 = vunpack.c.h.b16 %v239
    %v608 = vunpack.c.l.b16 %v240
    %v609 = vunpack.c.h.b16 %v240
    %v610 = vunpack.c.l.b16 %v241
    %v611 = vunpack.c.h.b16 %v241
    %v612 = vunpack.c.l.b16 %v242
    %v613 = vunpack.c.h.b16 %v242
    %v614 = vunpack.c.l.b16 %v243
    %v615 = vunpack.c.h.b16 %v243
    %v616 = vunpack.c.l.b16 %v244
    %v617 = vunpack.c.h.b16 %v244
    %v618 = vunpack.c.l.b16 %v245
    %v619 = vunpack.c.h.b16 %v245
    %v620 = vunpack.c.l.b16 %v246
    %v621 = vunpack.c.h.b16 %v246
    %v622 = vunpack.c.l.b16 %v247
    %v623 = vunpack.c.h.b16 %v247
    %v624 = vunpack.c.l.b16 %v248
    %v625 = vunpack.c.h.b16 %v248
    %v626 = vunpack.c.l.b16 %v249
    %v627 = vunpack.c.h.b16 %v249
    %v628 = vunpack.c.l.b16 %v250
    %v629 = vunpack.c.h.b16 %v250
    %v630 = vunpack.c.l.b16 %v251
    %v631 = vunpack.c.h.b16 %v251
    %v632 = vunpack.c.l.b16 %v252
    %v633 = vunpack.c.h.b16 %v252
    %v634 = vunpack.c.l.b16 %v253
    %v635 = vunpack.c.h.b16 %v253
    %v636 = vunpack.c.l.b16 %v254
    %v637 = vunpack.c.h.b16 %v254
    %v638 = vunpack.c.l.b16 %v255
    %v639 = vunpack.c.h.b16 %v255
    %v640 = vpack.c.b16 %v388, %v384
    %v641 = vpack.c.b16 %v389, %v385
    %v642 = vpack.c.b16 %v390, %v386
    %v643 = vpack.c.b16 %v391, %v387
    %v644 = vpack.c.b16 %v396, %v392
    %v645 = vpack.c.b16 %v397, %v393
    %v646 = vpack.c.b16 %v398, %v394
    %v647 = vpack.c.b16 %v399, %v395
    %v648 = vpack.c.b16 %v404, %v400
    %v649 = vpack.c.b16 %v405, %v401
    %v650 = vpack.c.b16 %v406, %v402
    %v651 = vpack.c.b16 %v407, %v403
    %v652 = vpack.c.b16 %v412, %v408
    %v653 = vpack.c.b16 %v413, %v409
    %v654 = vpack.c.b16 %v414, %v410
    %v655 = vpack.c.b16 %v415, %v411
    %v656 = vpack.c.b16 %v420, %v416
    %v657 = vpack.c.b16 %v421, %v417
    %v658 = vpack.c.b16 %v422, %v418
    %v659 = vpack.c.b16 %v423, %v419
    %v660 = vpack.c.b16 %v428, %v424
    %v661 = vpack.c.b16 %v429, %v425
    %v662 = vpack.c.b16 %v430, %v426
    %v663 = vpack.c.b16 %v431, %v427
    %v664 = vpack.c.b16 %v436, %v432
    %v665 = vpack.c.b16 %v437, %v433
    %v666 = vpack.c.b16 %v438, %v434
    %v667 = vpack.c.b16 %v439, %v435
    %v668 = vpack.c.b16 %v444, %v440
    %v669 = vpack.c.b16 %v445, %v441
    %v670 = vpack.c.b16 %v446, %v442
    %v671 = vpack.c.b16 %v447, %v443
    %v672 = vpack.c.b16 %v452, %v448
    %v673 = vpack.c.b16 %v453, %v449
    %v674 = vpack.c.b16 %v454, %v450
    %v675 = vpack.c.b16 %v455, %v451
    %v676 = vpack.c.b16 %v460, %v456
    %v677 = vpack.c.b16 %v461, %v457
    %v678 = vpack.c.b16 %v462, %v458
    %v679 = vpack.c.b16 %v463, %v459
    %v680 = vpack.c.b16 %v468, %v464
    %v681 = vpack.c.b16 %v469, %v465
    %v682 = vpack.c.b16 %v470, %v466
    %v683 = vpack.c.b16 %v471, %v467
    %v684 = vpack.c.b16 %v476, %v472
    %v685 = vpack.c.b16 %v477, %v473
    %v686 = vpack.c.b16 %v478, %v474
    %v687 = vpack.c.b16 %v479, %v475
    %v688 = vpack.c.b16 %v484, %v480
    %v689 = vpack.c.b16 %v485, %v481
    %v690 = vpack.c.b16 %v486, %v482
    %v691 = vpack.c.b16 %v487, %v483
    %v692 = vpack.c.b16 %v492, %v488
    %v693 = vpack.c.b16 %v493, %v489
    %v694 = vpack.c.b16 %v494, %v490
    %v695 = vpack.c.b16 %v495, %v491
    %v696 = vpack.c.b16 %v500, %v496
    %v697 = vpack.c.b16 %v501, %v497
    %v698 = vpack.c.b16 %v502, %v498
    %v699 = vpack.c.b16 %v503, %v499
    %v700 = vpack.c.b16 %v508, %v504
    %v701 = vpack.c.b16 %v509, %v505
    %v702 = vpack.c.b16 %v510, %v506
    %v703 = vpack.c.b16 %v511, %v507
    %v704 = vpack.c.b16 %v516, %v512
    %v705 = vpack.c.b16 %v517, %v513
    %v706 = vpack.c.b16 %v518, %v514
    %v707 = vpack.c.b16 %v519, %v515
    %v708 = vpack.c.b16 %v524, %v520
    %v709 = vpack.c.b16 %v525, %v521
    %v710 = vpack.c.b16 %v526, %v522
    %v711 = vpack.c.b16 %v527, %v523
    %v712 = vpack.c.b16 %v532, %v528
    %v713 = vpack.c.b16 %v533, %v529
    %v714 = vpack.c.b16 %v534, %v530
    %v715 = vpack.c.b16 %v535, %v531
    %v716 = vpack.c.b16 %v540, %v536
    %v717 = vpack.c.b16 %v541, %v537
    %v718 = vpack.c.b16 %v542, %v538
    %v719 = vpack.c.b16 %v543, %v539
    %v720 = vpack.c.b16 %v548, %v544
    %v721 = vpack.c.b16 %v549, %v545
    %v722 = vpack.c.b16 %v550, %v546
    %v723 = vpack.c.b16 %v551, %v547
    %v724 = vpack.c.b16 %v556, %v552
    %v725 = vpack.c.b16 %v557, %v553
    %v726 = vpack.c.b16 %v558, %v554
    %v727 = vpack.c.b16 %v559, %v555
    %v728 = vpack.c.b16 %v564, %v560
    %v729 = vpack.c.b16 %v565, %v561
    %v730 = vpack.c.b16 %v566, %v562
    %v731 = vpack.c.b16 %v567, %v563
    %v732 = vpack.c.b16 %v572, %v568
    %v733 = vpack.c.b16 %v573, %v569
    %v734 = vpack.c.b16 %v574, %v570
    %v735 = vpack.c.b16 %v575, %v571
    %v736 = vpack.c.b16 %v580, %v576
    %v737 = vpack.c.b16 %v581, %v577
    %v738 = vpack.c.b16 %v582, %v578
    %v739 = vpack.c.b16 %v583, %v579
    %v740 = vpack.c.b16 %v588, %v584
    %v741 = vpack.c.b16 %v589, %v585
    %v742 = vpack.c.b16 %v590, %v586
    %v743 = vpack.c.b16 %v591, %v587
    %v744 = vpack.c.b16 %v596, %v592
    %v745 = vpack.c.b16 %v597, %v593
    %v746 = vpack.c.b16 %v598, %v594
    %v747 = vpack.c.b16 %v599, %v595
    %v748 = vpack.c.b16 %v604, %v600
    %v749 = vpack.c.b16 %v605, %v601
    %v750 = vpack.c.b16 %v606, %v602
    %v751 = vpack.c.b16 %v607, %v603
    %v752 = vpack.c.b16 %v612, %v608
    %v753 = vpack.c.b16 %v613, %v609
    %v754 = vpack.c.b16 %v614, %v610
    %v755 = vpack.c.b16 %v615, %v611
    %v756 = vpack.c.b16 %v620, %v616
    %v757 = vpack.c.b16 %v621, %v617
    %v758 = vpack.c.b16 %v622, %v618
    %v759 = vpack.c.b16 %v623, %v619
    %v760 = vpack.c.b16 %v628, %v624
    %v761 = vpack.c.b16 %v629, %v625
    %v762 = vpack.c.b16 %v630, %v626
    %v763 = vpack.c.b16 %v631, %v627
    %v764 = vpack.c.b16 %v636, %v632
    %v765 = vpack.c.b16 %v637, %v633
    %v766 = vpack.c.b16 %v638, %v634
    %v767 = vpack.c.b16 %v639, %v635
    %896 = vmatprep.subr.bf16.mxu0 %v641
    %897 = vmatpush1.bf16.msra.mxu0 %v640
    %898 = vmatprep.subr.bf16.mxu0 %v645
    %899 = vmatpush1.bf16.msra.mxu0 %v644
    %900 = vmatprep.subr.bf16.mxu0 %v649
    %901 = vmatpush1.bf16.msra.mxu0 %v648
    %902 = vmatprep.subr.bf16.mxu0 %v653
    %903 = vmatpush1.bf16.msra.mxu0 %v652
    %904 = vmatprep.subr.bf16.mxu0 %v657
    %905 = vmatpush1.bf16.msra.mxu0 %v656
    %906 = vmatprep.subr.bf16.mxu0 %v661
    %907 = vmatpush1.bf16.msra.mxu0 %v660
    %908 = vmatprep.subr.bf16.mxu0 %v665
    %909 = vmatpush1.bf16.msra.mxu0 %v664
    %910 = vmatprep.subr.bf16.mxu0 %v669
    %911 = vmatpush1.bf16.msra.mxu0 %v668
    %912 = vmatprep.subr.bf16.mxu0 %v673
    %913 = vmatpush1.bf16.msra.mxu0 %v672
    %914 = vmatprep.subr.bf16.mxu0 %v677
    %915 = vmatpush1.bf16.msra.mxu0 %v676
    %916 = vmatprep.subr.bf16.mxu0 %v681
    %917 = vmatpush1.bf16.msra.mxu0 %v680
    %918 = vmatprep.subr.bf16.mxu0 %v685
    %919 = vmatpush1.bf16.msra.mxu0 %v684
    %920 = vmatprep.subr.bf16.mxu0 %v689
    %921 = vmatpush1.bf16.msra.mxu0 %v688
    %922 = vmatprep.subr.bf16.mxu0 %v693
    %923 = vmatpush1.bf16.msra.mxu0 %v692
    %924 = vmatprep.subr.bf16.mxu0 %v697
    %925 = vmatpush1.bf16.msra.mxu0 %v696
    %926 = vmatprep.subr.bf16.mxu0 %v701
    %927 = vmatpush1.bf16.msra.mxu0 %v700
    %928 = vmatprep.mubr.bf16.mxu0 %v125
    %929 = vmatmul.mubr.bf16.gmra.mrb[0].mxu0 %v124
    %v930 = vpop.f32.mrb[0].mxu0
    %v931 = vadd.f32 0.0, %v930
    %v932 = vpop.f32.mrb[0].mxu0
    %v933 = vadd.f32 0.0, %v932
    %v934 = vpop.f32.mrb[0].mxu0
    %v935 = vpop.f32.mrb[0].mxu0
    %936 = vdwg.mxu0
    %937 = vmatprep.subr.bf16.mxu0 %v705
    %938 = vmatpush1.bf16.msra.mxu0 %v704
    %939 = vmatprep.subr.bf16.mxu0 %v709
    %940 = vmatpush1.bf16.msra.mxu0 %v708
    %941 = vmatprep.subr.bf16.mxu0 %v713
    %942 = vmatpush1.bf16.msra.mxu0 %v712
    %943 = vmatprep.subr.bf16.mxu0 %v717
    %944 = vmatpush1.bf16.msra.mxu0 %v716
    %945 = vmatprep.subr.bf16.mxu0 %v721
    %946 = vmatpush1.bf16.msra.mxu0 %v720
    %947 = vmatprep.subr.bf16.mxu0 %v725
    %948 = vmatpush1.bf16.msra.mxu0 %v724
    %949 = vmatprep.subr.bf16.mxu0 %v729
    %950 = vmatpush1.bf16.msra.mxu0 %v728
    %951 = vmatprep.subr.bf16.mxu0 %v733
    %952 = vmatpush1.bf16.msra.mxu0 %v732
    %953 = vmatprep.subr.bf16.mxu0 %v737
    %954 = vmatpush1.bf16.msra.mxu0 %v736
    %955 = vmatprep.subr.bf16.mxu0 %v741
    %956 = vmatpush1.bf16.msra.mxu0 %v740
    %957 = vmatprep.subr.bf16.mxu0 %v745
    %958 = vmatpush1.bf16.msra.mxu0 %v744
    %959 = vmatprep.subr.bf16.mxu0 %v749
    %960 = vmatpush1.bf16.msra.mxu0 %v748
    %961 = vmatprep.subr.bf16.mxu0 %v753
    %962 = vmatpush1.bf16.msra.mxu0 %v752
    %963 = vmatprep.subr.bf16.mxu0 %v757
    %964 = vmatpush1.bf16.msra.mxu0 %v756
    %965 = vmatprep.subr.bf16.mxu0 %v761
    %966 = vmatpush1.bf16.msra.mxu0 %v760
    %967 = vmatprep.subr.bf16.mxu0 %v765
    %968 = vmatpush1.bf16.msra.mxu0 %v764
    %969 = vmatprep.mubr.bf16.mxu0 %v127
    %970 = vmatmul.mubr.bf16.gmra.mrb[0].mxu0 %v126
    %v971 = vpop.f32.mrb[0].mxu0
    %v972 = vadd.f32 %v931, %v971
    %v973 = vpop.f32.mrb[0].mxu0
    %v974 = vadd.f32 %v933, %v973
    %v975 = vpop.f32.mrb[0].mxu0
    %v976 = vpop.f32.mrb[0].mxu0
    %977 = vdwg.mxu0
    %978 = vmatprep.subr.bf16.mxu0 %v643
    %979 = vmatpush1.bf16.msra.mxu0 %v642
    %980 = vmatprep.subr.bf16.mxu0 %v647
    %981 = vmatpush1.bf16.msra.mxu0 %v646
    %982 = vmatprep.subr.bf16.mxu0 %v651
    %983 = vmatpush1.bf16.msra.mxu0 %v650
    %984 = vmatprep.subr.bf16.mxu0 %v655
    %985 = vmatpush1.bf16.msra.mxu0 %v654
    %986 = vmatprep.subr.bf16.mxu0 %v659
    %987 = vmatpush1.bf16.msra.mxu0 %v658
    %988 = vmatprep.subr.bf16.mxu0 %v663
    %989 = vmatpush1.bf16.msra.mxu0 %v662
    %990 = vmatprep.subr.bf16.mxu0 %v667
    %991 = vmatpush1.bf16.msra.mxu0 %v666
    %992 = vmatprep.subr.bf16.mxu0 %v671
    %993 = vmatpush1.bf16.msra.mxu0 %v670
    %994 = vmatprep.subr.bf16.mxu0 %v675
    %995 = vmatpush1.bf16.msra.mxu0 %v674
    %996 = vmatprep.subr.bf16.mxu0 %v679
    %997 = vmatpush1.bf16.msra.mxu0 %v678
    %998 = vmatprep.subr.bf16.mxu0 %v683
    %999 = vmatpush1.bf16.msra.mxu0 %v682
    %1000 = vmatprep.subr.bf16.mxu0 %v687
    %1001 = vmatpush1.bf16.msra.mxu0 %v686
    %1002 = vmatprep.subr.bf16.mxu0 %v691
    %1003 = vmatpush1.bf16.msra.mxu0 %v690
    %1004 = vmatprep.subr.bf16.mxu0 %v695
    %1005 = vmatpush1.bf16.msra.mxu0 %v694
    %1006 = vmatprep.subr.bf16.mxu0 %v699
    %1007 = vmatpush1.bf16.msra.mxu0 %v698
    %1008 = vmatprep.subr.bf16.mxu0 %v703
    %1009 = vmatpush1.bf16.msra.mxu0 %v702
    %1010 = vmatprep.mubr.bf16.mxu0 %v125
    %1011 = vmatmul.mubr.bf16.gmra.mrb[0].mxu0 %v124
    %v1012 = vpop.f32.mrb[0].mxu0
    %v1013 = vadd.f32 0.0, %v1012
    %v1014 = vpop.f32.mrb[0].mxu0
    %v1015 = vadd.f32 0.0, %v1014
    %v1016 = vpop.f32.mrb[0].mxu0
    %v1017 = vpop.f32.mrb[0].mxu0
    %1018 = vdwg.mxu0
    %1019 = vmatprep.subr.bf16.mxu0 %v707
    %1020 = vmatpush1.bf16.msra.mxu0 %v706
    %1021 = vmatprep.subr.bf16.mxu0 %v711
    %1022 = vmatpush1.bf16.msra.mxu0 %v710
    %1023 = vmatprep.subr.bf16.mxu0 %v715
    %1024 = vmatpush1.bf16.msra.mxu0 %v714
    %1025 = vmatprep.subr.bf16.mxu0 %v719
    %1026 = vmatpush1.bf16.msra.mxu0 %v718
    %1027 = vmatprep.subr.bf16.mxu0 %v723
    %1028 = vmatpush1.bf16.msra.mxu0 %v722
    %1029 = vmatprep.subr.bf16.mxu0 %v727
    %1030 = vmatpush1.bf16.msra.mxu0 %v726
    %1031 = vmatprep.subr.bf16.mxu0 %v731
    %1032 = vmatpush1.bf16.msra.mxu0 %v730
    %1033 = vmatprep.subr.bf16.mxu0 %v735
    %1034 = vmatpush1.bf16.msra.mxu0 %v734
    %1035 = vmatprep.subr.bf16.mxu0 %v739
    %1036 = vmatpush1.bf16.msra.mxu0 %v738
    %1037 = vmatprep.subr.bf16.mxu0 %v743
    %1038 = vmatpush1.bf16.msra.mxu0 %v742
    %1039 = vmatprep.subr.bf16.mxu0 %v747
    %1040 = vmatpush1.bf16.msra.mxu0 %v746
    %1041 = vmatprep.subr.bf16.mxu0 %v751
    %1042 = vmatpush1.bf16.msra.mxu0 %v750
    %1043 = vmatprep.subr.bf16.mxu0 %v755
    %1044 = vmatpush1.bf16.msra.mxu0 %v754
    %1045 = vmatprep.subr.bf16.mxu0 %v759
    %1046 = vmatpush1.bf16.msra.mxu0 %v758
    %1047 = vmatprep.subr.bf16.mxu0 %v763
    %1048 = vmatpush1.bf16.msra.mxu0 %v762
    %1049 = vmatprep.subr.bf16.mxu0 %v767
    %1050 = vmatpush1.bf16.msra.mxu0 %v766
    %1051 = vmatprep.mubr.bf16.mxu0 %v127
    %1052 = vmatmul.mubr.bf16.gmra.mrb[0].mxu0 %v126
    %v1053 = vpop.f32.mrb[0].mxu0
    %v1054 = vadd.f32 %v1013, %v1053
    %v1055 = vpop.f32.mrb[0].mxu0
    %v1056 = vadd.f32 %v1015, %v1055
    %v1057 = vpop.f32.mrb[0].mxu0
    %v1058 = vpop.f32.mrb[0].mxu0
    %1059 = vdwg.mxu0
    %v1060 = vpack.c.bf16 %v972, %v972
    %v1061 = vpack.c.bf16 %v974, %v974
    %v1062 = vpack.c.bf16 %v1054, %v1054
    %v1063 = vpack.c.bf16 %v1056, %v1056
    %v1064 = vld [vmem:[%s2] sm:$0xf]
    %v1067 = vunpack.c.l.s4 1966171168
    %v1068 = vunpack.c.0.s8 %v1067
    %v1069 = vlaneseq
    %v1070 = vshrl.u32 %v1069, 7
    %v1071 = vsub.s32 %v1068, %v1070
    %v1072 = vrot.slane %v1064, %v1071
    %v1073 = vcombine.high %v1072, %v1072
    %v1075 = vunpack.c.l.s4 1966171168
    %v1076 = vunpack.c.0.s8 %v1075
    %v1077 = vlaneseq
    %v1078 = vshrl.u32 %v1077, 7
    %v1079 = vsub.s32 %v1076, %v1078
    %v1080 = vrot.slane %v1072, %v1079
    %v1082 = vunpack.c.l.s4 1966171168
    %v1083 = vunpack.c.0.s8 %v1082
    %v1084 = vlaneseq
    %v1085 = vshrl.u32 %v1084, 7
    %v1086 = vsub.s32 %v1083, %v1085
    %v1087 = vrot.slane %v1073, %v1086
    %v1088 = vcombine.high %v1080, %v1080
    %v1089 = vcombine.high %v1087, %v1087
    %v1091 = vpack.i.b16 %v1080, %v1080
    %v1093 = vlaneseq
    %v1094 = vshrl.u32 %v1093, 7
    %v1095 = vsub.s32 0, %v1094
    %v1096 = vrot.slane %v1091, %v1095
    %v1098 = vpack.i.b16 %v1087, %v1087
    %v1100 = vlaneseq
    %v1101 = vshrl.u32 %v1100, 7
    %v1102 = vsub.s32 0, %v1101
    %v1103 = vrot.slane %v1098, %v1102
    %v1105 = vpack.i.b16 %v1088, %v1088
    %v1107 = vlaneseq
    %v1108 = vshrl.u32 %v1107, 7
    %v1109 = vsub.s32 0, %v1108
    %v1110 = vrot.slane %v1105, %v1109
    %v1112 = vpack.i.b16 %v1089, %v1089
    %v1114 = vlaneseq
    %v1115 = vshrl.u32 %v1114, 7
    %v1116 = vsub.s32 0, %v1115
    %v1117 = vrot.slane %v1112, %v1116
    %v1118 = vadd.bf16 %v1060, %v1096
    %v1119 = vadd.bf16 %v1061, %v1103
    %v1120 = vadd.bf16 %v1062, %v1110
    %v1121 = vadd.bf16 %v1063, %v1117
    %v1122 = vmax.bf16 %v1118, 0
    %v1123 = vmax.bf16 %v1119, 0
    %v1124 = vmax.bf16 %v1120, 0
    %v1125 = vmax.bf16 %v1121, 0
    %v1126 = vld [vmem:[#allocation7] sm:$0xff]
    %v1127 = vld [vmem:[#allocation7 + $0x8] sm:$0xff]
    %v1128 = vld [vmem:[#allocation7 + $0x10] sm:$0xff]
    %v1129 = vld [vmem:[#allocation7 + $0x18] sm:$0xff]
    %v1130 = vld [vmem:[#allocation7 + $0x20] sm:$0xff]
    %v1131 = vld [vmem:[#allocation7 + $0x28] sm:$0xff]
    %v1132 = vld [vmem:[#allocation7 + $0x30] sm:$0xff]
    %v1133 = vld [vmem:[#allocation7 + $0x38] sm:$0xff]
    %v1134 = vld [vmem:[#allocation7 + $0x40] sm:$0xff]
    %v1135 = vld [vmem:[#allocation7 + $0x48] sm:$0xff]
    %v1136 = vld [vmem:[#allocation7 + $0x50] sm:$0xff]
    %v1137 = vld [vmem:[#allocation7 + $0x58] sm:$0xff]
    %v1138 = vld [vmem:[#allocation7 + $0x60] sm:$0xff]
    %v1139 = vld [vmem:[#allocation7 + $0x68] sm:$0xff]
    %v1140 = vld [vmem:[#allocation7 + $0x70] sm:$0xff]
    %v1141 = vld [vmem:[#allocation7 + $0x78] sm:$0xff]
    %v1142 = vld [vmem:[#allocation7 + $0x80] sm:$0xff]
    %v1143 = vld [vmem:[#allocation7 + $0x88] sm:$0xff]
    %v1144 = vld [vmem:[#allocation7 + $0x90] sm:$0xff]
    %v1145 = vld [vmem:[#allocation7 + $0x98] sm:$0xff]
    %v1146 = vld [vmem:[#allocation7 + $0xa0] sm:$0xff]
    %v1147 = vld [vmem:[#allocation7 + $0xa8] sm:$0xff]
    %v1148 = vld [vmem:[#allocation7 + $0xb0] sm:$0xff]
    %v1149 = vld [vmem:[#allocation7 + $0xb8] sm:$0xff]
    %v1150 = vld [vmem:[#allocation7 + $0xc0] sm:$0xff]
    %v1151 = vld [vmem:[#allocation7 + $0xc8] sm:$0xff]
    %v1152 = vld [vmem:[#allocation7 + $0xd0] sm:$0xff]
    %v1153 = vld [vmem:[#allocation7 + $0xd8] sm:$0xff]
    %v1154 = vld [vmem:[#allocation7 + $0xe0] sm:$0xff]
    %v1155 = vld [vmem:[#allocation7 + $0xe8] sm:$0xff]
    %v1156 = vld [vmem:[#allocation7 + $0xf0] sm:$0xff]
    %v1157 = vld [vmem:[#allocation7 + $0xf8] sm:$0xff]
    %v1158 = vld [vmem:[#allocation7 + $0x100] sm:$0xff]
    %v1159 = vld [vmem:[#allocation7 + $0x108] sm:$0xff]
    %v1160 = vld [vmem:[#allocation7 + $0x110] sm:$0xff]
    %v1161 = vld [vmem:[#allocation7 + $0x118] sm:$0xff]
    %v1162 = vld [vmem:[#allocation7 + $0x120] sm:$0xff]
    %v1163 = vld [vmem:[#allocation7 + $0x128] sm:$0xff]
    %v1164 = vld [vmem:[#allocation7 + $0x130] sm:$0xff]
    %v1165 = vld [vmem:[#allocation7 + $0x138] sm:$0xff]
    %v1166 = vld [vmem:[#allocation7 + $0x140] sm:$0xff]
    %v1167 = vld [vmem:[#allocation7 + $0x148] sm:$0xff]
    %v1168 = vld [vmem:[#allocation7 + $0x150] sm:$0xff]
    %v1169 = vld [vmem:[#allocation7 + $0x158] sm:$0xff]
    %v1170 = vld [vmem:[#allocation7 + $0x160] sm:$0xff]
    %v1171 = vld [vmem:[#allocation7 + $0x168] sm:$0xff]
    %v1172 = vld [vmem:[#allocation7 + $0x170] sm:$0xff]
    %v1173 = vld [vmem:[#allocation7 + $0x178] sm:$0xff]
    %v1174 = vld [vmem:[#allocation7 + $0x180] sm:$0xff]
    %v1175 = vld [vmem:[#allocation7 + $0x188] sm:$0xff]
    %v1176 = vld [vmem:[#allocation7 + $0x190] sm:$0xff]
    %v1177 = vld [vmem:[#allocation7 + $0x198] sm:$0xff]
    %v1178 = vld [vmem:[#allocation7 + $0x1a0] sm:$0xff]
    %v1179 = vld [vmem:[#allocation7 + $0x1a8] sm:$0xff]
    %v1180 = vld [vmem:[#allocation7 + $0x1b0] sm:$0xff]
    %v1181 = vld [vmem:[#allocation7 + $0x1b8] sm:$0xff]
    %v1182 = vld [vmem:[#allocation7 + $0x1c0] sm:$0xff]
    %v1183 = vld [vmem:[#allocation7 + $0x1c8] sm:$0xff]
    %v1184 = vld [vmem:[#allocation7 + $0x1d0] sm:$0xff]
    %v1185 = vld [vmem:[#allocation7 + $0x1d8] sm:$0xff]
    %v1186 = vld [vmem:[#allocation7 + $0x1e0] sm:$0xff]
    %v1187 = vld [vmem:[#allocation7 + $0x1e8] sm:$0xff]
    %v1188 = vld [vmem:[#allocation7 + $0x1f0] sm:$0xff]
    %v1189 = vld [vmem:[#allocation7 + $0x1f8] sm:$0xff]
    %v1254 = vunpack.c.l.b16 %v1126
    %v1255 = vunpack.c.h.b16 %v1126
    %v1256 = vunpack.c.l.b16 %v1127
    %v1257 = vunpack.c.h.b16 %v1127
    %v1258 = vunpack.c.l.b16 %v1128
    %v1259 = vunpack.c.h.b16 %v1128
    %v1260 = vunpack.c.l.b16 %v1129
    %v1261 = vunpack.c.h.b16 %v1129
    %v1262 = vunpack.c.l.b16 %v1130
    %v1263 = vunpack.c.h.b16 %v1130
    %v1264 = vunpack.c.l.b16 %v1131
    %v1265 = vunpack.c.h.b16 %v1131
    %v1266 = vunpack.c.l.b16 %v1132
    %v1267 = vunpack.c.h.b16 %v1132
    %v1268 = vunpack.c.l.b16 %v1133
    %v1269 = vunpack.c.h.b16 %v1133
    %v1270 = vunpack.c.l.b16 %v1134
    %v1271 = vunpack.c.h.b16 %v1134
    %v1272 = vunpack.c.l.b16 %v1135
    %v1273 = vunpack.c.h.b16 %v1135
    %v1274 = vunpack.c.l.b16 %v1136
    %v1275 = vunpack.c.h.b16 %v1136
    %v1276 = vunpack.c.l.b16 %v1137
    %v1277 = vunpack.c.h.b16 %v1137
    %v1278 = vunpack.c.l.b16 %v1138
    %v1279 = vunpack.c.h.b16 %v1138
    %v1280 = vunpack.c.l.b16 %v1139
    %v1281 = vunpack.c.h.b16 %v1139
    %v1282 = vunpack.c.l.b16 %v1140
    %v1283 = vunpack.c.h.b16 %v1140
    %v1284 = vunpack.c.l.b16 %v1141
    %v1285 = vunpack.c.h.b16 %v1141
    %v1286 = vunpack.c.l.b16 %v1142
    %v1287 = vunpack.c.h.b16 %v1142
    %v1288 = vunpack.c.l.b16 %v1143
    %v1289 = vunpack.c.h.b16 %v1143
    %v1290 = vunpack.c.l.b16 %v1144
    %v1291 = vunpack.c.h.b16 %v1144
    %v1292 = vunpack.c.l.b16 %v1145
    %v1293 = vunpack.c.h.b16 %v1145
    %v1294 = vunpack.c.l.b16 %v1146
    %v1295 = vunpack.c.h.b16 %v1146
    %v1296 = vunpack.c.l.b16 %v1147
    %v1297 = vunpack.c.h.b16 %v1147
    %v1298 = vunpack.c.l.b16 %v1148
    %v1299 = vunpack.c.h.b16 %v1148
    %v1300 = vunpack.c.l.b16 %v1149
    %v1301 = vunpack.c.h.b16 %v1149
    %v1302 = vunpack.c.l.b16 %v1150
    %v1303 = vunpack.c.h.b16 %v1150
    %v1304 = vunpack.c.l.b16 %v1151
    %v1305 = vunpack.c.h.b16 %v1151
    %v1306 = vunpack.c.l.b16 %v1152
    %v1307 = vunpack.c.h.b16 %v1152
    %v1308 = vunpack.c.l.b16 %v1153
    %v1309 = vunpack.c.h.b16 %v1153
    %v1310 = vunpack.c.l.b16 %v1154
    %v1311 = vunpack.c.h.b16 %v1154
    %v1312 = vunpack.c.l.b16 %v1155
    %v1313 = vunpack.c.h.b16 %v1155
    %v1314 = vunpack.c.l.b16 %v1156
    %v1315 = vunpack.c.h.b16 %v1156
    %v1316 = vunpack.c.l.b16 %v1157
    %v1317 = vunpack.c.h.b16 %v1157
    %v1318 = vunpack.c.l.b16 %v1158
    %v1319 = vunpack.c.h.b16 %v1158
    %v1320 = vunpack.c.l.b16 %v1159
    %v1321 = vunpack.c.h.b16 %v1159
    %v1322 = vunpack.c.l.b16 %v1160
    %v1323 = vunpack.c.h.b16 %v1160
    %v1324 = vunpack.c.l.b16 %v1161
    %v1325 = vunpack.c.h.b16 %v1161
    %v1326 = vunpack.c.l.b16 %v1162
    %v1327 = vunpack.c.h.b16 %v1162
    %v1328 = vunpack.c.l.b16 %v1163
    %v1329 = vunpack.c.h.b16 %v1163
    %v1330 = vunpack.c.l.b16 %v1164
    %v1331 = vunpack.c.h.b16 %v1164
    %v1332 = vunpack.c.l.b16 %v1165
    %v1333 = vunpack.c.h.b16 %v1165
    %v1334 = vunpack.c.l.b16 %v1166
    %v1335 = vunpack.c.h.b16 %v1166
    %v1336 = vunpack.c.l.b16 %v1167
    %v1337 = vunpack.c.h.b16 %v1167
    %v1338 = vunpack.c.l.b16 %v1168
    %v1339 = vunpack.c.h.b16 %v1168
    %v1340 = vunpack.c.l.b16 %v1169
    %v1341 = vunpack.c.h.b16 %v1169
    %v1342 = vunpack.c.l.b16 %v1170
    %v1343 = vunpack.c.h.b16 %v1170
    %v1344 = vunpack.c.l.b16 %v1171
    %v1345 = vunpack.c.h.b16 %v1171
    %v1346 = vunpack.c.l.b16 %v1172
    %v1347 = vunpack.c.h.b16 %v1172
    %v1348 = vunpack.c.l.b16 %v1173
    %v1349 = vunpack.c.h.b16 %v1173
    %v1350 = vunpack.c.l.b16 %v1174
    %v1351 = vunpack.c.h.b16 %v1174
    %v1352 = vunpack.c.l.b16 %v1175
    %v1353 = vunpack.c.h.b16 %v1175
    %v1354 = vunpack.c.l.b16 %v1176
    %v1355 = vunpack.c.h.b16 %v1176
    %v1356 = vunpack.c.l.b16 %v1177
    %v1357 = vunpack.c.h.b16 %v1177
    %v1358 = vunpack.c.l.b16 %v1178
    %v1359 = vunpack.c.h.b16 %v1178
    %v1360 = vunpack.c.l.b16 %v1179
    %v1361 = vunpack.c.h.b16 %v1179
    %v1362 = vunpack.c.l.b16 %v1180
    %v1363 = vunpack.c.h.b16 %v1180
    %v1364 = vunpack.c.l.b16 %v1181
    %v1365 = vunpack.c.h.b16 %v1181
    %v1366 = vunpack.c.l.b16 %v1182
    %v1367 = vunpack.c.h.b16 %v1182
    %v1368 = vunpack.c.l.b16 %v1183
    %v1369 = vunpack.c.h.b16 %v1183
    %v1370 = vunpack.c.l.b16 %v1184
    %v1371 = vunpack.c.h.b16 %v1184
    %v1372 = vunpack.c.l.b16 %v1185
    %v1373 = vunpack.c.h.b16 %v1185
    %v1374 = vunpack.c.l.b16 %v1186
    %v1375 = vunpack.c.h.b16 %v1186
    %v1376 = vunpack.c.l.b16 %v1187
    %v1377 = vunpack.c.h.b16 %v1187
    %v1378 = vunpack.c.l.b16 %v1188
    %v1379 = vunpack.c.h.b16 %v1188
    %v1380 = vunpack.c.l.b16 %v1189
    %v1381 = vunpack.c.h.b16 %v1189
    %v1382 = vpack.c.b16 %v1256, %v1254
    %v1383 = vpack.c.b16 %v1257, %v1255
    %v1384 = vpack.c.b16 %v1260, %v1258
    %v1385 = vpack.c.b16 %v1261, %v1259
    %v1386 = vpack.c.b16 %v1264, %v1262
    %v1387 = vpack.c.b16 %v1265, %v1263
    %v1388 = vpack.c.b16 %v1268, %v1266
    %v1389 = vpack.c.b16 %v1269, %v1267
    %v1390 = vpack.c.b16 %v1272, %v1270
    %v1391 = vpack.c.b16 %v1273, %v1271
    %v1392 = vpack.c.b16 %v1276, %v1274
    %v1393 = vpack.c.b16 %v1277, %v1275
    %v1394 = vpack.c.b16 %v1280, %v1278
    %v1395 = vpack.c.b16 %v1281, %v1279
    %v1396 = vpack.c.b16 %v1284, %v1282
    %v1397 = vpack.c.b16 %v1285, %v1283
    %v1398 = vpack.c.b16 %v1288, %v1286
    %v1399 = vpack.c.b16 %v1289, %v1287
    %v1400 = vpack.c.b16 %v1292, %v1290
    %v1401 = vpack.c.b16 %v1293, %v1291
    %v1402 = vpack.c.b16 %v1296, %v1294
    %v1403 = vpack.c.b16 %v1297, %v1295
    %v1404 = vpack.c.b16 %v1300, %v1298
    %v1405 = vpack.c.b16 %v1301, %v1299
    %v1406 = vpack.c.b16 %v1304, %v1302
    %v1407 = vpack.c.b16 %v1305, %v1303
    %v1408 = vpack.c.b16 %v1308, %v1306
    %v1409 = vpack.c.b16 %v1309, %v1307
    %v1410 = vpack.c.b16 %v1312, %v1310
    %v1411 = vpack.c.b16 %v1313, %v1311
    %v1412 = vpack.c.b16 %v1316, %v1314
    %v1413 = vpack.c.b16 %v1317, %v1315
    %v1414 = vpack.c.b16 %v1320, %v1318
    %v1415 = vpack.c.b16 %v1321, %v1319
    %v1416 = vpack.c.b16 %v1324, %v1322
    %v1417 = vpack.c.b16 %v1325, %v1323
    %v1418 = vpack.c.b16 %v1328, %v1326
    %v1419 = vpack.c.b16 %v1329, %v1327
    %v1420 = vpack.c.b16 %v1332, %v1330
    %v1421 = vpack.c.b16 %v1333, %v1331
    %v1422 = vpack.c.b16 %v1336, %v1334
    %v1423 = vpack.c.b16 %v1337, %v1335
    %v1424 = vpack.c.b16 %v1340, %v1338
    %v1425 = vpack.c.b16 %v1341, %v1339
    %v1426 = vpack.c.b16 %v1344, %v1342
    %v1427 = vpack.c.b16 %v1345, %v1343
    %v1428 = vpack.c.b16 %v1348, %v1346
    %v1429 = vpack.c.b16 %v1349, %v1347
    %v1430 = vpack.c.b16 %v1352, %v1350
    %v1431 = vpack.c.b16 %v1353, %v1351
    %v1432 = vpack.c.b16 %v1356, %v1354
    %v1433 = vpack.c.b16 %v1357, %v1355
    %v1434 = vpack.c.b16 %v1360, %v1358
    %v1435 = vpack.c.b16 %v1361, %v1359
    %v1436 = vpack.c.b16 %v1364, %v1362
    %v1437 = vpack.c.b16 %v1365, %v1363
    %v1438 = vpack.c.b16 %v1368, %v1366
    %v1439 = vpack.c.b16 %v1369, %v1367
    %v1440 = vpack.c.b16 %v1372, %v1370
    %v1441 = vpack.c.b16 %v1373, %v1371
    %v1442 = vpack.c.b16 %v1376, %v1374
    %v1443 = vpack.c.b16 %v1377, %v1375
    %v1444 = vpack.c.b16 %v1380, %v1378
    %v1445 = vpack.c.b16 %v1381, %v1379
    %1510 = vmatprep.subr.bf16.mxu0 %v1383
    %1511 = vmatpush1.bf16.msra.mxu0 %v1382
    %1512 = vmatprep.subr.bf16.mxu0 %v1385
    %1513 = vmatpush1.bf16.msra.mxu0 %v1384
    %1514 = vmatprep.subr.bf16.mxu0 %v1387
    %1515 = vmatpush1.bf16.msra.mxu0 %v1386
    %1516 = vmatprep.subr.bf16.mxu0 %v1389
    %1517 = vmatpush1.bf16.msra.mxu0 %v1388
    %1518 = vmatprep.subr.bf16.mxu0 %v1391
    %1519 = vmatpush1.bf16.msra.mxu0 %v1390
    %1520 = vmatprep.subr.bf16.mxu0 %v1393
    %1521 = vmatpush1.bf16.msra.mxu0 %v1392
    %1522 = vmatprep.subr.bf16.mxu0 %v1395
    %1523 = vmatpush1.bf16.msra.mxu0 %v1394
    %1524 = vmatprep.subr.bf16.mxu0 %v1397
    %1525 = vmatpush1.bf16.msra.mxu0 %v1396
    %1526 = vmatprep.subr.bf16.mxu0 %v1399
    %1527 = vmatpush1.bf16.msra.mxu0 %v1398
    %1528 = vmatprep.subr.bf16.mxu0 %v1401
    %1529 = vmatpush1.bf16.msra.mxu0 %v1400
    %1530 = vmatprep.subr.bf16.mxu0 %v1403
    %1531 = vmatpush1.bf16.msra.mxu0 %v1402
    %1532 = vmatprep.subr.bf16.mxu0 %v1405
    %1533 = vmatpush1.bf16.msra.mxu0 %v1404
    %1534 = vmatprep.subr.bf16.mxu0 %v1407
    %1535 = vmatpush1.bf16.msra.mxu0 %v1406
    %1536 = vmatprep.subr.bf16.mxu0 %v1409
    %1537 = vmatpush1.bf16.msra.mxu0 %v1408
    %1538 = vmatprep.subr.bf16.mxu0 %v1411
    %1539 = vmatpush1.bf16.msra.mxu0 %v1410
    %1540 = vmatprep.subr.bf16.mxu0 %v1413
    %1541 = vmatpush1.bf16.msra.mxu0 %v1412
    %1542 = vmatprep.mubr.bf16.mxu0 %v1123
    %1543 = vmatmul.mubr.bf16.gmra.mrb[0].mxu0 %v1122
    %v1544 = vpop.f32.mrb[0].mxu0
    %v1545 = vadd.f32 0.0, %v1544
    %v1546 = vpop.f32.mrb[0].mxu0
    %v1547 = vadd.f32 0.0, %v1546
    %v1548 = vpop.f32.mrb[0].mxu0
    %v1549 = vpop.f32.mrb[0].mxu0
    %1550 = vdwg.mxu0
    %1551 = vmatprep.subr.bf16.mxu0 %v1415
    %1552 = vmatpush1.bf16.msra.mxu0 %v1414
    %1553 = vmatprep.subr.bf16.mxu0 %v1417
    %1554 = vmatpush1.bf16.msra.mxu0 %v1416
    %1555 = vmatprep.subr.bf16.mxu0 %v1419
    %1556 = vmatpush1.bf16.msra.mxu0 %v1418
    %1557 = vmatprep.subr.bf16.mxu0 %v1421
    %1558 = vmatpush1.bf16.msra.mxu0 %v1420
    %1559 = vmatprep.subr.bf16.mxu0 %v1423
    %1560 = vmatpush1.bf16.msra.mxu0 %v1422
    %1561 = vmatprep.subr.bf16.mxu0 %v1425
    %1562 = vmatpush1.bf16.msra.mxu0 %v1424
    %1563 = vmatprep.subr.bf16.mxu0 %v1427
    %1564 = vmatpush1.bf16.msra.mxu0 %v1426
    %1565 = vmatprep.subr.bf16.mxu0 %v1429
    %1566 = vmatpush1.bf16.msra.mxu0 %v1428
    %1567 = vmatprep.subr.bf16.mxu0 %v1431
    %1568 = vmatpush1.bf16.msra.mxu0 %v1430
    %1569 = vmatprep.subr.bf16.mxu0 %v1433
    %1570 = vmatpush1.bf16.msra.mxu0 %v1432
    %1571 = vmatprep.subr.bf16.mxu0 %v1435
    %1572 = vmatpush1.bf16.msra.mxu0 %v1434
    %1573 = vmatprep.subr.bf16.mxu0 %v1437
    %1574 = vmatpush1.bf16.msra.mxu0 %v1436
    %1575 = vmatprep.subr.bf16.mxu0 %v1439
    %1576 = vmatpush1.bf16.msra.mxu0 %v1438
    %1577 = vmatprep.subr.bf16.mxu0 %v1441
    %1578 = vmatpush1.bf16.msra.mxu0 %v1440
    %1579 = vmatprep.subr.bf16.mxu0 %v1443
    %1580 = vmatpush1.bf16.msra.mxu0 %v1442
    %1581 = vmatprep.subr.bf16.mxu0 %v1445
    %1582 = vmatpush1.bf16.msra.mxu0 %v1444
    %1583 = vmatprep.mubr.bf16.mxu0 %v1125
    %1584 = vmatmul.mubr.bf16.gmra.mrb[0].mxu0 %v1124
    %v1585 = vpop.f32.mrb[0].mxu0
    %v1586 = vadd.f32 %v1545, %v1585
    %v1587 = vpop.f32.mrb[0].mxu0
    %v1588 = vadd.f32 %v1547, %v1587
    %v1589 = vpop.f32.mrb[0].mxu0
    %v1590 = vpop.f32.mrb[0].mxu0
    %1591 = vdwg.mxu0
    %v1592 = vpack.c.bf16 %v1586, %v1586
    %v1593 = vpack.c.bf16 %v1588, %v1588
    %v1594 = vld [vmem:[%s4] sm:$0x3]
    %v1597 = vunpack.c.l.s4 1966171168
    %v1598 = vunpack.c.0.s8 %v1597
    %v1599 = vlaneseq
    %v1600 = vshrl.u32 %v1599, 7
    %v1601 = vsub.s32 %v1598, %v1600
    %v1602 = vrot.slane %v1594, %v1601
    %v1603 = vcombine.high %v1602, %v1602
    %v1605 = vunpack.c.l.s4 1966171168
    %v1606 = vunpack.c.0.s8 %v1605
    %v1607 = vlaneseq
    %v1608 = vshrl.u32 %v1607, 7
    %v1609 = vsub.s32 %v1606, %v1608
    %v1610 = vrot.slane %v1602, %v1609
    %v1612 = vunpack.c.l.s4 1966171168
    %v1613 = vunpack.c.0.s8 %v1612
    %v1614 = vlaneseq
    %v1615 = vshrl.u32 %v1614, 7
    %v1616 = vsub.s32 %v1613, %v1615
    %v1617 = vrot.slane %v1603, %v1616
    %v1619 = vpack.i.b16 %v1610, %v1610
    %v1621 = vlaneseq
    %v1622 = vshrl.u32 %v1621, 7
    %v1623 = vsub.s32 0, %v1622
    %v1624 = vrot.slane %v1619, %v1623
    %v1626 = vpack.i.b16 %v1617, %v1617
    %v1628 = vlaneseq
    %v1629 = vshrl.u32 %v1628, 7
    %v1630 = vsub.s32 0, %v1629
    %v1631 = vrot.slane %v1626, %v1630
    %v1632 = vadd.bf16 %v1592, %v1624
    %v1633 = vadd.bf16 %v1593, %v1631
    %v1634 = vmax.bf16 %v1632, 0
    %v1635 = vmax.bf16 %v1633, 0
    %v1636 = vld [vmem:[#allocation8] sm:$0xff]
    %v1637 = vld [vmem:[#allocation8 + $0x8] sm:$0xff]
    %v1638 = vld [vmem:[#allocation8 + $0x10] sm:$0xff]
    %v1639 = vld [vmem:[#allocation8 + $0x18] sm:$0xff]
    %v1640 = vld [vmem:[#allocation8 + $0x20] sm:$0xff]
    %v1641 = vld [vmem:[#allocation8 + $0x28] sm:$0xff]
    %v1642 = vld [vmem:[#allocation8 + $0x30] sm:$0xff]
    %v1643 = vld [vmem:[#allocation8 + $0x38] sm:$0xff]
    %v1644 = vld [vmem:[#allocation8 + $0x40] sm:$0xff]
    %v1645 = vld [vmem:[#allocation8 + $0x48] sm:$0xff]
    %v1646 = vld [vmem:[#allocation8 + $0x50] sm:$0xff]
    %v1647 = vld [vmem:[#allocation8 + $0x58] sm:$0xff]
    %v1648 = vld [vmem:[#allocation8 + $0x60] sm:$0xff]
    %v1649 = vld [vmem:[#allocation8 + $0x68] sm:$0xff]
    %v1650 = vld [vmem:[#allocation8 + $0x70] sm:$0xff]
    %v1651 = vld [vmem:[#allocation8 + $0x78] sm:$0xff]
    %v1652 = vld [vmem:[#allocation8 + $0x80] sm:$0xff]
    %v1653 = vld [vmem:[#allocation8 + $0x88] sm:$0xff]
    %v1654 = vld [vmem:[#allocation8 + $0x90] sm:$0xff]
    %v1655 = vld [vmem:[#allocation8 + $0x98] sm:$0xff]
    %v1656 = vld [vmem:[#allocation8 + $0xa0] sm:$0xff]
    %v1657 = vld [vmem:[#allocation8 + $0xa8] sm:$0xff]
    %v1658 = vld [vmem:[#allocation8 + $0xb0] sm:$0xff]
    %v1659 = vld [vmem:[#allocation8 + $0xb8] sm:$0xff]
    %v1660 = vld [vmem:[#allocation8 + $0xc0] sm:$0xff]
    %v1661 = vld [vmem:[#allocation8 + $0xc8] sm:$0xff]
    %v1662 = vld [vmem:[#allocation8 + $0xd0] sm:$0xff]
    %v1663 = vld [vmem:[#allocation8 + $0xd8] sm:$0xff]
    %v1664 = vld [vmem:[#allocation8 + $0xe0] sm:$0xff]
    %v1665 = vld [vmem:[#allocation8 + $0xe8] sm:$0xff]
    %v1666 = vld [vmem:[#allocation8 + $0xf0] sm:$0xff]
    %v1667 = vld [vmem:[#allocation8 + $0xf8] sm:$0xff]
    %v1700 = vunpack.c.l.b16 %v1636
    %v1701 = vunpack.c.h.b16 %v1636
    %v1702 = vunpack.c.l.b16 %v1637
    %v1703 = vunpack.c.h.b16 %v1637
    %v1704 = vunpack.c.l.b16 %v1638
    %v1705 = vunpack.c.h.b16 %v1638
    %v1706 = vunpack.c.l.b16 %v1639
    %v1707 = vunpack.c.h.b16 %v1639
    %v1708 = vunpack.c.l.b16 %v1640
    %v1709 = vunpack.c.h.b16 %v1640
    %v1710 = vunpack.c.l.b16 %v1641
    %v1711 = vunpack.c.h.b16 %v1641
    %v1712 = vunpack.c.l.b16 %v1642
    %v1713 = vunpack.c.h.b16 %v1642
    %v1714 = vunpack.c.l.b16 %v1643
    %v1715 = vunpack.c.h.b16 %v1643
    %v1716 = vunpack.c.l.b16 %v1644
    %v1717 = vunpack.c.h.b16 %v1644
    %v1718 = vunpack.c.l.b16 %v1645
    %v1719 = vunpack.c.h.b16 %v1645
    %v1720 = vunpack.c.l.b16 %v1646
    %v1721 = vunpack.c.h.b16 %v1646
    %v1722 = vunpack.c.l.b16 %v1647
    %v1723 = vunpack.c.h.b16 %v1647
    %v1724 = vunpack.c.l.b16 %v1648
    %v1725 = vunpack.c.h.b16 %v1648
    %v1726 = vunpack.c.l.b16 %v1649
    %v1727 = vunpack.c.h.b16 %v1649
    %v1728 = vunpack.c.l.b16 %v1650
    %v1729 = vunpack.c.h.b16 %v1650
    %v1730 = vunpack.c.l.b16 %v1651
    %v1731 = vunpack.c.h.b16 %v1651
    %v1732 = vunpack.c.l.b16 %v1652
    %v1733 = vunpack.c.h.b16 %v1652
    %v1734 = vunpack.c.l.b16 %v1653
    %v1735 = vunpack.c.h.b16 %v1653
    %v1736 = vunpack.c.l.b16 %v1654
    %v1737 = vunpack.c.h.b16 %v1654
    %v1738 = vunpack.c.l.b16 %v1655
    %v1739 = vunpack.c.h.b16 %v1655
    %v1740 = vunpack.c.l.b16 %v1656
    %v1741 = vunpack.c.h.b16 %v1656
    %v1742 = vunpack.c.l.b16 %v1657
    %v1743 = vunpack.c.h.b16 %v1657
    %v1744 = vunpack.c.l.b16 %v1658
    %v1745 = vunpack.c.h.b16 %v1658
    %v1746 = vunpack.c.l.b16 %v1659
    %v1747 = vunpack.c.h.b16 %v1659
    %v1748 = vunpack.c.l.b16 %v1660
    %v1749 = vunpack.c.h.b16 %v1660
    %v1750 = vunpack.c.l.b16 %v1661
    %v1751 = vunpack.c.h.b16 %v1661
    %v1752 = vunpack.c.l.b16 %v1662
    %v1753 = vunpack.c.h.b16 %v1662
    %v1754 = vunpack.c.l.b16 %v1663
    %v1755 = vunpack.c.h.b16 %v1663
    %v1756 = vunpack.c.l.b16 %v1664
    %v1757 = vunpack.c.h.b16 %v1664
    %v1758 = vunpack.c.l.b16 %v1665
    %v1759 = vunpack.c.h.b16 %v1665
    %v1760 = vunpack.c.l.b16 %v1666
    %v1761 = vunpack.c.h.b16 %v1666
    %v1762 = vunpack.c.l.b16 %v1667
    %v1763 = vunpack.c.h.b16 %v1667
    %v1764 = vpack.c.b16 %v1702, %v1700
    %v1765 = vpack.c.b16 %v1703, %v1701
    %v1766 = vpack.c.b16 %v1706, %v1704
    %v1767 = vpack.c.b16 %v1707, %v1705
    %v1768 = vpack.c.b16 %v1710, %v1708
    %v1769 = vpack.c.b16 %v1711, %v1709
    %v1770 = vpack.c.b16 %v1714, %v1712
    %v1771 = vpack.c.b16 %v1715, %v1713
    %v1772 = vpack.c.b16 %v1718, %v1716
    %v1773 = vpack.c.b16 %v1719, %v1717
    %v1774 = vpack.c.b16 %v1722, %v1720
    %v1775 = vpack.c.b16 %v1723, %v1721
    %v1776 = vpack.c.b16 %v1726, %v1724
    %v1777 = vpack.c.b16 %v1727, %v1725
    %v1778 = vpack.c.b16 %v1730, %v1728
    %v1779 = vpack.c.b16 %v1731, %v1729
    %v1780 = vpack.c.b16 %v1734, %v1732
    %v1781 = vpack.c.b16 %v1735, %v1733
    %v1782 = vpack.c.b16 %v1738, %v1736
    %v1783 = vpack.c.b16 %v1739, %v1737
    %v1784 = vpack.c.b16 %v1742, %v1740
    %v1785 = vpack.c.b16 %v1743, %v1741
    %v1786 = vpack.c.b16 %v1746, %v1744
    %v1787 = vpack.c.b16 %v1747, %v1745
    %v1788 = vpack.c.b16 %v1750, %v1748
    %v1789 = vpack.c.b16 %v1751, %v1749
    %v1790 = vpack.c.b16 %v1754, %v1752
    %v1791 = vpack.c.b16 %v1755, %v1753
    %v1792 = vpack.c.b16 %v1758, %v1756
    %v1793 = vpack.c.b16 %v1759, %v1757
    %v1794 = vpack.c.b16 %v1762, %v1760
    %v1795 = vpack.c.b16 %v1763, %v1761
    %1828 = vmatprep.subr.bf16.mxu0 %v1765
    %1829 = vmatpush1.bf16.msra.mxu0 %v1764
    %1830 = vmatprep.subr.bf16.mxu0 %v1767
    %1831 = vmatpush1.bf16.msra.mxu0 %v1766
    %1832 = vmatprep.subr.bf16.mxu0 %v1769
    %1833 = vmatpush1.bf16.msra.mxu0 %v1768
    %1834 = vmatprep.subr.bf16.mxu0 %v1771
    %1835 = vmatpush1.bf16.msra.mxu0 %v1770
    %1836 = vmatprep.subr.bf16.mxu0 %v1773
    %1837 = vmatpush1.bf16.msra.mxu0 %v1772
    %1838 = vmatprep.subr.bf16.mxu0 %v1775
    %1839 = vmatpush1.bf16.msra.mxu0 %v1774
    %1840 = vmatprep.subr.bf16.mxu0 %v1777
    %1841 = vmatpush1.bf16.msra.mxu0 %v1776
    %1842 = vmatprep.subr.bf16.mxu0 %v1779
    %1843 = vmatpush1.bf16.msra.mxu0 %v1778
    %1844 = vmatprep.subr.bf16.mxu0 %v1781
    %1845 = vmatpush1.bf16.msra.mxu0 %v1780
    %1846 = vmatprep.subr.bf16.mxu0 %v1783
    %1847 = vmatpush1.bf16.msra.mxu0 %v1782
    %1848 = vmatprep.subr.bf16.mxu0 %v1785
    %1849 = vmatpush1.bf16.msra.mxu0 %v1784
    %1850 = vmatprep.subr.bf16.mxu0 %v1787
    %1851 = vmatpush1.bf16.msra.mxu0 %v1786
    %1852 = vmatprep.subr.bf16.mxu0 %v1789
    %1853 = vmatpush1.bf16.msra.mxu0 %v1788
    %1854 = vmatprep.subr.bf16.mxu0 %v1791
    %1855 = vmatpush1.bf16.msra.mxu0 %v1790
    %1856 = vmatprep.subr.bf16.mxu0 %v1793
    %1857 = vmatpush1.bf16.msra.mxu0 %v1792
    %1858 = vmatprep.subr.bf16.mxu0 %v1795
    %1859 = vmatpush1.bf16.msra.mxu0 %v1794
    %1860 = vmatprep.mubr.bf16.mxu0 %v1635
    %1861 = vmatmul.mubr.bf16.gmra.mrb[0].mxu0 %v1634
    %v1862 = vpop.f32.mrb[0].mxu0
    %v1863 = vadd.f32 0.0, %v1862
    %v1864 = vpop.f32.mrb[0].mxu0
    %v1865 = vadd.f32 0.0, %v1864
    %v1866 = vpop.f32.mrb[0].mxu0
    %v1867 = vpop.f32.mrb[0].mxu0
    %1868 = vdwg.mxu0
    %v1869 = vpack.c.bf16 %v1863, %v1863
    %v1870 = vpack.c.bf16 %v1865, %v1865
    %v1871 = vld [vmem:[%s6] sm:$0x3]
    %v1874 = vunpack.c.l.s4 1966171168
    %v1875 = vunpack.c.0.s8 %v1874
    %v1876 = vlaneseq
    %v1877 = vshrl.u32 %v1876, 7
    %v1878 = vsub.s32 %v1875, %v1877
    %v1879 = vrot.slane %v1871, %v1878
    %v1880 = vcombine.high %v1879, %v1879
    %v1882 = vunpack.c.l.s4 1966171168
    %v1883 = vunpack.c.0.s8 %v1882
    %v1884 = vlaneseq
    %v1885 = vshrl.u32 %v1884, 7
    %v1886 = vsub.s32 %v1883, %v1885
    %v1887 = vrot.slane %v1879, %v1886
    %v1889 = vunpack.c.l.s4 1966171168
    %v1890 = vunpack.c.0.s8 %v1889
    %v1891 = vlaneseq
    %v1892 = vshrl.u32 %v1891, 7
    %v1893 = vsub.s32 %v1890, %v1892
    %v1894 = vrot.slane %v1880, %v1893
    %v1896 = vpack.i.b16 %v1887, %v1887
    %v1898 = vlaneseq
    %v1899 = vshrl.u32 %v1898, 7
    %v1900 = vsub.s32 0, %v1899
    %v1901 = vrot.slane %v1896, %v1900
    %v1903 = vpack.i.b16 %v1894, %v1894
    %v1905 = vlaneseq
    %v1906 = vshrl.u32 %v1905, 7
    %v1907 = vsub.s32 0, %v1906
    %v1908 = vrot.slane %v1903, %v1907
    %v1909 = vadd.bf16 %v1869, %v1901
    %v1910 = vadd.bf16 %v1870, %v1908
    %v1911 = vmax.bf16 %v1909, 0
    %v1912 = vmax.bf16 %v1910, 0
    %v1913 = vld [vmem:[#allocation10] sm:$0xf]
    %v1914 = vld [vmem:[#allocation10 + $0x4] sm:$0xf]
    %v1915 = vld [vmem:[#allocation10 + $0x8] sm:$0xf]
    %v1916 = vld [vmem:[#allocation10 + $0xc] sm:$0xf]
    %v1917 = vld [vmem:[#allocation10 + $0x10] sm:$0xf]
    %v1918 = vld [vmem:[#allocation10 + $0x14] sm:$0xf]
    %v1919 = vld [vmem:[#allocation10 + $0x18] sm:$0xf]
    %v1920 = vld [vmem:[#allocation10 + $0x1c] sm:$0xf]
    %v1921 = vld [vmem:[#allocation10 + $0x20] sm:$0xf]
    %v1922 = vld [vmem:[#allocation10 + $0x24] sm:$0xf]
    %v1923 = vld [vmem:[#allocation10 + $0x28] sm:$0xf]
    %v1924 = vld [vmem:[#allocation10 + $0x2c] sm:$0xf]
    %v1925 = vld [vmem:[#allocation10 + $0x30] sm:$0xf]
    %v1926 = vld [vmem:[#allocation10 + $0x34] sm:$0xf]
    %v1927 = vld [vmem:[#allocation10 + $0x38] sm:$0xf]
    %v1928 = vld [vmem:[#allocation10 + $0x3c] sm:$0xf]
    %v1929 = vld [vmem:[#allocation10 + $0x40] sm:$0xf]
    %v1930 = vld [vmem:[#allocation10 + $0x44] sm:$0xf]
    %v1931 = vld [vmem:[#allocation10 + $0x48] sm:$0xf]
    %v1932 = vld [vmem:[#allocation10 + $0x4c] sm:$0xf]
    %v1933 = vld [vmem:[#allocation10 + $0x50] sm:$0xf]
    %v1934 = vld [vmem:[#allocation10 + $0x54] sm:$0xf]
    %v1935 = vld [vmem:[#allocation10 + $0x58] sm:$0xf]
    %v1936 = vld [vmem:[#allocation10 + $0x5c] sm:$0xf]
    %v1937 = vld [vmem:[#allocation10 + $0x60] sm:$0xf]
    %v1938 = vld [vmem:[#allocation10 + $0x64] sm:$0xf]
    %v1939 = vld [vmem:[#allocation10 + $0x68] sm:$0xf]
    %v1940 = vld [vmem:[#allocation10 + $0x6c] sm:$0xf]
    %v1941 = vld [vmem:[#allocation10 + $0x70] sm:$0xf]
    %v1942 = vld [vmem:[#allocation10 + $0x74] sm:$0xf]
    %v1943 = vld [vmem:[#allocation10 + $0x78] sm:$0xf]
    %v1944 = vld [vmem:[#allocation10 + $0x7c] sm:$0xf]
    %v1977 = vunpack.c.l.b16 %v1913
    %v1978 = vunpack.c.l.b16 %v1914
    %v1979 = vunpack.c.l.b16 %v1915
    %v1980 = vunpack.c.l.b16 %v1916
    %v1981 = vunpack.c.l.b16 %v1917
    %v1982 = vunpack.c.l.b16 %v1918
    %v1983 = vunpack.c.l.b16 %v1919
    %v1984 = vunpack.c.l.b16 %v1920
    %v1985 = vunpack.c.l.b16 %v1921
    %v1986 = vunpack.c.l.b16 %v1922
    %v1987 = vunpack.c.l.b16 %v1923
    %v1988 = vunpack.c.l.b16 %v1924
    %v1989 = vunpack.c.l.b16 %v1925
    %v1990 = vunpack.c.l.b16 %v1926
    %v1991 = vunpack.c.l.b16 %v1927
    %v1992 = vunpack.c.l.b16 %v1928
    %v1993 = vunpack.c.l.b16 %v1929
    %v1994 = vunpack.c.l.b16 %v1930
    %v1995 = vunpack.c.l.b16 %v1931
    %v1996 = vunpack.c.l.b16 %v1932
    %v1997 = vunpack.c.l.b16 %v1933
    %v1998 = vunpack.c.l.b16 %v1934
    %v1999 = vunpack.c.l.b16 %v1935
    %v2000 = vunpack.c.l.b16 %v1936
    %v2001 = vunpack.c.l.b16 %v1937
    %v2002 = vunpack.c.l.b16 %v1938
    %v2003 = vunpack.c.l.b16 %v1939
    %v2004 = vunpack.c.l.b16 %v1940
    %v2005 = vunpack.c.l.b16 %v1941
    %v2006 = vunpack.c.l.b16 %v1942
    %v2007 = vunpack.c.l.b16 %v1943
    %v2008 = vunpack.c.l.b16 %v1944
    %v2009 = vpack.c.b16 %v1978, %v1977
    %v2010 = vpack.c.b16 %v1980, %v1979
    %v2011 = vpack.c.b16 %v1982, %v1981
    %v2012 = vpack.c.b16 %v1984, %v1983
    %v2013 = vpack.c.b16 %v1986, %v1985
    %v2014 = vpack.c.b16 %v1988, %v1987
    %v2015 = vpack.c.b16 %v1990, %v1989
    %v2016 = vpack.c.b16 %v1992, %v1991
    %v2017 = vpack.c.b16 %v1994, %v1993
    %v2018 = vpack.c.b16 %v1996, %v1995
    %v2019 = vpack.c.b16 %v1998, %v1997
    %v2020 = vpack.c.b16 %v2000, %v1999
    %v2021 = vpack.c.b16 %v2002, %v2001
    %v2022 = vpack.c.b16 %v2004, %v2003
    %v2023 = vpack.c.b16 %v2006, %v2005
    %v2024 = vpack.c.b16 %v2008, %v2007
    %2041 = vmatprep.subr.bf16.mxu0 0
    %2042 = vmatpush1.bf16.msra.mxu0 %v2009
    %2043 = vmatprep.subr.bf16.mxu0 0
    %2044 = vmatpush1.bf16.msra.mxu0 %v2010
    %2045 = vmatprep.subr.bf16.mxu0 0
    %2046 = vmatpush1.bf16.msra.mxu0 %v2011
    %2047 = vmatprep.subr.bf16.mxu0 0
    %2048 = vmatpush1.bf16.msra.mxu0 %v2012
    %2049 = vmatprep.subr.bf16.mxu0 0
    %2050 = vmatpush1.bf16.msra.mxu0 %v2013
    %2051 = vmatprep.subr.bf16.mxu0 0
    %2052 = vmatpush1.bf16.msra.mxu0 %v2014
    %2053 = vmatprep.subr.bf16.mxu0 0
    %2054 = vmatpush1.bf16.msra.mxu0 %v2015
    %2055 = vmatprep.subr.bf16.mxu0 0
    %2056 = vmatpush1.bf16.msra.mxu0 %v2016
    %2057 = vmatprep.subr.bf16.mxu0 0
    %2058 = vmatpush1.bf16.msra.mxu0 %v2017
    %2059 = vmatprep.subr.bf16.mxu0 0
    %2060 = vmatpush1.bf16.msra.mxu0 %v2018
    %2061 = vmatprep.subr.bf16.mxu0 0
    %2062 = vmatpush1.bf16.msra.mxu0 %v2019
    %2063 = vmatprep.subr.bf16.mxu0 0
    %2064 = vmatpush1.bf16.msra.mxu0 %v2020
    %2065 = vmatprep.subr.bf16.mxu0 0
    %2066 = vmatpush1.bf16.msra.mxu0 %v2021
    %2067 = vmatprep.subr.bf16.mxu0 0
    %2068 = vmatpush1.bf16.msra.mxu0 %v2022
    %2069 = vmatprep.subr.bf16.mxu0 0
    %2070 = vmatpush1.bf16.msra.mxu0 %v2023
    %2071 = vmatprep.subr.bf16.mxu0 0
    %2072 = vmatpush1.bf16.msra.mxu0 %v2024
    %2073 = vmatprep.mubr.bf16.mxu0 %v1912
    %2074 = vmatmul.mubr.bf16.gmra.mrb[0].mxu0 %v1911
    %v2075 = vpop.f32.mrb[0].mxu0
    %v2076 = vadd.f32 0.0, %v2075
    %v2077 = vpop.f32.mrb[0].mxu0
    %v2078 = vpop.f32.mrb[0].mxu0
    %v2079 = vpop.f32.mrb[0].mxu0
    %2080 = vdwg.mxu0
    %v2081 = vpack.c.bf16 %v2076, %v2076
    %v2082 = vld [vmem:[%s8] sm:$0x1]
    %v2084 = vpack.i.b16 %v2082, %v2082
    %v2086 = vlaneseq
    %v2087 = vshrl.u32 %v2086, 7
    %v2088 = vsub.s32 0, %v2087
    %v2089 = vrot.slane %v2084, %v2088
    %v2090 = vadd.bf16 %v2081, %v2089
    %v2091 = vmax.bf16 %v2090, 0
    %v2092 = vld [vmem:[#allocation11] sm:$0xf]
    %v2093 = vld [vmem:[#allocation11 + $0x4] sm:$0xf]
    %v2094 = vld [vmem:[#allocation11 + $0x8] sm:$0xf]
    %v2095 = vld [vmem:[#allocation11 + $0xc] sm:$0xf]
    %v2096 = vld [vmem:[#allocation11 + $0x10] sm:$0xf]
    %v2097 = vld [vmem:[#allocation11 + $0x14] sm:$0xf]
    %v2098 = vld [vmem:[#allocation11 + $0x18] sm:$0xf]
    %v2099 = vld [vmem:[#allocation11 + $0x1c] sm:$0xf]
    %v2100 = vld [vmem:[#allocation11 + $0x20] sm:$0xf]
    %v2101 = vld [vmem:[#allocation11 + $0x24] sm:$0xf]
    %v2102 = vld [vmem:[#allocation11 + $0x28] sm:$0xf]
    %v2103 = vld [vmem:[#allocation11 + $0x2c] sm:$0xf]
    %v2104 = vld [vmem:[#allocation11 + $0x30] sm:$0xf]
    %v2105 = vld [vmem:[#allocation11 + $0x34] sm:$0xf]
    %v2106 = vld [vmem:[#allocation11 + $0x38] sm:$0xf]
    %v2107 = vld [vmem:[#allocation11 + $0x3c] sm:$0xf]
    %v2108 = vld [vmem:[%s10] sm:$0x1]
    %v2110 = vlaneseq
    %v2111 = vshrl.u32 %v2110, 7
    %v2112 = vsub.s32 0, %v2111
    %v2113 = vrot.slane %v2108, %v2112
    %v2131 = vunpack.c.l.b16 %v2092
    %v2132 = vunpack.c.l.b16 %v2093
    %v2133 = vunpack.c.l.b16 %v2094
    %v2134 = vunpack.c.l.b16 %v2095
    %v2135 = vunpack.c.l.b16 %v2096
    %v2136 = vunpack.c.l.b16 %v2097
    %v2137 = vunpack.c.l.b16 %v2098
    %v2138 = vunpack.c.l.b16 %v2099
    %v2139 = vunpack.c.l.b16 %v2100
    %v2140 = vunpack.c.l.b16 %v2101
    %v2141 = vunpack.c.l.b16 %v2102
    %v2142 = vunpack.c.l.b16 %v2103
    %v2143 = vunpack.c.l.b16 %v2104
    %v2144 = vunpack.c.l.b16 %v2105
    %v2145 = vunpack.c.l.b16 %v2106
    %v2146 = vunpack.c.l.b16 %v2107
    %v2147 = vpack.c.b16 %v2132, %v2131
    %v2148 = vpack.c.b16 %v2134, %v2133
    %v2149 = vpack.c.b16 %v2136, %v2135
    %v2150 = vpack.c.b16 %v2138, %v2137
    %v2151 = vpack.c.b16 %v2140, %v2139
    %v2152 = vpack.c.b16 %v2142, %v2141
    %v2153 = vpack.c.b16 %v2144, %v2143
    %v2154 = vpack.c.b16 %v2146, %v2145
    %2163 = vmatprep.subr.bf16.mxu0 0
    %2164 = vmatpush1.bf16.msra.mxu0 %v2147
    %2165 = vmatprep.subr.bf16.mxu0 0
    %2166 = vmatpush1.bf16.msra.mxu0 %v2148
    %2167 = vmatprep.subr.bf16.mxu0 0
    %2168 = vmatpush1.bf16.msra.mxu0 %v2149
    %2169 = vmatprep.subr.bf16.mxu0 0
    %2170 = vmatpush1.bf16.msra.mxu0 %v2150
    %2171 = vmatprep.subr.bf16.mxu0 0
    %2172 = vmatpush1.bf16.msra.mxu0 %v2151
    %2173 = vmatprep.subr.bf16.mxu0 0
    %2174 = vmatpush1.bf16.msra.mxu0 %v2152
    %2175 = vmatprep.subr.bf16.mxu0 0
    %2176 = vmatpush1.bf16.msra.mxu0 %v2153
    %2177 = vmatprep.subr.bf16.mxu0 0
    %2178 = vmatpush1.bf16.msra.mxu0 %v2154
    %2179 = vmatprep.subr.bf16.mxu0 0
    %2180 = vmatpush1.bf16.msra.mxu0 0
    %2181 = vmatprep.subr.bf16.mxu0 0
    %2182 = vmatpush1.bf16.msra.mxu0 0
    %2183 = vmatprep.subr.bf16.mxu0 0
    %2184 = vmatpush1.bf16.msra.mxu0 0
    %2185 = vmatprep.subr.bf16.mxu0 0
    %2186 = vmatpush1.bf16.msra.mxu0 0
    %2187 = vmatprep.subr.bf16.mxu0 0
    %2188 = vmatpush1.bf16.msra.mxu0 0
    %2189 = vmatprep.subr.bf16.mxu0 0
    %2190 = vmatpush1.bf16.msra.mxu0 0
    %2191 = vmatprep.subr.bf16.mxu0 0
    %2192 = vmatpush1.bf16.msra.mxu0 0
    %2193 = vmatprep.subr.bf16.mxu0 0
    %2194 = vmatpush1.bf16.msra.mxu0 0
    %2195 = vmatprep.mubr.bf16.mxu0 0
    %2196 = vmatmul.mubr.bf16.gmra.mrb[0].mxu0 %v2091
    %v2197 = vpop.f32.mrb[0].mxu0
    %v2198 = vadd.f32 %v2113, %v2197
    %v2199 = vpop.f32.mrb[0].mxu0
    %v2200 = vpop.f32.mrb[0].mxu0
    %v2201 = vpop.f32.mrb[0].mxu0
    %2202 = vdwg.mxu0
    %2203 = vst [vmem:[#allocation13] sm:$0xff] %v2198
    // Predicated region
    $region70: #{tpu_custom_call.1} parent=1 // pred_check
      _
    $region71: #{tpu_custom_call.1} parent=1 // pred_check_branch
      %2205 = sbr.rel (0) target = $region73
    $region72: #{tpu_custom_call.1} parent=1 // pred_region
      %s2207 = ssub.s32 128, 128
      %2208 = vsyncadd [#allocation4], %s2207
      %s2210 = sshll.u32 [#allocation13], 4
      %s2211 = int_to_ptr.vmem [resolvable:$true] %s2210
      %2213 = dma.vmem_to_hbm [thread:$0]  %s2211, 128, %s11, [#allocation4]
    $region73: #{tpu_custom_call.1} parent=1 // pred_fallthru
      _
    // Predicated region
    $region74: #{tpu_custom_call.1} parent=1 // pred_check
      _
    $region75: #{tpu_custom_call.1} parent=1 // pred_check_branch
      %2215 = sbr.rel (0) target = $region77
    $region76: #{tpu_custom_call.1} parent=1 // pred_region
      %2216 = dma.done [#allocation4], 128
    $region77: #{tpu_custom_call.1} parent=1 // pred_fallthru
      _
    %2217 = vsyncpa [#allocation3], 1
    %2218 = vsyncpa [#allocation6], 1
    %2219 = vsyncpa [#allocation9], 1
    %2220 = vsyncpa [#allocation12], 1
    %2221 = vsyncpa [#allocation4], 1

</llo_original>
